<compile_context>
chip_gen: v7x
topology: tpu7x:2x2x1
jax: 0.10.0
libtpu: 0.0.40
codegen_flags: <defaults>
</compile_context>

<pallas_src>
import jax
import jax.numpy as jnp
from jax.experimental import pallas as pl
from jax.experimental.pallas import tpu as pltpu

# ----------------------------- small synthetic config -----------------------
B = 2             # batch
IMG = 16          # image size (advxl uses 336; scaled down)
PATCH = 8         # patch size (advxl uses 14)
C_IN = 3
D = 128           # hidden size (advxl giant uses 1408)
HEADS = 4
HEAD_DIM = D // HEADS
MLP = 4 * D
DEPTH = 2
GRID = IMG // PATCH
N_PATCH = GRID * GRID          # 4 patches
T = N_PATCH + 1                # +1 CLS token
T_PAD = 8                      # tokens padded to a sublane-friendly size
K_PATCH = C_IN * PATCH * PATCH # patch-vector length (conv-as-matmul K)
LN_EPS = 1e-6


# ----------------------------- in-kernel helpers -----------------------------
def _layernorm(x, gamma, beta):
    """LayerNorm in f32 over the last (hidden) axis."""
    mu = jnp.mean(x, axis=-1, keepdims=True)
    xc = x - mu
    var = jnp.mean(xc * xc, axis=-1, keepdims=True)
    return xc * jax.lax.rsqrt(var + LN_EPS) * gamma + beta


def _erf(x):
    # Abramowitz & Stegun 7.1.26, |err| <= 1.5e-7.  The 1/(1+p|x|) divide is
    # routed through the EUP (pl.reciprocal approx) so the polynomial MACs
    # are the only VPU cost; this is a deliberate (tiny) numerics deviation
    # from PyTorch's exact erf, well inside bf16 tower noise.
    a1, a2, a3, a4, a5 = (0.254829592, -0.284496736, 1.421413741,
                          -1.453152027, 1.061405429)
    p = 0.3275911
    s = jnp.where(x >= 0, 1.0, -1.0)
    ax = jnp.abs(x)
    t = pl.reciprocal(1.0 + p * ax, approx=True)
    poly = ((((a5 * t + a4) * t + a3) * t + a2) * t + a1) * t
    return s * (1.0 - poly * jnp.exp(-ax * ax))


def _gelu_exact(x):
    # Matches PyTorch nn.GELU() (erf-based), unlike the tanh approximation.
    return 0.5 * x * (1.0 + _erf(x * 0.7071067811865476))


# ----------------------------- Pallas kernels --------------------------------
def patch_embed_kernel(p_ref, w_ref, b_ref, cls_ref, pos_ref, o_ref):
    """Conv2d(k=stride=PATCH) as matmul, with the CLS / pos-embed / pad-to-T_PAD
    assembly fused into the epilogue.  One grid step per image.

    TODO(synk): at real scale tile the N_PATCH rows at 256 (v6e/v7x) / 128
    (v5e) and pad K (588) to a 128 multiple.
    """
    emb = jnp.dot(p_ref[0], w_ref[...],
                  preferred_element_type=jnp.float32) + b_ref[...]     # (N_P, D)
    tok = jnp.concatenate(
        [cls_ref[...],                                # CLS row
         emb,                                         # patch tokens
         jnp.zeros((T_PAD - T, D), jnp.float32)],     # pad rows
        axis=0)
    o_ref[0] = tok + pos_ref[...]                     # pos pre-padded with zeros


def blocks_kernel(
    x0_ref, kmask_ref,
    g1_ref, b1_ref, wqkv_ref, bqkv_ref, wproj_ref, bproj_ref,
    g2_ref, b2_ref, w1_ref, bb1_ref, w2_ref, bb2_ref,
    o_ref, x_scr,
):
    """All DEPTH pre-norm transformer blocks for the whole batch.

    Grid = (DEPTH,).  The (B*T_PAD, D) token slab stays resident in a f32
    VMEM scratch across the depth axis; stacked per-layer weights are
    streamed via the grid (layer d+1 DMA pipelined behind layer d compute),
    so each layer's weights are read from HBM exactly once.
    """
    d = pl.program_id(0)

    @pl.when(d == 0)
    def _():
        x_scr[...] = x0_ref[...].reshape(B * T_PAD, D)

    x = x_scr[...]                                           # (B*T_PAD, D) f32

    # --------------------- multi-head self-attention ---------------------
    h = _layernorm(x, g1_ref[0], b1_ref[0]).astype(jnp.bfloat16)
    # Single MXU-shaped qkv matmul over all B*T_PAD tokens; 1/sqrt(head_dim)
    # is already folded into the q columns of wqkv/bqkv.
    qkv = jnp.dot(h, wqkv_ref[0],
                  preferred_element_type=jnp.float32) + bqkv_ref[0]   # (M, 3D)
    q2d = qkv[:, 0 * D:1 * D]           # lane-tile aligned slices (free)
    k2d = qkv[:, 1 * D:2 * D]
    v2d = qkv[:, 2 * D:3 * D]

    def split_heads(t2d):
        # (B*T_PAD, D) -> (HEADS*B, T_PAD, HEAD_DIM); row split is sublane
        # aligned, head split is a lane slice.
        # TODO(synk): at real scale pad HEAD_DIM (88) to 128 so the head axis
        # never has to be carved out of the lane dimension.
        t3 = t2d.reshape(B, T_PAD, D)
        return jnp.concatenate(
            [t3[:, :, i * HEAD_DIM:(i + 1) * HEAD_DIM] for i in range(HEADS)],
            axis=0)

    qh = split_heads(q2d).astype(jnp.bfloat16)
    kh = split_heads(k2d).astype(jnp.bfloat16)
    vh = split_heads(v2d).astype(jnp.bfloat16)

    # All (head, batch) groups batched through single leading-batch einsums.
    scores = jnp.einsum("gqd,gkd->gqk", qh, kh,
                        preferred_element_type=jnp.float32)   # (H*B, T, T)
    # Precomputed additive mask: 0 for valid keys, -1e30 for padded keys.
    scores = scores + kmask_ref[...].reshape(1, 1, T_PAD)

    m = jnp.max(scores, axis=-1, keepdims=True)
    p = jnp.exp(scores - m)
    # EUP approx reciprocal for the softmax denominator (documented numerics
    # deviation vs exact division; fine for a bf16 tower).
    p = p * pl.reciprocal(jnp.sum(p, axis=-1, keepdims=True), approx=True)
    ctx = jnp.einsum("gqk,gkd->gqd", p.astype(jnp.bfloat16), vh,
                     preferred_element_type=jnp.float32)      # (H*B, T, HD)

    # Concat heads back on the lane axis -> one 128-deep projection matmul
    # (single MXU contraction instead of HEADS tiny 32-deep matmuls).
    ctx2d = jnp.concatenate(
        [ctx[i * B:(i + 1) * B].reshape(B * T_PAD, HEAD_DIM)
         for i in range(HEADS)],
        axis=-1).astype(jnp.bfloat16)                         # (B*T_PAD, D)
    attn = jnp.dot(ctx2d, wproj_ref[0],
                   preferred_element_type=jnp.float32) + bproj_ref[0]
    x = x + attn

    # -------------------------------- MLP --------------------------------
    h2 = _layernorm(x, g2_ref[0], b2_ref[0]).astype(jnp.bfloat16)
    m1 = jnp.dot(h2, w1_ref[0], preferred_element_type=jnp.float32) + bb1_ref[0]
    m1 = _gelu_exact(m1).astype(jnp.bfloat16)
    m2 = jnp.dot(m1, w2_ref[0], preferred_element_type=jnp.float32) + bb2_ref[0]
    x = x + m2

    x_scr[...] = x

    @pl.when(d == pl.num_programs(0) - 1)
    def _():
        # x_prenorm with CLS + padding dropped, written directly from VMEM
        # (no wrapper slice, lean lane-dense writeback).
        for b in range(B):
            o_ref[b] = x[b * T_PAD + 1: b * T_PAD + T, :].astype(o_ref.dtype)


# ----------------------------- wrappers ---------------------------------------
def patch_embed_assemble(patches, w, b, cls, pos):
    """patches: (B, N_PATCH, K) bf16 -> assembled token slab (B, T_PAD, D) f32."""
    return pl.pallas_call(
        patch_embed_kernel,
        out_shape=jax.ShapeDtypeStruct((B, T_PAD, D), jnp.float32),
        grid=(B,),
        in_specs=[
            pl.BlockSpec((1, N_PATCH, K_PATCH), lambda i: (i, 0, 0)),
            pl.BlockSpec((K_PATCH, D), lambda i: (0, 0)),
            pl.BlockSpec((1, D), lambda i: (0, 0)),
            pl.BlockSpec((1, D), lambda i: (0, 0)),
            pl.BlockSpec((T_PAD, D), lambda i: (0, 0)),
        ],
        out_specs=pl.BlockSpec((1, T_PAD, D), lambda i: (i, 0, 0)),
        compiler_params=pltpu.CompilerParams(dimension_semantics=("parallel",)),
    )(patches, w, b, cls, pos)


def transformer_blocks(x0, kmask, bp):
    """All DEPTH blocks in one fused, depth-pipelined pallas_call.

    Grid is (DEPTH,) only: the whole batch is folded into the matmul M
    dimension and the activation slab stays resident in VMEM, so each layer's
    weight stack is streamed from HBM exactly once.
    """
    assert x0.shape[0] == B

    def wspec(shape):
        n = len(shape)
        return pl.BlockSpec((1,) + shape, lambda d, _n=n: (d,) + (0,) * _n)

    return pl.pallas_call(
        blocks_kernel,
        out_shape=jax.ShapeDtypeStruct((B, N_PATCH, D), jnp.float32),
        grid=(DEPTH,),
        in_specs=[
            pl.BlockSpec((B, T_PAD, D), lambda d: (0, 0, 0)),   # token slab
            pl.BlockSpec((1, T_PAD), lambda d: (0, 0)),         # key-pad mask
            wspec((1, D)), wspec((1, D)),                       # LN1 gamma/beta
            wspec((D, 3 * D)), wspec((1, 3 * D)),               # qkv (scale folded)
            wspec((D, D)), wspec((1, D)),                       # proj
            wspec((1, D)), wspec((1, D)),                       # LN2 gamma/beta
            wspec((D, MLP)), wspec((1, MLP)),                   # fc1
            wspec((MLP, D)), wspec((1, D)),                     # fc2
        ],
        out_specs=pl.BlockSpec((B, N_PATCH, D), lambda d: (0, 0, 0)),
        scratch_shapes=[pltpu.VMEM((B * T_PAD, D), jnp.float32)],
        compiler_params=pltpu.CompilerParams(
            # Depth is a sequential, activation-resident axis; no batch
            # "parallel" axis, so both v7x TensorCores aren't forced to
            # independently re-stream the weight stack.
            dimension_semantics=("arbitrary",),
            # <= 48 MiB: leaves headroom on v7x (64 MiB physical VMEM).
            vmem_limit_bytes=48 * 1024 * 1024,
        ),
    )(
        x0, kmask,
        bp["g1"], bp["b1"],
        bp["wqkv"], bp["bqkv"],
        bp["wproj"], bp["bproj"],
        bp["g2"], bp["b2"],
        bp["w1"], bp["bb1"],
        bp["w2"], bp["bb2"],
    )


def extract_patches(images):
    # images: (B, C, H, W) NCHW -> (B, N_PATCH, C*P*P), flattened in (C, P, P)
    # order to match PyTorch Conv2d weight layout (D, C, P, P).
    Bi, C, H, W = images.shape
    gh, gw = H // PATCH, W // PATCH
    x = images.reshape(Bi, C, gh, PATCH, gw, PATCH)
    x = jnp.transpose(x, (0, 2, 4, 1, 3, 5))
    return x.reshape(Bi, gh * gw, C * PATCH * PATCH)


def advxl_vision_tower_forward(images, params):
    """Equivalent of AdvXLVisionTower.forward(images) with select_feature='patch'."""
    in_dtype = images.dtype
    images = images.astype(jnp.float32)  # cast to tower compute dtype

    # Patch extraction (XLA reshape/transpose), cast to bf16 at the kernel
    # boundary to halve the patch-input DMA bytes.
    patches = extract_patches(images).astype(jnp.bfloat16)   # (B, N, C*P*P)

    # Patch embedding + CLS + pos-embed + pad-to-T_PAD, all inside one kernel.
    x0 = patch_embed_assemble(patches, params["patch_w"], params["patch_b"],
                              params["cls"], params["pos"])   # (B, T_PAD, D)

    # Additive key-padding mask (0 for valid tokens, -1e30 for pad keys),
    # computed once outside the kernel (constant-folded under jit).
    kmask = jnp.where(jnp.arange(T_PAD) < T, 0.0, -1e30)
    kmask = kmask.astype(jnp.float32).reshape(1, T_PAD)

    # All transformer blocks in one fused, depth-pipelined Pallas kernel;
    # the kernel itself drops CLS + padding (select_feature='patch').
    features = transformer_blocks(x0, kmask, params["blocks"])  # (B, N_PATCH, D)
    return features.astype(in_dtype)


# ----------------------------- pure-JAX reference -----------------------------
def reference_forward(images, params):
    """f32 reference of the same math (uses the same scale-folded params)."""
    patches = extract_patches(images.astype(jnp.float32))
    emb = patches @ params["patch_w"].astype(jnp.float32) + params["patch_b"]
    cls = jnp.broadcast_to(params["cls"][None], (B, 1, D))
    x = jnp.concatenate([cls, emb], axis=1) + params["pos"][None, :T]
    bp = params["blocks"]
    for d in range(DEPTH):
        h = _layernorm(x, bp["g1"][d], bp["b1"][d])
        qkv = h @ bp["wqkv"][d].astype(jnp.float32) + bp["bqkv"][d]
        q = qkv[..., 0 * D:1 * D].reshape(B, T, HEADS, HEAD_DIM)
        k = qkv[..., 1 * D:2 * D].reshape(B, T, HEADS, HEAD_DIM)
        v = qkv[..., 2 * D:3 * D].reshape(B, T, HEADS, HEAD_DIM)
        s = jnp.einsum("bqhd,bkhd->bhqk", q, k)
        a = jax.nn.softmax(s, axis=-1)
        ctx = jnp.einsum("bhqk,bkhd->bqhd", a, v).reshape(B, T, D)
        x = x + ctx @ bp["wproj"][d].astype(jnp.float32) + bp["bproj"][d]
        h2 = _layernorm(x, bp["g2"][d], bp["b2"][d])
        m1 = jax.nn.gelu(h2 @ bp["w1"][d].astype(jnp.float32) + bp["bb1"][d],
                         approximate=False)
        x = x + m1 @ bp["w2"][d].astype(jnp.float32) + bp["bb2"][d]
    return x[:, 1:]


# ----------------------------- deterministic params --------------------------
def init_params(key):
    scale = 0.02
    ks = jax.random.split(key, 8)

    def nrm(k, shape):
        return scale * jax.random.normal(k, shape, jnp.float32)

    # Fold 1/sqrt(head_dim) into the q columns of wqkv / bqkv once at
    # parameter-prep time (removes a per-layer VPU multiply on the q slab).
    attn_scale = HEAD_DIM ** -0.5
    wqkv = nrm(ks[3], (DEPTH, D, 3 * D))
    wqkv = wqkv.at[:, :, :D].multiply(attn_scale)
    bqkv = jnp.zeros((DEPTH, 1, 3 * D), jnp.float32)
    bqkv = bqkv.at[:, :, :D].multiply(attn_scale)

    pos = nrm(ks[2], (T_PAD, D))
    pos = pos.at[T:].set(0.0)          # pad rows carry zero position embedding

    return {
        # conv / embedding parameters (matmul weights bf16, rest f32)
        "patch_w": nrm(ks[0], (K_PATCH, D)).astype(jnp.bfloat16),
        "patch_b": jnp.zeros((1, D), jnp.float32),
        "cls": nrm(ks[1], (1, D)),
        "pos": pos,
        # per-layer weights stacked on a leading depth axis
        "blocks": {
            "g1": jnp.ones((DEPTH, 1, D), jnp.float32),
            "b1": jnp.zeros((DEPTH, 1, D), jnp.float32),
            "wqkv": wqkv.astype(jnp.bfloat16),
            "bqkv": bqkv,
            "wproj": nrm(ks[4], (DEPTH, D, D)).astype(jnp.bfloat16),
            "bproj": jnp.zeros((DEPTH, 1, D), jnp.float32),
            "g2": jnp.ones((DEPTH, 1, D), jnp.float32),
            "b2": jnp.zeros((DEPTH, 1, D), jnp.float32),
            "w1": nrm(ks[5], (DEPTH, D, MLP)).astype(jnp.bfloat16),
            "bb1": jnp.zeros((DEPTH, 1, MLP), jnp.float32),
            "w2": nrm(ks[6], (DEPTH, MLP, D)).astype(jnp.bfloat16),
            "bb2": jnp.zeros((DEPTH, 1, D), jnp.float32),
        },
    }


# ----------------------------- main -------------------------------------------
if __name__ == "__main__":
    key = jax.random.PRNGKey(0)
    k_img, k_par = jax.random.split(key)

    images = jax.random.normal(k_img, (B, C_IN, IMG, IMG), jnp.float32)  # NCHW
    params = init_params(k_par)

    fwd = jax.jit(advxl_vision_tower_forward)
    feats = fwd(images, params)
    feats = jax.block_until_ready(feats)

    assert feats.shape == (B, N_PATCH, D), feats.shape
    assert feats.dtype == images.dtype
    assert bool(jnp.all(jnp.isfinite(feats)))

    # Tolerance-asserted pure-JAX reference (bf16 matmuls + approx reciprocals
    # in the kernel vs f32 reference -> expected max-abs error ~3e-3).
    ref = reference_forward(images, params)
    max_err = float(jnp.max(jnp.abs(feats.astype(jnp.float32) - ref)))
    assert max_err < 5e-2, f"kernel vs reference max abs error {max_err}"

    print("KERNEL_OK")
</pallas_src>

<mosaic_0001>
module attributes {stable_mosaic.version = 11 : i64} {
  func.func @patch_embed_kernel(%arg0: i32, %arg1: memref<1x4x192xbf16, #tpu.memory_space<vmem>>, %arg2: memref<192x128xbf16, #tpu.memory_space<vmem>>, %arg3: memref<1x128xf32, #tpu.memory_space<vmem>>, %arg4: memref<1x128xf32, #tpu.memory_space<vmem>>, %arg5: memref<8x128xf32, #tpu.memory_space<vmem>>, %arg6: memref<1x8x128xf32, #tpu.memory_space<vmem>>) attributes {dimension_semantics = [#tpu.dimension_semantics<parallel>], iteration_bounds = array<i64: 2>, scalar_prefetch = 0 : i64, scratch_operands = 0 : i64, tpu.core_type = #tpu.core_type<tc>, window_params = [{transform_indices = @transform_0, window_bounds = array<i64: 1, 4, 192>}, {pipeline_mode = #tpu.pipeline_mode<synchronous>, transform_indices = @transform_1, window_bounds = array<i64: 192, 128>}, {pipeline_mode = #tpu.pipeline_mode<synchronous>, transform_indices = @transform_2, window_bounds = array<i64: 1, 128>}, {pipeline_mode = #tpu.pipeline_mode<synchronous>, transform_indices = @transform_3, window_bounds = array<i64: 1, 128>}, {pipeline_mode = #tpu.pipeline_mode<synchronous>, transform_indices = @transform_4, window_bounds = array<i64: 8, 128>}, {transform_indices = @transform_5, window_bounds = array<i64: 1, 8, 128>}]} {
    %c0 = arith.constant 0 : index
    %c0_0 = arith.constant 0 : index
    %c0_1 = arith.constant 0 : index
    %0 = vector.load %arg1[%c0, %c0_0, %c0_1] : memref<1x4x192xbf16, #tpu.memory_space<vmem>>, vector<1x4x192xbf16>
    %1 = vector.shape_cast %0 : vector<1x4x192xbf16> to vector<4x192xbf16>
    %c0_2 = arith.constant 0 : index
    %c0_3 = arith.constant 0 : index
    %2 = vector.load %arg2[%c0_2, %c0_3] : memref<192x128xbf16, #tpu.memory_space<vmem>>, vector<192x128xbf16>
    %cst = arith.constant dense<0.000000e+00> : vector<4x128xf32>
    %3 = tpu.matmul %1, %2, %cst {dimension_numbers = #tpu.dot_dimension_numbers<[1], [0], [0], [1], [0, 0, 1, 1], [], []>} : vector<4x192xbf16>, vector<192x128xbf16>, vector<4x128xf32> -> vector<4x128xf32>
    %c0_4 = arith.constant 0 : index
    %c0_5 = arith.constant 0 : index
    %4 = vector.load %arg3[%c0_4, %c0_5] : memref<1x128xf32, #tpu.memory_space<vmem>>, vector<1x128xf32>
    %5 = vector.broadcast %4 : vector<1x128xf32> to vector<4x128xf32>
    %6 = arith.addf %3, %5 : vector<4x128xf32>
    %c0_6 = arith.constant 0 : index
    %c0_7 = arith.constant 0 : index
    %7 = vector.load %arg4[%c0_6, %c0_7] : memref<1x128xf32, #tpu.memory_space<vmem>>, vector<1x128xf32>
    %cst_8 = arith.constant 0.000000e+00 : f32
    %8 = vector.broadcast %cst_8 : f32 to vector<3x128xf32>
    %9 = tpu.concatenate %7, %6, %8 in 0 : vector<1x128xf32>, vector<4x128xf32>, vector<3x128xf32> -> vector<8x128xf32>
    %c0_9 = arith.constant 0 : index
    %c0_10 = arith.constant 0 : index
    %10 = vector.load %arg5[%c0_9, %c0_10] : memref<8x128xf32, #tpu.memory_space<vmem>>, vector<8x128xf32>
    %11 = arith.addf %9, %10 : vector<8x128xf32>
    %c0_11 = arith.constant 0 : index
    %c0_12 = arith.constant 0 : index
    %c0_13 = arith.constant 0 : index
    %12 = vector.load %arg6[%c0_11, %c0_12, %c0_13] : memref<1x8x128xf32, #tpu.memory_space<vmem>>, vector<1x8x128xf32>
    %13 = vector.shape_cast %12 : vector<1x8x128xf32> to vector<8x128xf32>
    %14 = vector.shape_cast %11 : vector<8x128xf32> to vector<1x8x128xf32>
    tpu.vector_store %arg6[%c0_11, %c0_12, %c0_13], %14 {strides = array<i32>} : memref<1x8x128xf32, #tpu.memory_space<vmem>>, vector<1x8x128xf32>,
    return
  }
  func.func @transform_0(%arg0: i32) -> (i32, i32, i32) {
    %c0_i32 = arith.constant 0 : i32
    %c0_i32_0 = arith.constant 0 : i32
    %c0_i32_1 = arith.constant 0 : i32
    return %arg0, %c0_i32, %c0_i32_0 : i32, i32, i32
  }
  func.func @transform_1(%arg0: i32) -> (i32, i32) {
    %c0_i32 = arith.constant 0 : i32
    %c0_i32_0 = arith.constant 0 : i32
    %c0_i32_1 = arith.constant 0 : i32
    return %c0_i32, %c0_i32_0 : i32, i32
  }
  func.func @transform_2(%arg0: i32) -> (i32, i32) {
    %c0_i32 = arith.constant 0 : i32
    %c0_i32_0 = arith.constant 0 : i32
    %c0_i32_1 = arith.constant 0 : i32
    return %c0_i32, %c0_i32_0 : i32, i32
  }
  func.func @transform_3(%arg0: i32) -> (i32, i32) {
    %c0_i32 = arith.constant 0 : i32
    %c0_i32_0 = arith.constant 0 : i32
    %c0_i32_1 = arith.constant 0 : i32
    return %c0_i32, %c0_i32_0 : i32, i32
  }
  func.func @transform_4(%arg0: i32) -> (i32, i32) {
    %c0_i32 = arith.constant 0 : i32
    %c0_i32_0 = arith.constant 0 : i32
    %c0_i32_1 = arith.constant 0 : i32
    return %c0_i32, %c0_i32_0 : i32, i32
  }
  func.func @transform_5(%arg0: i32) -> (i32, i32, i32) {
    %c0_i32 = arith.constant 0 : i32
    %c0_i32_0 = arith.constant 0 : i32
    %c0_i32_1 = arith.constant 0 : i32
    return %arg0, %c0_i32, %c0_i32_0 : i32, i32, i32
  }
}

module attributes {stable_mosaic.version = 11 : i64} {
  func.func @blocks_kernel(%arg0: i32, %arg1: memref<2x8x128xf32, #tpu.memory_space<vmem>>, %arg2: memref<1x8xf32, #tpu.memory_space<vmem>>, %arg3: memref<1x1x128xf32, #tpu.memory_space<vmem>>, %arg4: memref<1x1x128xf32, #tpu.memory_space<vmem>>, %arg5: memref<1x128x384xbf16, #tpu.memory_space<vmem>>, %arg6: memref<1x1x384xf32, #tpu.memory_space<vmem>>, %arg7: memref<1x128x128xbf16, #tpu.memory_space<vmem>>, %arg8: memref<1x1x128xf32, #tpu.memory_space<vmem>>, %arg9: memref<1x1x128xf32, #tpu.memory_space<vmem>>, %arg10: memref<1x1x128xf32, #tpu.memory_space<vmem>>, %arg11: memref<1x128x512xbf16, #tpu.memory_space<vmem>>, %arg12: memref<1x1x512xf32, #tpu.memory_space<vmem>>, %arg13: memref<1x512x128xbf16, #tpu.memory_space<vmem>>, %arg14: memref<1x1x128xf32, #tpu.memory_space<vmem>>, %arg15: memref<2x4x128xf32, #tpu.memory_space<vmem>>, %arg16: memref<16x128xf32, #tpu.memory_space<vmem>>) attributes {dimension_semantics = [#tpu.dimension_semantics<arbitrary>], iteration_bounds = array<i64: 2>, scalar_prefetch = 0 : i64, scratch_operands = 1 : i64, tpu.core_type = #tpu.core_type<tc>, window_params = [{pipeline_mode = #tpu.pipeline_mode<synchronous>, transform_indices = @transform_0, window_bounds = array<i64: 2, 8, 128>}, {pipeline_mode = #tpu.pipeline_mode<synchronous>, transform_indices = @transform_1, window_bounds = array<i64: 1, 8>}, {transform_indices = @transform_2, window_bounds = array<i64: 1, 1, 128>}, {transform_indices = @transform_3, window_bounds = array<i64: 1, 1, 128>}, {transform_indices = @transform_4, window_bounds = array<i64: 1, 128, 384>}, {transform_indices = @transform_5, window_bounds = array<i64: 1, 1, 384>}, {transform_indices = @transform_6, window_bounds = array<i64: 1, 128, 128>}, {transform_indices = @transform_7, window_bounds = array<i64: 1, 1, 128>}, {transform_indices = @transform_8, window_bounds = array<i64: 1, 1, 128>}, {transform_indices = @transform_9, window_bounds = array<i64: 1, 1, 128>}, {transform_indices = @transform_10, window_bounds = array<i64: 1, 128, 512>}, {transform_indices = @transform_11, window_bounds = array<i64: 1, 1, 512>}, {transform_indices = @transform_12, window_bounds = array<i64: 1, 512, 128>}, {transform_indices = @transform_13, window_bounds = array<i64: 1, 1, 128>}, {pipeline_mode = #tpu.pipeline_mode<synchronous>, transform_indices = @transform_14, window_bounds = array<i64: 2, 4, 128>}]} {
    %c0_i32 = arith.constant 0 : i32
    %0 = arith.cmpi eq, %arg0, %c0_i32 : i32
    %1 = arith.extui %0 : i1 to i32
    %c0_i32_0 = arith.constant 0 : i32
    %2 = arith.cmpi ne, %1, %c0_i32_0 : i32
    scf.if %2 {
      %c0_75 = arith.constant 0 : index
      %c0_76 = arith.constant 0 : index
      %c0_77 = arith.constant 0 : index
      %180 = vector.load %arg1[%c0_75, %c0_76, %c0_77] : memref<2x8x128xf32, #tpu.memory_space<vmem>>, vector<2x8x128xf32>
      %181 = vector.shape_cast %180 : vector<2x8x128xf32> to vector<16x128xf32>
      %c0_78 = arith.constant 0 : index
      %c0_79 = arith.constant 0 : index
      %182 = vector.load %arg16[%c0_78, %c0_79] : memref<16x128xf32, #tpu.memory_space<vmem>>, vector<16x128xf32>
      tpu.vector_store %arg16[%c0_78, %c0_79], %181 {strides = array<i32>} : memref<16x128xf32, #tpu.memory_space<vmem>>, vector<16x128xf32>,
    } else {
    }
    %c0 = arith.constant 0 : index
    %c0_1 = arith.constant 0 : index
    %3 = vector.load %arg16[%c0, %c0_1] : memref<16x128xf32, #tpu.memory_space<vmem>>, vector<16x128xf32>
    %c0_2 = arith.constant 0 : index
    %c0_3 = arith.constant 0 : index
    %c0_4 = arith.constant 0 : index
    %4 = vector.load %arg3[%c0_2, %c0_3, %c0_4] : memref<1x1x128xf32, #tpu.memory_space<vmem>>, vector<1x1x128xf32>
    %5 = vector.shape_cast %4 : vector<1x1x128xf32> to vector<1x128xf32>
    %c0_5 = arith.constant 0 : index
    %c0_6 = arith.constant 0 : index
    %c0_7 = arith.constant 0 : index
    %6 = vector.load %arg4[%c0_5, %c0_6, %c0_7] : memref<1x1x128xf32, #tpu.memory_space<vmem>>, vector<1x1x128xf32>
    %7 = vector.shape_cast %6 : vector<1x1x128xf32> to vector<1x128xf32>
    %cst = arith.constant dense<0.000000e+00> : vector<16xf32>
    %8 = vector.multi_reduction <add>, %3, %cst [1] : vector<16x128xf32> to vector<16xf32>
    %9 = vector.shape_cast %8 : vector<16xf32> to vector<16x1xf32>
    %cst_8 = arith.constant 1.280000e+02 : f32
    %10 = vector.broadcast %cst_8 : f32 to vector<16x1xf32>
    %11 = arith.divf %9, %10 : vector<16x1xf32>
    %12 = vector.broadcast %11 : vector<16x1xf32> to vector<16x128xf32>
    %13 = arith.subf %3, %12 : vector<16x128xf32>
    %14 = arith.mulf %13, %13 : vector<16x128xf32>
    %cst_9 = arith.constant dense<0.000000e+00> : vector<16xf32>
    %15 = vector.multi_reduction <add>, %14, %cst_9 [1] : vector<16x128xf32> to vector<16xf32>
    %16 = vector.shape_cast %15 : vector<16xf32> to vector<16x1xf32>
    %cst_10 = arith.constant 1.280000e+02 : f32
    %17 = vector.broadcast %cst_10 : f32 to vector<16x1xf32>
    %18 = arith.divf %16, %17 : vector<16x1xf32>
    %cst_11 = arith.constant 9.99999997E-7 : f32
    %19 = vector.broadcast %cst_11 : f32 to vector<16x1xf32>
    %20 = arith.addf %18, %19 : vector<16x1xf32>
    %21 = math.rsqrt %20 : vector<16x1xf32>
    %22 = vector.broadcast %21 : vector<16x1xf32> to vector<16x128xf32>
    %23 = arith.mulf %13, %22 : vector<16x128xf32>
    %24 = vector.broadcast %5 : vector<1x128xf32> to vector<16x128xf32>
    %25 = arith.mulf %23, %24 : vector<16x128xf32>
    %26 = vector.broadcast %7 : vector<1x128xf32> to vector<16x128xf32>
    %27 = arith.addf %25, %26 : vector<16x128xf32>
    %28 = arith.truncf %27 : vector<16x128xf32> to vector<16x128xbf16>
    %c0_12 = arith.constant 0 : index
    %c0_13 = arith.constant 0 : index
    %c0_14 = arith.constant 0 : index
    %29 = vector.load %arg5[%c0_12, %c0_13, %c0_14] : memref<1x128x384xbf16, #tpu.memory_space<vmem>>, vector<1x128x384xbf16>
    %30 = vector.shape_cast %29 : vector<1x128x384xbf16> to vector<128x384xbf16>
    %cst_15 = arith.constant dense<0.000000e+00> : vector<16x384xf32>
    %31 = tpu.matmul %28, %30, %cst_15 {dimension_numbers = #tpu.dot_dimension_numbers<[1], [0], [0], [1], [0, 0, 1, 1], [], []>} : vector<16x128xbf16>, vector<128x384xbf16>, vector<16x384xf32> -> vector<16x384xf32>
    %c0_16 = arith.constant 0 : index
    %c0_17 = arith.constant 0 : index
    %c0_18 = arith.constant 0 : index
    %32 = vector.load %arg6[%c0_16, %c0_17, %c0_18] : memref<1x1x384xf32, #tpu.memory_space<vmem>>, vector<1x1x384xf32>
    %33 = vector.shape_cast %32 : vector<1x1x384xf32> to vector<1x384xf32>
    %34 = vector.broadcast %33 : vector<1x384xf32> to vector<16x384xf32>
    %35 = arith.addf %31, %34 : vector<16x384xf32>
    %36 = vector.extract_strided_slice %35 {offsets = [0, 0], sizes = [16, 128], strides = [1, 1]} : vector<16x384xf32> to vector<16x128xf32>
    %37 = vector.extract_strided_slice %35 {offsets = [0, 128], sizes = [16, 128], strides = [1, 1]} : vector<16x384xf32> to vector<16x128xf32>
    %38 = vector.extract_strided_slice %35 {offsets = [0, 256], sizes = [16, 128], strides = [1, 1]} : vector<16x384xf32> to vector<16x128xf32>
    %39 = vector.shape_cast %36 : vector<16x128xf32> to vector<2x8x128xf32>
    %40 = vector.extract_strided_slice %39 {offsets = [0, 0, 0], sizes = [2, 8, 32], strides = [1, 1, 1]} : vector<2x8x128xf32> to vector<2x8x32xf32>
    %41 = vector.extract_strided_slice %39 {offsets = [0, 0, 32], sizes = [2, 8, 32], strides = [1, 1, 1]} : vector<2x8x128xf32> to vector<2x8x32xf32>
    %42 = vector.extract_strided_slice %39 {offsets = [0, 0, 64], sizes = [2, 8, 32], strides = [1, 1, 1]} : vector<2x8x128xf32> to vector<2x8x32xf32>
    %43 = vector.extract_strided_slice %39 {offsets = [0, 0, 96], sizes = [2, 8, 32], strides = [1, 1, 1]} : vector<2x8x128xf32> to vector<2x8x32xf32>
    %44 = tpu.concatenate %40, %41, %42, %43 in 0 : vector<2x8x32xf32>, vector<2x8x32xf32>, vector<2x8x32xf32>, vector<2x8x32xf32> -> vector<8x8x32xf32>
    %45 = arith.truncf %44 : vector<8x8x32xf32> to vector<8x8x32xbf16>
    %46 = vector.shape_cast %37 : vector<16x128xf32> to vector<2x8x128xf32>
    %47 = vector.extract_strided_slice %46 {offsets = [0, 0, 0], sizes = [2, 8, 32], strides = [1, 1, 1]} : vector<2x8x128xf32> to vector<2x8x32xf32>
    %48 = vector.extract_strided_slice %46 {offsets = [0, 0, 32], sizes = [2, 8, 32], strides = [1, 1, 1]} : vector<2x8x128xf32> to vector<2x8x32xf32>
    %49 = vector.extract_strided_slice %46 {offsets = [0, 0, 64], sizes = [2, 8, 32], strides = [1, 1, 1]} : vector<2x8x128xf32> to vector<2x8x32xf32>
    %50 = vector.extract_strided_slice %46 {offsets = [0, 0, 96], sizes = [2, 8, 32], strides = [1, 1, 1]} : vector<2x8x128xf32> to vector<2x8x32xf32>
    %51 = tpu.concatenate %47, %48, %49, %50 in 0 : vector<2x8x32xf32>, vector<2x8x32xf32>, vector<2x8x32xf32>, vector<2x8x32xf32> -> vector<8x8x32xf32>
    %52 = arith.truncf %51 : vector<8x8x32xf32> to vector<8x8x32xbf16>
    %53 = vector.shape_cast %38 : vector<16x128xf32> to vector<2x8x128xf32>
    %54 = vector.extract_strided_slice %53 {offsets = [0, 0, 0], sizes = [2, 8, 32], strides = [1, 1, 1]} : vector<2x8x128xf32> to vector<2x8x32xf32>
    %55 = vector.extract_strided_slice %53 {offsets = [0, 0, 32], sizes = [2, 8, 32], strides = [1, 1, 1]} : vector<2x8x128xf32> to vector<2x8x32xf32>
    %56 = vector.extract_strided_slice %53 {offsets = [0, 0, 64], sizes = [2, 8, 32], strides = [1, 1, 1]} : vector<2x8x128xf32> to vector<2x8x32xf32>
    %57 = vector.extract_strided_slice %53 {offsets = [0, 0, 96], sizes = [2, 8, 32], strides = [1, 1, 1]} : vector<2x8x128xf32> to vector<2x8x32xf32>
    %58 = tpu.concatenate %54, %55, %56, %57 in 0 : vector<2x8x32xf32>, vector<2x8x32xf32>, vector<2x8x32xf32>, vector<2x8x32xf32> -> vector<8x8x32xf32>
    %59 = arith.truncf %58 : vector<8x8x32xf32> to vector<8x8x32xbf16>
    "tpu.trace_start"() <{level = 10 : i32, message = "gqd,gkd->gqk"}> : () -> ()
    %cst_19 = arith.constant dense<0.000000e+00> : vector<8x8x8xf32>
    %60 = tpu.matmul %45, %52, %cst_19 {dimension_numbers = #tpu.dot_dimension_numbers<[2], [2], [1], [1], [0, 0, 0, 1, 1, 1], [0], [0]>} : vector<8x8x32xbf16>, vector<8x8x32xbf16>, vector<8x8x8xf32> -> vector<8x8x8xf32>
    "tpu.trace_stop"() : () -> ()
    %c0_20 = arith.constant 0 : index
    %c0_21 = arith.constant 0 : index
    %61 = vector.load %arg2[%c0_20, %c0_21] : memref<1x8xf32, #tpu.memory_space<vmem>>, vector<1x8xf32>
    %62 = vector.shape_cast %61 : vector<1x8xf32> to vector<1x1x8xf32>
    %63 = vector.broadcast %62 : vector<1x1x8xf32> to vector<8x8x8xf32>
    %64 = arith.addf %60, %63 : vector<8x8x8xf32>
    %cst_22 = arith.constant dense<0xFF800000> : vector<8x8xf32>
    %65 = vector.multi_reduction <maximumf>, %64, %cst_22 [2] : vector<8x8x8xf32> to vector<8x8xf32>
    %66 = vector.shape_cast %65 : vector<8x8xf32> to vector<8x8x1xf32>
    %67 = vector.broadcast %66 : vector<8x8x1xf32> to vector<8x8x8xf32>
    %68 = arith.subf %64, %67 : vector<8x8x8xf32>
    %69 = math.exp %68 : vector<8x8x8xf32>
    %cst_23 = arith.constant dense<0.000000e+00> : vector<8x8xf32>
    %70 = vector.multi_reduction <add>, %69, %cst_23 [2] : vector<8x8x8xf32> to vector<8x8xf32>
    %71 = vector.shape_cast %70 : vector<8x8xf32> to vector<8x8x1xf32>
    %72 = tpu.reciprocal %71 {approx = true} : vector<8x8x1xf32> -> vector<8x8x1xf32>
    %73 = vector.broadcast %72 : vector<8x8x1xf32> to vector<8x8x8xf32>
    %74 = arith.mulf %69, %73 : vector<8x8x8xf32>
    %75 = arith.truncf %74 : vector<8x8x8xf32> to vector<8x8x8xbf16>
    "tpu.trace_start"() <{level = 10 : i32, message = "gqk,gkd->gqd"}> : () -> ()
    %cst_24 = arith.constant dense<0.000000e+00> : vector<8x8x32xf32>
    %76 = tpu.matmul %75, %59, %cst_24 {dimension_numbers = #tpu.dot_dimension_numbers<[2], [1], [1], [2], [0, 0, 0, 1, 1, 2], [0], [0]>} : vector<8x8x8xbf16>, vector<8x8x32xbf16>, vector<8x8x32xf32> -> vector<8x8x32xf32>
    "tpu.trace_stop"() : () -> ()
    %77 = vector.extract_strided_slice %76 {offsets = [0, 0, 0], sizes = [2, 8, 32], strides = [1, 1, 1]} : vector<8x8x32xf32> to vector<2x8x32xf32>
    %78 = vector.shape_cast %77 : vector<2x8x32xf32> to vector<16x32xf32>
    %79 = vector.extract_strided_slice %76 {offsets = [2, 0, 0], sizes = [2, 8, 32], strides = [1, 1, 1]} : vector<8x8x32xf32> to vector<2x8x32xf32>
    %80 = vector.shape_cast %79 : vector<2x8x32xf32> to vector<16x32xf32>
    %81 = vector.extract_strided_slice %76 {offsets = [4, 0, 0], sizes = [2, 8, 32], strides = [1, 1, 1]} : vector<8x8x32xf32> to vector<2x8x32xf32>
    %82 = vector.shape_cast %81 : vector<2x8x32xf32> to vector<16x32xf32>
    %83 = vector.extract_strided_slice %76 {offsets = [6, 0, 0], sizes = [2, 8, 32], strides = [1, 1, 1]} : vector<8x8x32xf32> to vector<2x8x32xf32>
    %84 = vector.shape_cast %83 : vector<2x8x32xf32> to vector<16x32xf32>
    %85 = tpu.concatenate %78, %80, %82, %84 in 1 : vector<16x32xf32>, vector<16x32xf32>, vector<16x32xf32>, vector<16x32xf32> -> vector<16x128xf32>
    %86 = arith.truncf %85 : vector<16x128xf32> to vector<16x128xbf16>
    %c0_25 = arith.constant 0 : index
    %c0_26 = arith.constant 0 : index
    %c0_27 = arith.constant 0 : index
    %87 = vector.load %arg7[%c0_25, %c0_26, %c0_27] : memref<1x128x128xbf16, #tpu.memory_space<vmem>>, vector<1x128x128xbf16>
    %88 = vector.shape_cast %87 : vector<1x128x128xbf16> to vector<128x128xbf16>
    %cst_28 = arith.constant dense<0.000000e+00> : vector<16x128xf32>
    %89 = tpu.matmul %86, %88, %cst_28 {dimension_numbers = #tpu.dot_dimension_numbers<[1], [0], [0], [1], [0, 0, 1, 1], [], []>} : vector<16x128xbf16>, vector<128x128xbf16>, vector<16x128xf32> -> vector<16x128xf32>
    %c0_29 = arith.constant 0 : index
    %c0_30 = arith.constant 0 : index
    %c0_31 = arith.constant 0 : index
    %90 = vector.load %arg8[%c0_29, %c0_30, %c0_31] : memref<1x1x128xf32, #tpu.memory_space<vmem>>, vector<1x1x128xf32>
    %91 = vector.shape_cast %90 : vector<1x1x128xf32> to vector<1x128xf32>
    %92 = vector.broadcast %91 : vector<1x128xf32> to vector<16x128xf32>
    %93 = arith.addf %89, %92 : vector<16x128xf32>
    %94 = arith.addf %3, %93 : vector<16x128xf32>
    %c0_32 = arith.constant 0 : index
    %c0_33 = arith.constant 0 : index
    %c0_34 = arith.constant 0 : index
    %95 = vector.load %arg9[%c0_32, %c0_33, %c0_34] : memref<1x1x128xf32, #tpu.memory_space<vmem>>, vector<1x1x128xf32>
    %96 = vector.shape_cast %95 : vector<1x1x128xf32> to vector<1x128xf32>
    %c0_35 = arith.constant 0 : index
    %c0_36 = arith.constant 0 : index
    %c0_37 = arith.constant 0 : index
    %97 = vector.load %arg10[%c0_35, %c0_36, %c0_37] : memref<1x1x128xf32, #tpu.memory_space<vmem>>, vector<1x1x128xf32>
    %98 = vector.shape_cast %97 : vector<1x1x128xf32> to vector<1x128xf32>
    %cst_38 = arith.constant dense<0.000000e+00> : vector<16xf32>
    %99 = vector.multi_reduction <add>, %94, %cst_38 [1] : vector<16x128xf32> to vector<16xf32>
    %100 = vector.shape_cast %99 : vector<16xf32> to vector<16x1xf32>
    %cst_39 = arith.constant 1.280000e+02 : f32
    %101 = vector.broadcast %cst_39 : f32 to vector<16x1xf32>
    %102 = arith.divf %100, %101 : vector<16x1xf32>
    %103 = vector.broadcast %102 : vector<16x1xf32> to vector<16x128xf32>
    %104 = arith.subf %94, %103 : vector<16x128xf32>
    %105 = arith.mulf %104, %104 : vector<16x128xf32>
    %cst_40 = arith.constant dense<0.000000e+00> : vector<16xf32>
    %106 = vector.multi_reduction <add>, %105, %cst_40 [1] : vector<16x128xf32> to vector<16xf32>
    %107 = vector.shape_cast %106 : vector<16xf32> to vector<16x1xf32>
    %cst_41 = arith.constant 1.280000e+02 : f32
    %108 = vector.broadcast %cst_41 : f32 to vector<16x1xf32>
    %109 = arith.divf %107, %108 : vector<16x1xf32>
    %cst_42 = arith.constant 9.99999997E-7 : f32
    %110 = vector.broadcast %cst_42 : f32 to vector<16x1xf32>
    %111 = arith.addf %109, %110 : vector<16x1xf32>
    %112 = math.rsqrt %111 : vector<16x1xf32>
    %113 = vector.broadcast %112 : vector<16x1xf32> to vector<16x128xf32>
    %114 = arith.mulf %104, %113 : vector<16x128xf32>
    %115 = vector.broadcast %96 : vector<1x128xf32> to vector<16x128xf32>
    %116 = arith.mulf %114, %115 : vector<16x128xf32>
    %117 = vector.broadcast %98 : vector<1x128xf32> to vector<16x128xf32>
    %118 = arith.addf %116, %117 : vector<16x128xf32>
    %119 = arith.truncf %118 : vector<16x128xf32> to vector<16x128xbf16>
    %c0_43 = arith.constant 0 : index
    %c0_44 = arith.constant 0 : index
    %c0_45 = arith.constant 0 : index
    %120 = vector.load %arg11[%c0_43, %c0_44, %c0_45] : memref<1x128x512xbf16, #tpu.memory_space<vmem>>, vector<1x128x512xbf16>
    %121 = vector.shape_cast %120 : vector<1x128x512xbf16> to vector<128x512xbf16>
    %cst_46 = arith.constant dense<0.000000e+00> : vector<16x512xf32>
    %122 = tpu.matmul %119, %121, %cst_46 {dimension_numbers = #tpu.dot_dimension_numbers<[1], [0], [0], [1], [0, 0, 1, 1], [], []>} : vector<16x128xbf16>, vector<128x512xbf16>, vector<16x512xf32> -> vector<16x512xf32>
    %c0_47 = arith.constant 0 : index
    %c0_48 = arith.constant 0 : index
    %c0_49 = arith.constant 0 : index
    %123 = vector.load %arg12[%c0_47, %c0_48, %c0_49] : memref<1x1x512xf32, #tpu.memory_space<vmem>>, vector<1x1x512xf32>
    %124 = vector.shape_cast %123 : vector<1x1x512xf32> to vector<1x512xf32>
    %125 = vector.broadcast %124 : vector<1x512xf32> to vector<16x512xf32>
    %126 = arith.addf %122, %125 : vector<16x512xf32>
    %cst_50 = arith.constant 5.000000e-01 : f32
    %127 = vector.broadcast %cst_50 : f32 to vector<16x512xf32>
    %128 = arith.mulf %127, %126 : vector<16x512xf32>
    %cst_51 = arith.constant 0.707106769 : f32
    %129 = vector.broadcast %cst_51 : f32 to vector<16x512xf32>
    %130 = arith.mulf %126, %129 : vector<16x512xf32>
    %cst_52 = arith.constant 0.000000e+00 : f32
    %131 = vector.broadcast %cst_52 : f32 to vector<16x512xf32>
    %132 = arith.cmpf oge, %130, %131 : vector<16x512xf32>
    %cst_53 = arith.constant 1.000000e+00 : f32
    %cst_54 = arith.constant -1.000000e+00 : f32
    %133 = vector.broadcast %cst_53 : f32 to vector<16x512xf32>
    %134 = vector.broadcast %cst_54 : f32 to vector<16x512xf32>
    %135 = arith.select %132, %133, %134 : vector<16x512xi1>, vector<16x512xf32>
    %136 = math.absf %130 : vector<16x512xf32>
    %cst_55 = arith.constant 0.327591091 : f32
    %137 = vector.broadcast %cst_55 : f32 to vector<16x512xf32>
    %138 = arith.mulf %137, %136 : vector<16x512xf32>
    %cst_56 = arith.constant 1.000000e+00 : f32
    %139 = vector.broadcast %cst_56 : f32 to vector<16x512xf32>
    %140 = arith.addf %139, %138 : vector<16x512xf32>
    %141 = tpu.reciprocal %140 {approx = true} : vector<16x512xf32> -> vector<16x512xf32>
    %cst_57 = arith.constant 1.06140542 : f32
    %142 = vector.broadcast %cst_57 : f32 to vector<16x512xf32>
    %143 = arith.mulf %142, %141 : vector<16x512xf32>
    %cst_58 = arith.constant -1.45315206 : f32
    %144 = vector.broadcast %cst_58 : f32 to vector<16x512xf32>
    %145 = arith.addf %143, %144 : vector<16x512xf32>
    %146 = arith.mulf %145, %141 : vector<16x512xf32>
    %cst_59 = arith.constant 1.42141378 : f32
    %147 = vector.broadcast %cst_59 : f32 to vector<16x512xf32>
    %148 = arith.addf %146, %147 : vector<16x512xf32>
    %149 = arith.mulf %148, %141 : vector<16x512xf32>
    %cst_60 = arith.constant -0.284496725 : f32
    %150 = vector.broadcast %cst_60 : f32 to vector<16x512xf32>
    %151 = arith.addf %149, %150 : vector<16x512xf32>
    %152 = arith.mulf %151, %141 : vector<16x512xf32>
    %cst_61 = arith.constant 0.254829586 : f32
    %153 = vector.broadcast %cst_61 : f32 to vector<16x512xf32>
    %154 = arith.addf %152, %153 : vector<16x512xf32>
    %155 = arith.mulf %154, %141 : vector<16x512xf32>
    %cst_62 = arith.constant 0.000000e+00 : f32
    %156 = vector.broadcast %cst_62 : f32 to vector<16x512xf32>
    %157 = arith.subf %156, %136 : vector<16x512xf32>
    %158 = arith.mulf %157, %136 : vector<16x512xf32>
    %159 = math.exp %158 : vector<16x512xf32>
    %160 = arith.mulf %155, %159 : vector<16x512xf32>
    %cst_63 = arith.constant 1.000000e+00 : f32
    %161 = vector.broadcast %cst_63 : f32 to vector<16x512xf32>
    %162 = arith.subf %161, %160 : vector<16x512xf32>
    %163 = arith.mulf %135, %162 : vector<16x512xf32>
    %cst_64 = arith.constant 1.000000e+00 : f32
    %164 = vector.broadcast %cst_64 : f32 to vector<16x512xf32>
    %165 = arith.addf %164, %163 : vector<16x512xf32>
    %166 = arith.mulf %128, %165 : vector<16x512xf32>
    %167 = arith.truncf %166 : vector<16x512xf32> to vector<16x512xbf16>
    %c0_65 = arith.constant 0 : index
    %c0_66 = arith.constant 0 : index
    %c0_67 = arith.constant 0 : index
    %168 = vector.load %arg13[%c0_65, %c0_66, %c0_67] : memref<1x512x128xbf16, #tpu.memory_space<vmem>>, vector<1x512x128xbf16>
    %169 = vector.shape_cast %168 : vector<1x512x128xbf16> to vector<512x128xbf16>
    %cst_68 = arith.constant dense<0.000000e+00> : vector<16x128xf32>
    %170 = tpu.matmul %167, %169, %cst_68 {dimension_numbers = #tpu.dot_dimension_numbers<[1], [0], [0], [1], [0, 0, 1, 1], [], []>} : vector<16x512xbf16>, vector<512x128xbf16>, vector<16x128xf32> -> vector<16x128xf32>
    %c0_69 = arith.constant 0 : index
    %c0_70 = arith.constant 0 : index
    %c0_71 = arith.constant 0 : index
    %171 = vector.load %arg14[%c0_69, %c0_70, %c0_71] : memref<1x1x128xf32, #tpu.memory_space<vmem>>, vector<1x1x128xf32>
    %172 = vector.shape_cast %171 : vector<1x1x128xf32> to vector<1x128xf32>
    %173 = vector.broadcast %172 : vector<1x128xf32> to vector<16x128xf32>
    %174 = arith.addf %170, %173 : vector<16x128xf32>
    %175 = arith.addf %94, %174 : vector<16x128xf32>
    %c0_72 = arith.constant 0 : index
    %c0_73 = arith.constant 0 : index
    %176 = vector.load %arg16[%c0_72, %c0_73] : memref<16x128xf32, #tpu.memory_space<vmem>>, vector<16x128xf32>
    tpu.vector_store %arg16[%c0_72, %c0_73], %175 {strides = array<i32>} : memref<16x128xf32, #tpu.memory_space<vmem>>, vector<16x128xf32>,
    %c1_i32 = arith.constant 1 : i32
    %177 = arith.cmpi eq, %arg0, %c1_i32 : i32
    %178 = arith.extui %177 : i1 to i32
    %c0_i32_74 = arith.constant 0 : i32
    %179 = arith.cmpi ne, %178, %c0_i32_74 : i32
    scf.if %179 {
      %180 = vector.extract_strided_slice %175 {offsets = [1, 0], sizes = [4, 128], strides = [1, 1]} : vector<16x128xf32> to vector<4x128xf32>
      %c0_75 = arith.constant 0 : index
      %c0_76 = arith.constant 0 : index
      %c0_77 = arith.constant 0 : index
      %181 = vector.load %arg15[%c0_75, %c0_76, %c0_77] : memref<2x4x128xf32, #tpu.memory_space<vmem>>, vector<1x4x128xf32>
      %182 = vector.shape_cast %181 : vector<1x4x128xf32> to vector<4x128xf32>
      %183 = vector.shape_cast %180 : vector<4x128xf32> to vector<1x4x128xf32>
      tpu.vector_store %arg15[%c0_75, %c0_76, %c0_77], %183 {strides = array<i32>} : memref<2x4x128xf32, #tpu.memory_space<vmem>>, vector<1x4x128xf32>,
      %184 = vector.extract_strided_slice %175 {offsets = [9, 0], sizes = [4, 128], strides = [1, 1]} : vector<16x128xf32> to vector<4x128xf32>
      %c1 = arith.constant 1 : index
      %c0_78 = arith.constant 0 : index
      %c0_79 = arith.constant 0 : index
      %185 = vector.load %arg15[%c1, %c0_78, %c0_79] : memref<2x4x128xf32, #tpu.memory_space<vmem>>, vector<1x4x128xf32>
      %186 = vector.shape_cast %185 : vector<1x4x128xf32> to vector<4x128xf32>
      %187 = vector.shape_cast %184 : vector<4x128xf32> to vector<1x4x128xf32>
      tpu.vector_store %arg15[%c1, %c0_78, %c0_79], %187 {strides = array<i32>} : memref<2x4x128xf32, #tpu.memory_space<vmem>>, vector<1x4x128xf32>,
    } else {
    }
    return
  }
  func.func @transform_0(%arg0: i32) -> (i32, i32, i32) {
    %c0_i32 = arith.constant 0 : i32
    %c0_i32_0 = arith.constant 0 : i32
    %c0_i32_1 = arith.constant 0 : i32
    %c0_i32_2 = arith.constant 0 : i32
    return %c0_i32, %c0_i32_0, %c0_i32_1 : i32, i32, i32
  }
  func.func @transform_1(%arg0: i32) -> (i32, i32) {
    %c0_i32 = arith.constant 0 : i32
    %c0_i32_0 = arith.constant 0 : i32
    %c0_i32_1 = arith.constant 0 : i32
    return %c0_i32, %c0_i32_0 : i32, i32
  }
  func.func @transform_2(%arg0: i32) -> (i32, i32, i32) {
    %c0_i32 = arith.constant 0 : i32
    %c0_i32_0 = arith.constant 0 : i32
    %c0_i32_1 = arith.constant 0 : i32
    return %arg0, %c0_i32, %c0_i32_0 : i32, i32, i32
  }
  func.func @transform_3(%arg0: i32) -> (i32, i32, i32) {
    %c0_i32 = arith.constant 0 : i32
    %c0_i32_0 = arith.constant 0 : i32
    %c0_i32_1 = arith.constant 0 : i32
    return %arg0, %c0_i32, %c0_i32_0 : i32, i32, i32
  }
  func.func @transform_4(%arg0: i32) -> (i32, i32, i32) {
    %c0_i32 = arith.constant 0 : i32
    %c0_i32_0 = arith.constant 0 : i32
    %c0_i32_1 = arith.constant 0 : i32
    return %arg0, %c0_i32, %c0_i32_0 : i32, i32, i32
  }
  func.func @transform_5(%arg0: i32) -> (i32, i32, i32) {
    %c0_i32 = arith.constant 0 : i32
    %c0_i32_0 = arith.constant 0 : i32
    %c0_i32_1 = arith.constant 0 : i32
    return %arg0, %c0_i32, %c0_i32_0 : i32, i32, i32
  }
  func.func @transform_6(%arg0: i32) -> (i32, i32, i32) {
    %c0_i32 = arith.constant 0 : i32
    %c0_i32_0 = arith.constant 0 : i32
    %c0_i32_1 = arith.constant 0 : i32
    return %arg0, %c0_i32, %c0_i32_0 : i32, i32, i32
  }
  func.func @transform_7(%arg0: i32) -> (i32, i32, i32) {
    %c0_i32 = arith.constant 0 : i32
    %c0_i32_0 = arith.constant 0 : i32
    %c0_i32_1 = arith.constant 0 : i32
    return %arg0, %c0_i32, %c0_i32_0 : i32, i32, i32
  }
  func.func @transform_8(%arg0: i32) -> (i32, i32, i32) {
    %c0_i32 = arith.constant 0 : i32
    %c0_i32_0 = arith.constant 0 : i32
    %c0_i32_1 = arith.constant 0 : i32
    return %arg0, %c0_i32, %c0_i32_0 : i32, i32, i32
  }
  func.func @transform_9(%arg0: i32) -> (i32, i32, i32) {
    %c0_i32 = arith.constant 0 : i32
    %c0_i32_0 = arith.constant 0 : i32
    %c0_i32_1 = arith.constant 0 : i32
    return %arg0, %c0_i32, %c0_i32_0 : i32, i32, i32
  }
  func.func @transform_10(%arg0: i32) -> (i32, i32, i32) {
    %c0_i32 = arith.constant 0 : i32
    %c0_i32_0 = arith.constant 0 : i32
    %c0_i32_1 = arith.constant 0 : i32
    return %arg0, %c0_i32, %c0_i32_0 : i32, i32, i32
  }
  func.func @transform_11(%arg0: i32) -> (i32, i32, i32) {
    %c0_i32 = arith.constant 0 : i32
    %c0_i32_0 = arith.constant 0 : i32
    %c0_i32_1 = arith.constant 0 : i32
    return %arg0, %c0_i32, %c0_i32_0 : i32, i32, i32
  }
  func.func @transform_12(%arg0: i32) -> (i32, i32, i32) {
    %c0_i32 = arith.constant 0 : i32
    %c0_i32_0 = arith.constant 0 : i32
    %c0_i32_1 = arith.constant 0 : i32
    return %arg0, %c0_i32, %c0_i32_0 : i32, i32, i32
  }
  func.func @transform_13(%arg0: i32) -> (i32, i32, i32) {
    %c0_i32 = arith.constant 0 : i32
    %c0_i32_0 = arith.constant 0 : i32
    %c0_i32_1 = arith.constant 0 : i32
    return %arg0, %c0_i32, %c0_i32_0 : i32, i32, i32
  }
  func.func @transform_14(%arg0: i32) -> (i32, i32, i32) {
    %c0_i32 = arith.constant 0 : i32
    %c0_i32_0 = arith.constant 0 : i32
    %c0_i32_1 = arith.constant 0 : i32
    %c0_i32_2 = arith.constant 0 : i32
    return %c0_i32, %c0_i32_0, %c0_i32_1 : i32, i32, i32
  }
}

</mosaic_0001>

<llo_original>
// kernel: advxl_vision_tower_forward.2
$region0: #{advxl_vision_tower_forward.2}
  #allocation0 [shape = 'u32[]', space=smem, size = 0x4, offset = 0x4, fixed_abs, tag = 'smem constant byte address 0x4 - core index']
  #allocation1 [shape = 'u32[144,128]{1,0:T(1,128)}', space=vmem, size = 0x12000, scoped, tag = 'internal scratch']
  %s0 = inlined_call_operand.vmem [shape: bf16[2,4,192], index: 0, kind: input, shape index: {}]
  %s1 = inlined_call_operand.vmem [shape: bf16[192,128], index: 1, kind: input, shape index: {}]
  %s2 = inlined_call_operand.vmem [shape: f32[1,128], index: 2, kind: input, shape index: {}]
  %s3 = inlined_call_operand.vmem [shape: f32[1,128], index: 3, kind: input, shape index: {}]
  %s4 = inlined_call_operand.vmem [shape: f32[8,128], index: 4, kind: input, shape index: {}]
  %s5 = inlined_call_operand.vmem [shape: f32[2,8,128], index: 5, kind: output, shape index: {}]
  %s6 = sld [smem:[#allocation0]]
  $region53: #{advxl_vision_tower_forward.2} parent=0
    _
  %s8 = ssub.s32 1, %s6
  %s9 = scalar_select 0, %s8, %s6
  loop: start=0, step=1, limit=4
  $region2: #{advxl_vision_tower_forward.2} parent=0 // loop_pre_header
    _
  $region3: #{advxl_vision_tower_forward.2} parent=0 // loop_header
    %s11 = sphi 0, %s15
    %p12 = scmp.ge.s32.totalorder %s11, 4
    %s21 = sphi 0, %s23
    %s24 = sphi 0, %s21
    %s25 = sphi 0, %s24
    %s41 = sphi 0, %s25
    %s45 = sphi 0, %s45
    %s47 = sphi 0, %s45
    %s48 = sphi 0, %s47
    %s62 = sphi 0, %s48
    %s66 = sphi 0, %s66
    %s68 = sphi 0, %s66
    %s69 = sphi 0, %s68
    %s83 = sphi 0, %s69
    %s87 = sphi 0, %s87
    %s89 = sphi 0, %s87
    %s90 = sphi 0, %s89
    %s104 = sphi 0, %s90
    %s108 = sphi 0, %s108
    %s110 = sphi 0, %s108
    %s111 = sphi 0, %s110
    %s125 = sphi 0, %s111
    %s131 = sphi 0, %s133
    %s134 = sphi 0, %s131
    %s135 = sphi 0, %s134
    %s151 = sphi 0, %s135
  $region4: #{advxl_vision_tower_forward.2} parent=0 // loop_header_branch
    %14 = sbr.rel (%p12) target = $region8
  $region5: #{advxl_vision_tower_forward.2} parent=0 // loop_body
    %s16 = ssub.s32 %s11, 1
    %s17 = ssub.s32 %s11, 2
    %s18 = sadd.s32 %s11, 1
    %s19 = ssub.s32 %s11, %s18
    %p20 = scmp.eq.s32.totalorder %s19, 0
    %s22 = sadd.s32 %s21, 1
    %s23 = scalar_select %p20, %s21, %s22
    %p26 = pneg %p20
    %p27 = scmp.eq.s32.totalorder %s11, 1
    %p28 = por %p26, %p27
    %p29 = scmp.ne.s32.totalorder %s21, %s24
    %p30 = scmp.eq.s32.totalorder %s11, 0
    %p31 = por %p29, %p30
    %p32 = scmp.ne.s32.totalorder %s21, %s24
    %p33 = scmp.eq.s32.totalorder %s16, 1
    %p34 = por %p32, %p33
    %p35 = scmp.ne.s32.totalorder %s24, %s25
    %p36 = scmp.eq.s32.totalorder %s16, 0
    %p37 = por %p35, %p36
    %p38 = scmp.ne.s32.totalorder %s24, %s25
    %p39 = scmp.eq.s32.totalorder %s17, 1
    %p40 = por %p38, %p39
    %p42 = scmp.ne.s32.totalorder %s25, %s41
    %p43 = scmp.eq.s32.totalorder %s17, 0
    %p44 = por %p42, %p43
    %s46 = sadd.s32 %s45, 1
    %p49 = scmp.eq.s32.totalorder %s11, 1
    %p50 = scmp.ne.s32.totalorder %s45, %s47
    %p51 = scmp.eq.s32.totalorder %s11, 0
    %p52 = por %p50, %p51
    %p53 = scmp.ne.s32.totalorder %s45, %s47
    %p54 = scmp.eq.s32.totalorder %s16, 1
    %p55 = por %p53, %p54
    %p56 = scmp.ne.s32.totalorder %s47, %s48
    %p57 = scmp.eq.s32.totalorder %s16, 0
    %p58 = por %p56, %p57
    %p59 = scmp.ne.s32.totalorder %s47, %s48
    %p60 = scmp.eq.s32.totalorder %s17, 1
    %p61 = por %p59, %p60
    %p63 = scmp.ne.s32.totalorder %s48, %s62
    %p64 = scmp.eq.s32.totalorder %s17, 0
    %p65 = por %p63, %p64
    %s67 = sadd.s32 %s66, 1
    %p70 = scmp.eq.s32.totalorder %s11, 1
    %p71 = scmp.ne.s32.totalorder %s66, %s68
    %p72 = scmp.eq.s32.totalorder %s11, 0
    %p73 = por %p71, %p72
    %p74 = scmp.ne.s32.totalorder %s66, %s68
    %p75 = scmp.eq.s32.totalorder %s16, 1
    %p76 = por %p74, %p75
    %p77 = scmp.ne.s32.totalorder %s68, %s69
    %p78 = scmp.eq.s32.totalorder %s16, 0
    %p79 = por %p77, %p78
    %p80 = scmp.ne.s32.totalorder %s68, %s69
    %p81 = scmp.eq.s32.totalorder %s17, 1
    %p82 = por %p80, %p81
    %p84 = scmp.ne.s32.totalorder %s69, %s83
    %p85 = scmp.eq.s32.totalorder %s17, 0
    %p86 = por %p84, %p85
    %s88 = sadd.s32 %s87, 1
    %p91 = scmp.eq.s32.totalorder %s11, 1
    %p92 = scmp.ne.s32.totalorder %s87, %s89
    %p93 = scmp.eq.s32.totalorder %s11, 0
    %p94 = por %p92, %p93
    %p95 = scmp.ne.s32.totalorder %s87, %s89
    %p96 = scmp.eq.s32.totalorder %s16, 1
    %p97 = por %p95, %p96
    %p98 = scmp.ne.s32.totalorder %s89, %s90
    %p99 = scmp.eq.s32.totalorder %s16, 0
    %p100 = por %p98, %p99
    %p101 = scmp.ne.s32.totalorder %s89, %s90
    %p102 = scmp.eq.s32.totalorder %s17, 1
    %p103 = por %p101, %p102
    %p105 = scmp.ne.s32.totalorder %s90, %s104
    %p106 = scmp.eq.s32.totalorder %s17, 0
    %p107 = por %p105, %p106
    %s109 = sadd.s32 %s108, 1
    %p112 = scmp.eq.s32.totalorder %s11, 1
    %p113 = scmp.ne.s32.totalorder %s108, %s110
    %p114 = scmp.eq.s32.totalorder %s11, 0
    %p115 = por %p113, %p114
    %p116 = scmp.ne.s32.totalorder %s108, %s110
    %p117 = scmp.eq.s32.totalorder %s16, 1
    %p118 = por %p116, %p117
    %p119 = scmp.ne.s32.totalorder %s110, %s111
    %p120 = scmp.eq.s32.totalorder %s16, 0
    %p121 = por %p119, %p120
    %p122 = scmp.ne.s32.totalorder %s110, %s111
    %p123 = scmp.eq.s32.totalorder %s17, 1
    %p124 = por %p122, %p123
    %p126 = scmp.ne.s32.totalorder %s111, %s125
    %p127 = scmp.eq.s32.totalorder %s17, 0
    %p128 = por %p126, %p127
    %s129 = ssub.s32 %s11, %s18
    %p130 = scmp.eq.s32.totalorder %s129, 0
    %s132 = sadd.s32 %s131, 1
    %s133 = scalar_select %p130, %s131, %s132
    %p136 = pneg %p130
    %p137 = scmp.eq.s32.totalorder %s11, 1
    %p138 = por %p136, %p137
    %p139 = scmp.ne.s32.totalorder %s131, %s134
    %p140 = scmp.eq.s32.totalorder %s11, 0
    %p141 = por %p139, %p140
    %p142 = scmp.ne.s32.totalorder %s131, %s134
    %p143 = scmp.eq.s32.totalorder %s16, 1
    %p144 = por %p142, %p143
    %p145 = scmp.ne.s32.totalorder %s134, %s135
    %p146 = scmp.eq.s32.totalorder %s16, 0
    %p147 = por %p145, %p146
    %p148 = scmp.ne.s32.totalorder %s134, %s135
    %p149 = scmp.eq.s32.totalorder %s17, 1
    %p150 = por %p148, %p149
    %p152 = scmp.ne.s32.totalorder %s135, %s151
    %p153 = scmp.eq.s32.totalorder %s17, 0
    %p154 = por %p152, %p153
    %p155 = scmp.le.s32.totalorder 1, %s11
    %p156 = scmp.lt.s32.totalorder %s11, 3
    %p157 = pnand %p155, %p156
    %p158 = pneg %p157
    // Predicated region
    $region9: #{advxl_vision_tower_forward.2} parent=5 // pred_check
      _
    $region10: #{advxl_vision_tower_forward.2} parent=5 // pred_check_branch
      %160 = sbr.rel (%p157) target = $region12
    $region11: #{advxl_vision_tower_forward.2} parent=5 // pred_region
      %s161 = ssub.s32 %s11, 1
      // Predicated region
      $region13: #{advxl_vision_tower_forward.2} parent=11 // pred_check
        %p162 = pneg %p58
      $region14: #{advxl_vision_tower_forward.2} parent=11 // pred_check_branch
        %164 = sbr.rel (%p162) target = $region16
      $region15: #{advxl_vision_tower_forward.2} parent=11 // pred_region
        _
      $region16: #{advxl_vision_tower_forward.2} parent=11 // pred_fallthru
        _
      // Predicated region
      $region17: #{advxl_vision_tower_forward.2} parent=11 // pred_check
        %p165 = pneg %p79
      $region18: #{advxl_vision_tower_forward.2} parent=11 // pred_check_branch
        %167 = sbr.rel (%p165) target = $region20
      $region19: #{advxl_vision_tower_forward.2} parent=11 // pred_region
        _
      $region20: #{advxl_vision_tower_forward.2} parent=11 // pred_fallthru
        _
      // Predicated region
      $region21: #{advxl_vision_tower_forward.2} parent=11 // pred_check
        %p168 = pneg %p100
      $region22: #{advxl_vision_tower_forward.2} parent=11 // pred_check_branch
        %170 = sbr.rel (%p168) target = $region24
      $region23: #{advxl_vision_tower_forward.2} parent=11 // pred_region
        _
      $region24: #{advxl_vision_tower_forward.2} parent=11 // pred_fallthru
        _
      // Predicated region
      $region25: #{advxl_vision_tower_forward.2} parent=11 // pred_check
        %p171 = pneg %p121
      $region26: #{advxl_vision_tower_forward.2} parent=11 // pred_check_branch
        %173 = sbr.rel (%p171) target = $region28
      $region27: #{advxl_vision_tower_forward.2} parent=11 // pred_region
        _
      $region28: #{advxl_vision_tower_forward.2} parent=11 // pred_fallthru
        _
    $region12: #{advxl_vision_tower_forward.2} parent=5 // pred_fallthru
      _
    %p174 = scmp.lt.s32.totalorder %s11, 2
    // Predicated region
    $region29: #{advxl_vision_tower_forward.2} parent=5 // pred_check
      %p175 = pneg %p174
    $region30: #{advxl_vision_tower_forward.2} parent=5 // pred_check_branch
      %177 = sbr.rel (%p175) target = $region32
    $region31: #{advxl_vision_tower_forward.2} parent=5 // pred_region
      // Predicated region
      $region33: #{advxl_vision_tower_forward.2} parent=31 // pred_check
        %p178 = pneg %p31
      $region34: #{advxl_vision_tower_forward.2} parent=31 // pred_check_branch
        %180 = sbr.rel (%p178) target = $region36
      $region35: #{advxl_vision_tower_forward.2} parent=31 // pred_region
        %p181 = scmp.lt.s32.totalorder %s11, 1
        %s182 = scalar_select %p181, %s11, 1
        %s183 = smul.addr %s182, 2
        %s184 = smul.addr %s183, 2
        %s185 = scalar_lea.vmem %s0, %s184
      $region36: #{advxl_vision_tower_forward.2} parent=31 // pred_fallthru
        _
    $region32: #{advxl_vision_tower_forward.2} parent=5 // pred_fallthru
      _
    %p186 = scmp.le.s32.totalorder 1, %s11
    %p187 = scmp.lt.s32.totalorder %s11, 3
    %p188 = pnand %p186, %p187
    %p189 = pneg %p188
    // Predicated region
    $region37: #{advxl_vision_tower_forward.2} parent=5 // pred_check
      _
    $region38: #{advxl_vision_tower_forward.2} parent=5 // pred_check_branch
      %191 = sbr.rel (%p188) target = $region40
    $region39: #{advxl_vision_tower_forward.2} parent=5 // pred_region
      %s192 = ssub.s32 %s11, 1
      %p193 = scmp.lt.s32.totalorder %s16, 1
      %s194 = scalar_select %p193, %s16, 1
      %s195 = smul.addr %s194, 2
      %s196 = smul.addr %s195, 2
      %s197 = scalar_lea.vmem %s0, %s196
      %p198 = pneg %p37
      %p199 = pneg %p34
      %p200 = pneg %p58
      %p201 = pneg %p55
      %p202 = pneg %p79
      %p203 = pneg %p76
      %p204 = pneg %p100
      %p205 = pneg %p97
      %p206 = pneg %p121
      %p207 = pneg %p118
      %p208 = pneg %p147
      %p209 = pneg %p144
      %p210 = scmp.lt.s32.totalorder %s16, 1
      %s211 = scalar_select %p210, %s16, 1
      %s212 = smul.addr %s211, 8
      %s213 = scalar_lea.vmem %s5, %s212
      %p214 = scmp.lt.s32.totalorder %s16, 1
      %s215 = scalar_select %p214, %s16, 1
      %s216 = smul.addr %s215, 2
      %s217 = smul.addr %s216, 2
      %s218 = scalar_lea.vmem %s0, %s217
      %p219 = scmp.lt.s32.totalorder %s16, 1
      %s220 = scalar_select %p219, %s16, 1
      %s221 = smul.addr %s220, 8
      %s222 = scalar_lea.vmem %s5, %s221
      %v224 = vld [vmem:[%s218] sm:$0xf]
      %v225 = vld [vmem:[%s1] sm:$0xf]
      %v226 = vld [vmem:[%s1 + $0x4] sm:$0xf]
      %v227 = vld [vmem:[%s1 + $0x8] sm:$0xf]
      %v228 = vld [vmem:[%s1 + $0xc] sm:$0xf]
      %v229 = vld [vmem:[%s1 + $0x10] sm:$0xf]
      %v230 = vld [vmem:[%s1 + $0x14] sm:$0xf]
      %v231 = vld [vmem:[%s1 + $0x18] sm:$0xf]
      %v232 = vld [vmem:[%s1 + $0x1c] sm:$0xf]
      %v233 = vld [vmem:[%s1 + $0x20] sm:$0xf]
      %v234 = vld [vmem:[%s1 + $0x24] sm:$0xf]
      %v235 = vld [vmem:[%s1 + $0x28] sm:$0xf]
      %v236 = vld [vmem:[%s1 + $0x2c] sm:$0xf]
      %v237 = vld [vmem:[%s1 + $0x30] sm:$0xf]
      %v238 = vld [vmem:[%s1 + $0x34] sm:$0xf]
      %v239 = vld [vmem:[%s1 + $0x38] sm:$0xf]
      %v240 = vld [vmem:[%s1 + $0x3c] sm:$0xf]
      %v241 = vld [vmem:[%s1 + $0x40] sm:$0xf]
      %v242 = vld [vmem:[%s1 + $0x44] sm:$0xf]
      %v243 = vld [vmem:[%s1 + $0x48] sm:$0xf]
      %v244 = vld [vmem:[%s1 + $0x4c] sm:$0xf]
      %v245 = vld [vmem:[%s1 + $0x50] sm:$0xf]
      %v246 = vld [vmem:[%s1 + $0x54] sm:$0xf]
      %v247 = vld [vmem:[%s1 + $0x58] sm:$0xf]
      %v248 = vld [vmem:[%s1 + $0x5c] sm:$0xf]
      %v249 = vld [vmem:[%s2] sm:$0x1]
      %v251 = vlaneseq
      %v252 = vshrl.u32 %v251, 7
      %v253 = vsub.s32 0, %v252
      %v254 = vrot.slane %v249, %v253
      %v258 = vunpack.c.l.s4 1983009808
      %v259 = vunpack.c.0.s8 %v258
      %v260 = vlaneseq
      %v261 = vshrl.u32 %v260, 7
      %v262 = vsub.s32 %v259, %v261
      %v263 = vrot.slane %v224, %v262
      %v264 = vcombine.high %v263, %v263
      %v290 = vunpack.c.l.b16 %v225
      %v291 = vunpack.c.l.b16 %v226
      %v292 = vunpack.c.l.b16 %v227
      %v293 = vunpack.c.l.b16 %v228
      %v294 = vunpack.c.l.b16 %v229
      %v295 = vunpack.c.l.b16 %v230
      %v296 = vunpack.c.l.b16 %v231
      %v297 = vunpack.c.l.b16 %v232
      %v298 = vunpack.c.l.b16 %v233
      %v299 = vunpack.c.l.b16 %v234
      %v300 = vunpack.c.l.b16 %v235
      %v301 = vunpack.c.l.b16 %v236
      %v302 = vunpack.c.l.b16 %v237
      %v303 = vunpack.c.l.b16 %v238
      %v304 = vunpack.c.l.b16 %v239
      %v305 = vunpack.c.l.b16 %v240
      %v306 = vunpack.c.l.b16 %v241
      %v307 = vunpack.c.l.b16 %v242
      %v308 = vunpack.c.l.b16 %v243
      %v309 = vunpack.c.l.b16 %v244
      %v310 = vunpack.c.l.b16 %v245
      %v311 = vunpack.c.l.b16 %v246
      %v312 = vunpack.c.l.b16 %v247
      %v313 = vunpack.c.l.b16 %v248
      %v314 = vpack.c.b16 %v291, %v290
      %v315 = vpack.c.b16 %v293, %v292
      %v316 = vpack.c.b16 %v295, %v294
      %v317 = vpack.c.b16 %v297, %v296
      %v318 = vpack.c.b16 %v299, %v298
      %v319 = vpack.c.b16 %v301, %v300
      %v320 = vpack.c.b16 %v303, %v302
      %v321 = vpack.c.b16 %v305, %v304
      %v322 = vpack.c.b16 %v307, %v306
      %v323 = vpack.c.b16 %v309, %v308
      %v324 = vpack.c.b16 %v311, %v310
      %v325 = vpack.c.b16 %v313, %v312
      %vm338 = vcmask 523264
      %v340 = vsel %vm338, %v264, 0
      %342 = vmatprep.subr.bf16.mxu0 0
      %343 = vmatpush1.bf16.msra.mxu0 %v314
      %344 = vmatprep.subr.bf16.mxu0 0
      %345 = vmatpush1.bf16.msra.mxu0 %v315
      %346 = vmatprep.subr.bf16.mxu0 0
      %347 = vmatpush1.bf16.msra.mxu0 %v316
      %348 = vmatprep.subr.bf16.mxu0 0
      %349 = vmatpush1.bf16.msra.mxu0 %v317
      %350 = vmatprep.subr.bf16.mxu0 0
      %351 = vmatpush1.bf16.msra.mxu0 %v318
      %352 = vmatprep.subr.bf16.mxu0 0
      %353 = vmatpush1.bf16.msra.mxu0 %v319
      %354 = vmatprep.subr.bf16.mxu0 0
      %355 = vmatpush1.bf16.msra.mxu0 %v320
      %356 = vmatprep.subr.bf16.mxu0 0
      %357 = vmatpush1.bf16.msra.mxu0 %v321
      %358 = vmatprep.subr.bf16.mxu0 0
      %359 = vmatpush1.bf16.msra.mxu0 %v322
      %360 = vmatprep.subr.bf16.mxu0 0
      %361 = vmatpush1.bf16.msra.mxu0 %v323
      %362 = vmatprep.subr.bf16.mxu0 0
      %363 = vmatpush1.bf16.msra.mxu0 %v324
      %364 = vmatprep.subr.bf16.mxu0 0
      %365 = vmatpush1.bf16.msra.mxu0 %v325
      %366 = vmatprep.subr.bf16.mxu0 0
      %367 = vmatpush1.bf16.msra.mxu0 0
      %368 = vmatprep.subr.bf16.mxu0 0
      %369 = vmatpush1.bf16.msra.mxu0 0
      %370 = vmatprep.subr.bf16.mxu0 0
      %371 = vmatpush1.bf16.msra.mxu0 0
      %372 = vmatprep.subr.bf16.mxu0 0
      %373 = vmatpush1.bf16.msra.mxu0 0
      %374 = vmatprep.mubr.bf16.mxu0 %v340
      %375 = vmatmul.mubr.bf16.gmra.mrb[0].mxu0 %v263
      %v376 = vpop.f32.mrb[0].mxu0
      %v377 = vadd.f32 %v254, %v376
      %v378 = vpop.f32.mrb[0].mxu0
      %v379 = vpop.f32.mrb[0].mxu0
      %v380 = vpop.f32.mrb[0].mxu0
      %381 = vdwg.mxu0
      %v382 = vld [vmem:[%s3] sm:$0x1]
      %v384 = vrot.slane %v377, 7
      %vm386 = vcmask 1040384
      %v387 = vsel %vm386, %v382, %v384
      %vm388 = vcmask 1044480
      %v389 = vsel %vm388, %v387, 0.0
      %v390 = vld [vmem:[%s4] sm:$0xff]
      %v391 = vadd.f32 %v389, %v390
      %392 = vst [vmem:[%s222] sm:$0xff] %v391
      %p393 = scmp.lt.s32.totalorder %s16, 1
      %s394 = scalar_select %p393, %s16, 1
      %s395 = smul.addr %s394, 8
      %s396 = scalar_lea.vmem %s5, %s395
      // Predicated region
      $region41: #{advxl_vision_tower_forward.2} parent=39 // pred_check
        %p397 = pneg %p144
      $region42: #{advxl_vision_tower_forward.2} parent=39 // pred_check_branch
        %399 = sbr.rel (%p397) target = $region44
      $region43: #{advxl_vision_tower_forward.2} parent=39 // pred_region
        _
      $region44: #{advxl_vision_tower_forward.2} parent=39 // pred_fallthru
        _
    $region40: #{advxl_vision_tower_forward.2} parent=5 // pred_fallthru
      _
    %p400 = scmp.le.s32.totalorder 2, %s11
    // Predicated region
    $region45: #{advxl_vision_tower_forward.2} parent=5 // pred_check
      %p401 = pneg %p400
    $region46: #{advxl_vision_tower_forward.2} parent=5 // pred_check_branch
      %403 = sbr.rel (%p401) target = $region48
    $region47: #{advxl_vision_tower_forward.2} parent=5 // pred_region
      %s404 = ssub.s32 %s11, 2
      // Predicated region
      $region49: #{advxl_vision_tower_forward.2} parent=47 // pred_check
        %p405 = pneg %p150
      $region50: #{advxl_vision_tower_forward.2} parent=47 // pred_check_branch
        %407 = sbr.rel (%p405) target = $region52
      $region51: #{advxl_vision_tower_forward.2} parent=47 // pred_region
        %p408 = scmp.lt.s32.totalorder %s17, 1
        %s409 = scalar_select %p408, %s17, 1
        %s410 = smul.addr %s409, 8
        %s411 = scalar_lea.vmem %s5, %s410
      $region52: #{advxl_vision_tower_forward.2} parent=47 // pred_fallthru
        _
    $region48: #{advxl_vision_tower_forward.2} parent=5 // pred_fallthru
      _
  $region6: #{advxl_vision_tower_forward.2} parent=0 // loop_footer
    %s15 = sadd.s32 1, %s11
  $region7: #{advxl_vision_tower_forward.2} parent=0 // loop_footer_branch
    %10 = sbr.rel target = $region3
  $region8: #{advxl_vision_tower_forward.2} parent=0 // loop_exit
    _

// kernel: advxl_vision_tower_forward.3
$region0: #{advxl_vision_tower_forward.3}
  #allocation0 [shape = 'u32[]', space=smem, size = 0x4, offset = 0x4, fixed_abs, tag = 'smem constant byte address 0x4 - core index']
  #allocation1 [shape = 'u32[144,128]{1,0:T(1,128)}', space=vmem, size = 0x12000, scoped, tag = 'internal scratch']
  #allocation2 [shape = 'f32[16,128]{1,0:T(8,128)}', space=vmem, size = 0x2000, scoped, tag = 'scratch operand']
  %s0 = inlined_call_operand.vmem [shape: f32[2,8,128], index: 0, kind: input, shape index: {}]
  %s1 = inlined_call_operand.vmem [shape: f32[1,8], index: 1, kind: input, shape index: {}]
  %s2 = inlined_call_operand.vmem [shape: f32[2,1,128], index: 2, kind: input, shape index: {}]
  %s3 = inlined_call_operand.hbm [shape: f32[2,1,128], index: 3, kind: input, shape index: {}]
  %s4 = inlined_call_operand.hbm [shape: bf16[2,128,384], index: 4, kind: input, shape index: {}]
  %s5 = inlined_call_operand.hbm [shape: f32[2,1,384], index: 5, kind: input, shape index: {}]
  %s6 = inlined_call_operand.vmem [shape: bf16[2,128,128], index: 6, kind: input, shape index: {}]
  %s7 = inlined_call_operand.hbm [shape: f32[2,1,128], index: 7, kind: input, shape index: {}]
  %s8 = inlined_call_operand.hbm [shape: f32[2,1,128], index: 8, kind: input, shape index: {}]
  %s9 = inlined_call_operand.hbm [shape: f32[2,1,128], index: 9, kind: input, shape index: {}]
  %s10 = inlined_call_operand.vmem [shape: bf16[2,128,512], index: 10, kind: input, shape index: {}]
  %s11 = inlined_call_operand.vmem [shape: f32[2,1,512], index: 11, kind: input, shape index: {}]
  %s12 = inlined_call_operand.hbm [shape: bf16[2,512,128], index: 12, kind: input, shape index: {}]
  %s13 = inlined_call_operand.hbm [shape: f32[2,1,128], index: 13, kind: input, shape index: {}]
  %s14 = inlined_call_operand.hbm [shape: f32[2,4,128], index: 14, kind: output, shape index: {}]
  %s15 = sld [smem:[#allocation0]]
  $region129: #{advxl_vision_tower_forward.3} parent=0
    _
  %s17 = ssub.s32 1, %s15
  %s18 = scalar_select 0, %s17, %s15
  $region1: #{advxl_vision_tower_forward.3} parent=0
    #allocation3 [shape = 'u8[1024]{0}', space=vmem, size = 0x400, scoped, tag = 'input window, operand 3']
    #allocation4 [shape = 's32[2]{0}', space=sflag, size = 0x8, scoped, tag = 'scoped memory for advxl_vision_tower_forward.3']
    #allocation5 [shape = 's32[2]{0}', space=sflag, size = 0x8, scoped, tag = 'scoped memory for advxl_vision_tower_forward.3']
    #allocation6 [shape = 'u8[196608]{0}', space=vmem, size = 0x30000, scoped, tag = 'input window, operand 4']
    #allocation7 [shape = 's32[2]{0}', space=sflag, size = 0x8, scoped, tag = 'scoped memory for advxl_vision_tower_forward.3']
    #allocation8 [shape = 'u8[3072]{0}', space=vmem, size = 0xc00, scoped, tag = 'input window, operand 5']
    #allocation9 [shape = 'u8[1024]{0}', space=vmem, size = 0x400, scoped, tag = 'input window, operand 7']
    #allocation10 [shape = 's32[2]{0}', space=sflag, size = 0x8, scoped, tag = 'scoped memory for advxl_vision_tower_forward.3']
    #allocation11 [shape = 'u8[1024]{0}', space=vmem, size = 0x400, scoped, tag = 'input window, operand 8']
    #allocation12 [shape = 'u8[1024]{0}', space=vmem, size = 0x400, scoped, tag = 'input window, operand 9']
    #allocation13 [shape = 's32[2]{0}', space=sflag, size = 0x8, scoped, tag = 'scoped memory for advxl_vision_tower_forward.3']
    #allocation14 [shape = 'u8[262144]{0}', space=vmem, size = 0x40000, scoped, tag = 'input window, operand 12']
    #allocation15 [shape = 'u8[1024]{0}', space=vmem, size = 0x400, scoped, tag = 'input window, operand 13']
    #allocation16 [shape = 's32[2]{0}', space=sflag, size = 0x8, scoped, tag = 'scoped memory for advxl_vision_tower_forward.3']
    #allocation17 [shape = 'u8[4096]{0}', space=vmem, size = 0x1000, scoped, tag = 'output window, operand 0, single buffered']
    %19 = vsyncpa [#allocation4], 0
    %s20 = scalar_lea.sflag [#allocation4], 1
    %21 = vsyncpa %s20, 0
    %22 = vsyncpa [#allocation7], 0
    %s23 = scalar_lea.sflag [#allocation7], 1
    %24 = vsyncpa %s23, 0
    %25 = vsyncpa [#allocation10], 0
    %s26 = scalar_lea.sflag [#allocation10], 1
    %27 = vsyncpa %s26, 0
    %28 = vsyncpa [#allocation13], 0
    %s29 = scalar_lea.sflag [#allocation13], 1
    %30 = vsyncpa %s29, 0
    %31 = vsyncpa [#allocation16], 0
    %s32 = scalar_lea.sflag [#allocation16], 1
    %33 = vsyncpa %s32, 0
    %34 = vsyncpa [#allocation5], 0
    loop: start=0, step=1, limit=4
    $region2: #{advxl_vision_tower_forward.3} parent=1 // loop_pre_header
      _
    $region3: #{advxl_vision_tower_forward.3} parent=1 // loop_header
      %s36 = sphi 0, %s40
      %p37 = scmp.ge.s32.totalorder %s36, 4
      %s44 = sphi 0, %s44
      %s46 = sphi 0, %s44
      %s47 = sphi 0, %s46
      %s61 = sphi 0, %s47
      %s65 = sphi 0, %s65
      %s67 = sphi 0, %s65
      %s68 = sphi 0, %s67
      %s82 = sphi 0, %s68
      %s88 = sphi 0, %s90
      %s91 = sphi 0, %s88
      %s92 = sphi 0, %s91
      %s108 = sphi 0, %s92
      %s114 = sphi 0, %s116
      %s117 = sphi 0, %s114
      %s118 = sphi 0, %s117
      %s134 = sphi 0, %s118
      %s140 = sphi 0, %s142
      %s143 = sphi 0, %s140
      %s144 = sphi 0, %s143
      %s160 = sphi 0, %s144
      %s166 = sphi 0, %s168
      %s169 = sphi 0, %s166
      %s170 = sphi 0, %s169
      %s186 = sphi 0, %s170
      %s192 = sphi 0, %s194
      %s195 = sphi 0, %s192
      %s196 = sphi 0, %s195
      %s212 = sphi 0, %s196
      %s218 = sphi 0, %s220
      %s221 = sphi 0, %s218
      %s222 = sphi 0, %s221
      %s238 = sphi 0, %s222
      %s244 = sphi 0, %s246
      %s247 = sphi 0, %s244
      %s248 = sphi 0, %s247
      %s264 = sphi 0, %s248
      %s270 = sphi 0, %s272
      %s273 = sphi 0, %s270
      %s274 = sphi 0, %s273
      %s290 = sphi 0, %s274
      %s296 = sphi 0, %s298
      %s299 = sphi 0, %s296
      %s300 = sphi 0, %s299
      %s316 = sphi 0, %s300
      %s322 = sphi 0, %s324
      %s325 = sphi 0, %s322
      %s326 = sphi 0, %s325
      %s342 = sphi 0, %s326
      %s348 = sphi 0, %s350
      %s351 = sphi 0, %s348
      %s352 = sphi 0, %s351
      %s368 = sphi 0, %s352
      %s374 = sphi 0, %s376
      %s377 = sphi 0, %s374
      %s378 = sphi 0, %s377
      %s394 = sphi 0, %s378
      %s398 = sphi 0, %s398
      %s400 = sphi 0, %s398
      %s401 = sphi 0, %s400
      %s415 = sphi 0, %s401
    $region4: #{advxl_vision_tower_forward.3} parent=1 // loop_header_branch
      %39 = sbr.rel (%p37) target = $region8
    $region5: #{advxl_vision_tower_forward.3} parent=1 // loop_body
      %s41 = ssub.s32 %s36, 1
      %s42 = ssub.s32 %s36, 2
      %s43 = sadd.s32 %s36, 1
      %s45 = sadd.s32 %s44, 1
      %p48 = scmp.eq.s32.totalorder %s36, 1
      %p49 = scmp.ne.s32.totalorder %s44, %s46
      %p50 = scmp.eq.s32.totalorder %s36, 0
      %p51 = por %p49, %p50
      %p52 = scmp.ne.s32.totalorder %s44, %s46
      %p53 = scmp.eq.s32.totalorder %s41, 1
      %p54 = por %p52, %p53
      %p55 = scmp.ne.s32.totalorder %s46, %s47
      %p56 = scmp.eq.s32.totalorder %s41, 0
      %p57 = por %p55, %p56
      %p58 = scmp.ne.s32.totalorder %s46, %s47
      %p59 = scmp.eq.s32.totalorder %s42, 1
      %p60 = por %p58, %p59
      %p62 = scmp.ne.s32.totalorder %s47, %s61
      %p63 = scmp.eq.s32.totalorder %s42, 0
      %p64 = por %p62, %p63
      %s66 = sadd.s32 %s65, 1
      %p69 = scmp.eq.s32.totalorder %s36, 1
      %p70 = scmp.ne.s32.totalorder %s65, %s67
      %p71 = scmp.eq.s32.totalorder %s36, 0
      %p72 = por %p70, %p71
      %p73 = scmp.ne.s32.totalorder %s65, %s67
      %p74 = scmp.eq.s32.totalorder %s41, 1
      %p75 = por %p73, %p74
      %p76 = scmp.ne.s32.totalorder %s67, %s68
      %p77 = scmp.eq.s32.totalorder %s41, 0
      %p78 = por %p76, %p77
      %p79 = scmp.ne.s32.totalorder %s67, %s68
      %p80 = scmp.eq.s32.totalorder %s42, 1
      %p81 = por %p79, %p80
      %p83 = scmp.ne.s32.totalorder %s68, %s82
      %p84 = scmp.eq.s32.totalorder %s42, 0
      %p85 = por %p83, %p84
      %s86 = ssub.s32 %s36, %s43
      %p87 = scmp.eq.s32.totalorder %s86, 0
      %s89 = sadd.s32 %s88, 1
      %s90 = scalar_select %p87, %s88, %s89
      %p93 = pneg %p87
      %p94 = scmp.eq.s32.totalorder %s36, 1
      %p95 = por %p93, %p94
      %p96 = scmp.ne.s32.totalorder %s88, %s91
      %p97 = scmp.eq.s32.totalorder %s36, 0
      %p98 = por %p96, %p97
      %p99 = scmp.ne.s32.totalorder %s88, %s91
      %p100 = scmp.eq.s32.totalorder %s41, 1
      %p101 = por %p99, %p100
      %p102 = scmp.ne.s32.totalorder %s91, %s92
      %p103 = scmp.eq.s32.totalorder %s41, 0
      %p104 = por %p102, %p103
      %p105 = scmp.ne.s32.totalorder %s91, %s92
      %p106 = scmp.eq.s32.totalorder %s42, 1
      %p107 = por %p105, %p106
      %p109 = scmp.ne.s32.totalorder %s92, %s108
      %p110 = scmp.eq.s32.totalorder %s42, 0
      %p111 = por %p109, %p110
      %s112 = ssub.s32 %s36, %s43
      %p113 = scmp.eq.s32.totalorder %s112, 0
      %s115 = sadd.s32 %s114, 1
      %s116 = scalar_select %p113, %s114, %s115
      %p119 = pneg %p113
      %p120 = scmp.eq.s32.totalorder %s36, 1
      %p121 = por %p119, %p120
      %p122 = scmp.ne.s32.totalorder %s114, %s117
      %p123 = scmp.eq.s32.totalorder %s36, 0
      %p124 = por %p122, %p123
      %p125 = scmp.ne.s32.totalorder %s114, %s117
      %p126 = scmp.eq.s32.totalorder %s41, 1
      %p127 = por %p125, %p126
      %p128 = scmp.ne.s32.totalorder %s117, %s118
      %p129 = scmp.eq.s32.totalorder %s41, 0
      %p130 = por %p128, %p129
      %p131 = scmp.ne.s32.totalorder %s117, %s118
      %p132 = scmp.eq.s32.totalorder %s42, 1
      %p133 = por %p131, %p132
      %p135 = scmp.ne.s32.totalorder %s118, %s134
      %p136 = scmp.eq.s32.totalorder %s42, 0
      %p137 = por %p135, %p136
      %s138 = ssub.s32 %s36, %s43
      %p139 = scmp.eq.s32.totalorder %s138, 0
      %s141 = sadd.s32 %s140, 1
      %s142 = scalar_select %p139, %s140, %s141
      %p145 = pneg %p139
      %p146 = scmp.eq.s32.totalorder %s36, 1
      %p147 = por %p145, %p146
      %p148 = scmp.ne.s32.totalorder %s140, %s143
      %p149 = scmp.eq.s32.totalorder %s36, 0
      %p150 = por %p148, %p149
      %p151 = scmp.ne.s32.totalorder %s140, %s143
      %p152 = scmp.eq.s32.totalorder %s41, 1
      %p153 = por %p151, %p152
      %p154 = scmp.ne.s32.totalorder %s143, %s144
      %p155 = scmp.eq.s32.totalorder %s41, 0
      %p156 = por %p154, %p155
      %p157 = scmp.ne.s32.totalorder %s143, %s144
      %p158 = scmp.eq.s32.totalorder %s42, 1
      %p159 = por %p157, %p158
      %p161 = scmp.ne.s32.totalorder %s144, %s160
      %p162 = scmp.eq.s32.totalorder %s42, 0
      %p163 = por %p161, %p162
      %s164 = ssub.s32 %s36, %s43
      %p165 = scmp.eq.s32.totalorder %s164, 0
      %s167 = sadd.s32 %s166, 1
      %s168 = scalar_select %p165, %s166, %s167
      %p171 = pneg %p165
      %p172 = scmp.eq.s32.totalorder %s36, 1
      %p173 = por %p171, %p172
      %p174 = scmp.ne.s32.totalorder %s166, %s169
      %p175 = scmp.eq.s32.totalorder %s36, 0
      %p176 = por %p174, %p175
      %p177 = scmp.ne.s32.totalorder %s166, %s169
      %p178 = scmp.eq.s32.totalorder %s41, 1
      %p179 = por %p177, %p178
      %p180 = scmp.ne.s32.totalorder %s169, %s170
      %p181 = scmp.eq.s32.totalorder %s41, 0
      %p182 = por %p180, %p181
      %p183 = scmp.ne.s32.totalorder %s169, %s170
      %p184 = scmp.eq.s32.totalorder %s42, 1
      %p185 = por %p183, %p184
      %p187 = scmp.ne.s32.totalorder %s170, %s186
      %p188 = scmp.eq.s32.totalorder %s42, 0
      %p189 = por %p187, %p188
      %s190 = ssub.s32 %s36, %s43
      %p191 = scmp.eq.s32.totalorder %s190, 0
      %s193 = sadd.s32 %s192, 1
      %s194 = scalar_select %p191, %s192, %s193
      %p197 = pneg %p191
      %p198 = scmp.eq.s32.totalorder %s36, 1
      %p199 = por %p197, %p198
      %p200 = scmp.ne.s32.totalorder %s192, %s195
      %p201 = scmp.eq.s32.totalorder %s36, 0
      %p202 = por %p200, %p201
      %p203 = scmp.ne.s32.totalorder %s192, %s195
      %p204 = scmp.eq.s32.totalorder %s41, 1
      %p205 = por %p203, %p204
      %p206 = scmp.ne.s32.totalorder %s195, %s196
      %p207 = scmp.eq.s32.totalorder %s41, 0
      %p208 = por %p206, %p207
      %p209 = scmp.ne.s32.totalorder %s195, %s196
      %p210 = scmp.eq.s32.totalorder %s42, 1
      %p211 = por %p209, %p210
      %p213 = scmp.ne.s32.totalorder %s196, %s212
      %p214 = scmp.eq.s32.totalorder %s42, 0
      %p215 = por %p213, %p214
      %s216 = ssub.s32 %s36, %s43
      %p217 = scmp.eq.s32.totalorder %s216, 0
      %s219 = sadd.s32 %s218, 1
      %s220 = scalar_select %p217, %s218, %s219
      %p223 = pneg %p217
      %p224 = scmp.eq.s32.totalorder %s36, 1
      %p225 = por %p223, %p224
      %p226 = scmp.ne.s32.totalorder %s218, %s221
      %p227 = scmp.eq.s32.totalorder %s36, 0
      %p228 = por %p226, %p227
      %p229 = scmp.ne.s32.totalorder %s218, %s221
      %p230 = scmp.eq.s32.totalorder %s41, 1
      %p231 = por %p229, %p230
      %p232 = scmp.ne.s32.totalorder %s221, %s222
      %p233 = scmp.eq.s32.totalorder %s41, 0
      %p234 = por %p232, %p233
      %p235 = scmp.ne.s32.totalorder %s221, %s222
      %p236 = scmp.eq.s32.totalorder %s42, 1
      %p237 = por %p235, %p236
      %p239 = scmp.ne.s32.totalorder %s222, %s238
      %p240 = scmp.eq.s32.totalorder %s42, 0
      %p241 = por %p239, %p240
      %s242 = ssub.s32 %s36, %s43
      %p243 = scmp.eq.s32.totalorder %s242, 0
      %s245 = sadd.s32 %s244, 1
      %s246 = scalar_select %p243, %s244, %s245
      %p249 = pneg %p243
      %p250 = scmp.eq.s32.totalorder %s36, 1
      %p251 = por %p249, %p250
      %p252 = scmp.ne.s32.totalorder %s244, %s247
      %p253 = scmp.eq.s32.totalorder %s36, 0
      %p254 = por %p252, %p253
      %p255 = scmp.ne.s32.totalorder %s244, %s247
      %p256 = scmp.eq.s32.totalorder %s41, 1
      %p257 = por %p255, %p256
      %p258 = scmp.ne.s32.totalorder %s247, %s248
      %p259 = scmp.eq.s32.totalorder %s41, 0
      %p260 = por %p258, %p259
      %p261 = scmp.ne.s32.totalorder %s247, %s248
      %p262 = scmp.eq.s32.totalorder %s42, 1
      %p263 = por %p261, %p262
      %p265 = scmp.ne.s32.totalorder %s248, %s264
      %p266 = scmp.eq.s32.totalorder %s42, 0
      %p267 = por %p265, %p266
      %s268 = ssub.s32 %s36, %s43
      %p269 = scmp.eq.s32.totalorder %s268, 0
      %s271 = sadd.s32 %s270, 1
      %s272 = scalar_select %p269, %s270, %s271
      %p275 = pneg %p269
      %p276 = scmp.eq.s32.totalorder %s36, 1
      %p277 = por %p275, %p276
      %p278 = scmp.ne.s32.totalorder %s270, %s273
      %p279 = scmp.eq.s32.totalorder %s36, 0
      %p280 = por %p278, %p279
      %p281 = scmp.ne.s32.totalorder %s270, %s273
      %p282 = scmp.eq.s32.totalorder %s41, 1
      %p283 = por %p281, %p282
      %p284 = scmp.ne.s32.totalorder %s273, %s274
      %p285 = scmp.eq.s32.totalorder %s41, 0
      %p286 = por %p284, %p285
      %p287 = scmp.ne.s32.totalorder %s273, %s274
      %p288 = scmp.eq.s32.totalorder %s42, 1
      %p289 = por %p287, %p288
      %p291 = scmp.ne.s32.totalorder %s274, %s290
      %p292 = scmp.eq.s32.totalorder %s42, 0
      %p293 = por %p291, %p292
      %s294 = ssub.s32 %s36, %s43
      %p295 = scmp.eq.s32.totalorder %s294, 0
      %s297 = sadd.s32 %s296, 1
      %s298 = scalar_select %p295, %s296, %s297
      %p301 = pneg %p295
      %p302 = scmp.eq.s32.totalorder %s36, 1
      %p303 = por %p301, %p302
      %p304 = scmp.ne.s32.totalorder %s296, %s299
      %p305 = scmp.eq.s32.totalorder %s36, 0
      %p306 = por %p304, %p305
      %p307 = scmp.ne.s32.totalorder %s296, %s299
      %p308 = scmp.eq.s32.totalorder %s41, 1
      %p309 = por %p307, %p308
      %p310 = scmp.ne.s32.totalorder %s299, %s300
      %p311 = scmp.eq.s32.totalorder %s41, 0
      %p312 = por %p310, %p311
      %p313 = scmp.ne.s32.totalorder %s299, %s300
      %p314 = scmp.eq.s32.totalorder %s42, 1
      %p315 = por %p313, %p314
      %p317 = scmp.ne.s32.totalorder %s300, %s316
      %p318 = scmp.eq.s32.totalorder %s42, 0
      %p319 = por %p317, %p318
      %s320 = ssub.s32 %s36, %s43
      %p321 = scmp.eq.s32.totalorder %s320, 0
      %s323 = sadd.s32 %s322, 1
      %s324 = scalar_select %p321, %s322, %s323
      %p327 = pneg %p321
      %p328 = scmp.eq.s32.totalorder %s36, 1
      %p329 = por %p327, %p328
      %p330 = scmp.ne.s32.totalorder %s322, %s325
      %p331 = scmp.eq.s32.totalorder %s36, 0
      %p332 = por %p330, %p331
      %p333 = scmp.ne.s32.totalorder %s322, %s325
      %p334 = scmp.eq.s32.totalorder %s41, 1
      %p335 = por %p333, %p334
      %p336 = scmp.ne.s32.totalorder %s325, %s326
      %p337 = scmp.eq.s32.totalorder %s41, 0
      %p338 = por %p336, %p337
      %p339 = scmp.ne.s32.totalorder %s325, %s326
      %p340 = scmp.eq.s32.totalorder %s42, 1
      %p341 = por %p339, %p340
      %p343 = scmp.ne.s32.totalorder %s326, %s342
      %p344 = scmp.eq.s32.totalorder %s42, 0
      %p345 = por %p343, %p344
      %s346 = ssub.s32 %s36, %s43
      %p347 = scmp.eq.s32.totalorder %s346, 0
      %s349 = sadd.s32 %s348, 1
      %s350 = scalar_select %p347, %s348, %s349
      %p353 = pneg %p347
      %p354 = scmp.eq.s32.totalorder %s36, 1
      %p355 = por %p353, %p354
      %p356 = scmp.ne.s32.totalorder %s348, %s351
      %p357 = scmp.eq.s32.totalorder %s36, 0
      %p358 = por %p356, %p357
      %p359 = scmp.ne.s32.totalorder %s348, %s351
      %p360 = scmp.eq.s32.totalorder %s41, 1
      %p361 = por %p359, %p360
      %p362 = scmp.ne.s32.totalorder %s351, %s352
      %p363 = scmp.eq.s32.totalorder %s41, 0
      %p364 = por %p362, %p363
      %p365 = scmp.ne.s32.totalorder %s351, %s352
      %p366 = scmp.eq.s32.totalorder %s42, 1
      %p367 = por %p365, %p366
      %p369 = scmp.ne.s32.totalorder %s352, %s368
      %p370 = scmp.eq.s32.totalorder %s42, 0
      %p371 = por %p369, %p370
      %s372 = ssub.s32 %s36, %s43
      %p373 = scmp.eq.s32.totalorder %s372, 0
      %s375 = sadd.s32 %s374, 1
      %s376 = scalar_select %p373, %s374, %s375
      %p379 = pneg %p373
      %p380 = scmp.eq.s32.totalorder %s36, 1
      %p381 = por %p379, %p380
      %p382 = scmp.ne.s32.totalorder %s374, %s377
      %p383 = scmp.eq.s32.totalorder %s36, 0
      %p384 = por %p382, %p383
      %p385 = scmp.ne.s32.totalorder %s374, %s377
      %p386 = scmp.eq.s32.totalorder %s41, 1
      %p387 = por %p385, %p386
      %p388 = scmp.ne.s32.totalorder %s377, %s378
      %p389 = scmp.eq.s32.totalorder %s41, 0
      %p390 = por %p388, %p389
      %p391 = scmp.ne.s32.totalorder %s377, %s378
      %p392 = scmp.eq.s32.totalorder %s42, 1
      %p393 = por %p391, %p392
      %p395 = scmp.ne.s32.totalorder %s378, %s394
      %p396 = scmp.eq.s32.totalorder %s42, 0
      %p397 = por %p395, %p396
      %s399 = sadd.s32 %s398, 1
      %p402 = scmp.eq.s32.totalorder %s36, 1
      %p403 = scmp.ne.s32.totalorder %s398, %s400
      %p404 = scmp.eq.s32.totalorder %s36, 0
      %p405 = por %p403, %p404
      %p406 = scmp.ne.s32.totalorder %s398, %s400
      %p407 = scmp.eq.s32.totalorder %s41, 1
      %p408 = por %p406, %p407
      %p409 = scmp.ne.s32.totalorder %s400, %s401
      %p410 = scmp.eq.s32.totalorder %s41, 0
      %p411 = por %p409, %p410
      %p412 = scmp.ne.s32.totalorder %s400, %s401
      %p413 = scmp.eq.s32.totalorder %s42, 1
      %p414 = por %p412, %p413
      %p416 = scmp.ne.s32.totalorder %s401, %s415
      %p417 = scmp.eq.s32.totalorder %s42, 0
      %p418 = por %p416, %p417
      %p419 = scmp.le.s32.totalorder 1, %s36
      %p420 = scmp.lt.s32.totalorder %s36, 3
      %p421 = pnand %p419, %p420
      %p422 = pneg %p421
      // Predicated region
      $region9: #{advxl_vision_tower_forward.3} parent=5 // pred_check
        _
      $region10: #{advxl_vision_tower_forward.3} parent=5 // pred_check_branch
        %424 = sbr.rel (%p421) target = $region12
      $region11: #{advxl_vision_tower_forward.3} parent=5 // pred_region
        %s425 = ssub.s32 %s36, 1
        // Predicated region
        $region13: #{advxl_vision_tower_forward.3} parent=11 // pred_check
          %p426 = pneg %p57
        $region14: #{advxl_vision_tower_forward.3} parent=11 // pred_check_branch
          %428 = sbr.rel (%p426) target = $region16
        $region15: #{advxl_vision_tower_forward.3} parent=11 // pred_region
          _
        $region16: #{advxl_vision_tower_forward.3} parent=11 // pred_fallthru
          _
        // Predicated region
        $region17: #{advxl_vision_tower_forward.3} parent=11 // pred_check
          %p429 = pneg %p78
        $region18: #{advxl_vision_tower_forward.3} parent=11 // pred_check_branch
          %431 = sbr.rel (%p429) target = $region20
        $region19: #{advxl_vision_tower_forward.3} parent=11 // pred_region
          _
        $region20: #{advxl_vision_tower_forward.3} parent=11 // pred_fallthru
          _
      $region12: #{advxl_vision_tower_forward.3} parent=5 // pred_fallthru
        _
      %p432 = scmp.lt.s32.totalorder %s36, 2
      // Predicated region
      $region21: #{advxl_vision_tower_forward.3} parent=5 // pred_check
        %p433 = pneg %p432
      $region22: #{advxl_vision_tower_forward.3} parent=5 // pred_check_branch
        %435 = sbr.rel (%p433) target = $region24
      $region23: #{advxl_vision_tower_forward.3} parent=5 // pred_region
        // Predicated region
        $region25: #{advxl_vision_tower_forward.3} parent=23 // pred_check
          %p436 = pneg %p98
        $region26: #{advxl_vision_tower_forward.3} parent=23 // pred_check_branch
          %438 = sbr.rel (%p436) target = $region28
        $region27: #{advxl_vision_tower_forward.3} parent=23 // pred_region
          %p439 = scmp.lt.s32.totalorder %s36, 1
          %s440 = scalar_select %p439, %s36, 1
          %s441 = scalar_lea.vmem %s2, %s440
        $region28: #{advxl_vision_tower_forward.3} parent=23 // pred_fallthru
          _
        // Predicated region
        $region29: #{advxl_vision_tower_forward.3} parent=23 // pred_check
          %p442 = pneg %p124
        $region30: #{advxl_vision_tower_forward.3} parent=23 // pred_check_branch
          %444 = sbr.rel (%p442) target = $region32
        $region31: #{advxl_vision_tower_forward.3} parent=23 // pred_region
          %s445 = sand.u32 %s114, 1
          %s446 = scalar_lea.sflag [#allocation4], %s445
          %s447 = sand.u32 %s114, 1
          %s448 = scalar_lea.vmem [#allocation3], %s447
          %s450 = ssub.s32 16, 16
          %451 = vsyncadd %s446, %s450
          %s452 = smul.addr %s36, 16
          %s453 = scalar_lea.hbm %s3, %s452
          %s455 = sshll.u32 %s448, 4
          %s456 = int_to_ptr.vmem [resolvable:$true] %s455
          %458 = dma.hbm_to_vmem [thread:$0]  %s453, 16, %s456, %s446
        $region32: #{advxl_vision_tower_forward.3} parent=23 // pred_fallthru
          _
        // Predicated region
        $region33: #{advxl_vision_tower_forward.3} parent=23 // pred_check
          %p459 = pneg %p150
        $region34: #{advxl_vision_tower_forward.3} parent=23 // pred_check_branch
          %461 = sbr.rel (%p459) target = $region36
        $region35: #{advxl_vision_tower_forward.3} parent=23 // pred_region
          %s462 = sand.u32 %s36, 1
          %s463 = scalar_lea.sflag [#allocation7], %s462
          %s464 = sand.u32 %s140, 1
          %s465 = smul.addr %s464, 192
          %s466 = scalar_lea.vmem [#allocation6], %s465
          %s468 = ssub.s32 3072, 3072
          %469 = vsyncadd %s463, %s468
          %s470 = smul.addr %s36, 48
          %s471 = smul.addr %s470, 64
          %s472 = scalar_lea.hbm %s4, %s471
          %s473 = sshll.u32 %s466, 4
          %s474 = int_to_ptr.vmem [resolvable:$true] %s473
          %479 = dma.hbm_to_vmem [thread:$0]  %s472, 3072, %s474, %s463, 192, 192, 12
        $region36: #{advxl_vision_tower_forward.3} parent=23 // pred_fallthru
          _
        // Predicated region
        $region37: #{advxl_vision_tower_forward.3} parent=23 // pred_check
          %p480 = pneg %p176
        $region38: #{advxl_vision_tower_forward.3} parent=23 // pred_check_branch
          %482 = sbr.rel (%p480) target = $region40
        $region39: #{advxl_vision_tower_forward.3} parent=23 // pred_region
          %s483 = sand.u32 %s36, 1
          %s484 = scalar_lea.sflag [#allocation7], %s483
          %s485 = sand.u32 %s166, 1
          %s486 = smul.addr %s485, 3
          %s487 = scalar_lea.vmem [#allocation8], %s486
          %s489 = ssub.s32 48, 48
          %490 = vsyncadd %s484, %s489
          %s491 = smul.addr %s36, 3
          %s492 = smul.addr %s491, 16
          %s493 = scalar_lea.hbm %s5, %s492
          %s495 = sshll.u32 %s487, 4
          %s496 = int_to_ptr.vmem [resolvable:$true] %s495
          %498 = dma.hbm_to_vmem [thread:$0]  %s493, 48, %s496, %s484
        $region40: #{advxl_vision_tower_forward.3} parent=23 // pred_fallthru
          _
        // Predicated region
        $region41: #{advxl_vision_tower_forward.3} parent=23 // pred_check
          %p499 = pneg %p202
        $region42: #{advxl_vision_tower_forward.3} parent=23 // pred_check_branch
          %501 = sbr.rel (%p499) target = $region44
        $region43: #{advxl_vision_tower_forward.3} parent=23 // pred_region
          %p502 = scmp.lt.s32.totalorder %s36, 1
          %s503 = scalar_select %p502, %s36, 1
          %s504 = smul.addr %s503, 16
          %s505 = smul.addr %s504, 4
          %s506 = scalar_lea.vmem %s6, %s505
        $region44: #{advxl_vision_tower_forward.3} parent=23 // pred_fallthru
          _
        // Predicated region
        $region45: #{advxl_vision_tower_forward.3} parent=23 // pred_check
          %p507 = pneg %p228
        $region46: #{advxl_vision_tower_forward.3} parent=23 // pred_check_branch
          %509 = sbr.rel (%p507) target = $region48
        $region47: #{advxl_vision_tower_forward.3} parent=23 // pred_region
          %s510 = sand.u32 %s36, 1
          %s511 = scalar_lea.sflag [#allocation10], %s510
          %s512 = sand.u32 %s218, 1
          %s513 = scalar_lea.vmem [#allocation9], %s512
          %s515 = ssub.s32 16, 16
          %516 = vsyncadd %s511, %s515
          %s517 = smul.addr %s36, 16
          %s518 = scalar_lea.hbm %s7, %s517
          %s520 = sshll.u32 %s513, 4
          %s521 = int_to_ptr.vmem [resolvable:$true] %s520
          %523 = dma.hbm_to_vmem [thread:$0]  %s518, 16, %s521, %s511
        $region48: #{advxl_vision_tower_forward.3} parent=23 // pred_fallthru
          _
        // Predicated region
        $region49: #{advxl_vision_tower_forward.3} parent=23 // pred_check
          %p524 = pneg %p254
        $region50: #{advxl_vision_tower_forward.3} parent=23 // pred_check_branch
          %526 = sbr.rel (%p524) target = $region52
        $region51: #{advxl_vision_tower_forward.3} parent=23 // pred_region
          %s527 = sand.u32 %s36, 1
          %s528 = scalar_lea.sflag [#allocation10], %s527
          %s529 = sand.u32 %s244, 1
          %s530 = scalar_lea.vmem [#allocation11], %s529
          %s532 = ssub.s32 16, 16
          %533 = vsyncadd %s528, %s532
          %s534 = smul.addr %s36, 16
          %s535 = scalar_lea.hbm %s8, %s534
          %s537 = sshll.u32 %s530, 4
          %s538 = int_to_ptr.vmem [resolvable:$true] %s537
          %540 = dma.hbm_to_vmem [thread:$0]  %s535, 16, %s538, %s528
        $region52: #{advxl_vision_tower_forward.3} parent=23 // pred_fallthru
          _
        // Predicated region
        $region53: #{advxl_vision_tower_forward.3} parent=23 // pred_check
          %p541 = pneg %p280
        $region54: #{advxl_vision_tower_forward.3} parent=23 // pred_check_branch
          %543 = sbr.rel (%p541) target = $region56
        $region55: #{advxl_vision_tower_forward.3} parent=23 // pred_region
          %s544 = sand.u32 %s36, 1
          %s545 = scalar_lea.sflag [#allocation13], %s544
          %s546 = sand.u32 %s270, 1
          %s547 = scalar_lea.vmem [#allocation12], %s546
          %s549 = ssub.s32 16, 16
          %550 = vsyncadd %s545, %s549
          %s551 = smul.addr %s36, 16
          %s552 = scalar_lea.hbm %s9, %s551
          %s554 = sshll.u32 %s547, 4
          %s555 = int_to_ptr.vmem [resolvable:$true] %s554
          %557 = dma.hbm_to_vmem [thread:$0]  %s552, 16, %s555, %s545
        $region56: #{advxl_vision_tower_forward.3} parent=23 // pred_fallthru
          _
        // Predicated region
        $region57: #{advxl_vision_tower_forward.3} parent=23 // pred_check
          %p558 = pneg %p306
        $region58: #{advxl_vision_tower_forward.3} parent=23 // pred_check_branch
          %560 = sbr.rel (%p558) target = $region60
        $region59: #{advxl_vision_tower_forward.3} parent=23 // pred_region
          %p561 = scmp.lt.s32.totalorder %s36, 1
          %s562 = scalar_select %p561, %s36, 1
          %s563 = smul.addr %s562, 64
          %s564 = smul.addr %s563, 4
          %s565 = scalar_lea.vmem %s10, %s564
        $region60: #{advxl_vision_tower_forward.3} parent=23 // pred_fallthru
          _
        // Predicated region
        $region61: #{advxl_vision_tower_forward.3} parent=23 // pred_check
          %p566 = pneg %p332
        $region62: #{advxl_vision_tower_forward.3} parent=23 // pred_check_branch
          %568 = sbr.rel (%p566) target = $region64
        $region63: #{advxl_vision_tower_forward.3} parent=23 // pred_region
          %p569 = scmp.lt.s32.totalorder %s36, 1
          %s570 = scalar_select %p569, %s36, 1
          %s571 = smul.addr %s570, 4
          %s572 = scalar_lea.vmem %s11, %s571
        $region64: #{advxl_vision_tower_forward.3} parent=23 // pred_fallthru
          _
        // Predicated region
        $region65: #{advxl_vision_tower_forward.3} parent=23 // pred_check
          %p573 = pneg %p358
        $region66: #{advxl_vision_tower_forward.3} parent=23 // pred_check_branch
          %575 = sbr.rel (%p573) target = $region68
        $region67: #{advxl_vision_tower_forward.3} parent=23 // pred_region
          %s576 = sand.u32 %s36, 1
          %s577 = scalar_lea.sflag [#allocation13], %s576
          %s578 = sand.u32 %s348, 1
          %s579 = smul.addr %s578, 256
          %s580 = scalar_lea.vmem [#allocation14], %s579
          %s582 = ssub.s32 4096, 4096
          %583 = vsyncadd %s577, %s582
          %s584 = smul.addr %s36, 64
          %s585 = smul.addr %s584, 64
          %s586 = scalar_lea.hbm %s12, %s585
          %s587 = sshll.u32 %s580, 4
          %s588 = int_to_ptr.vmem [resolvable:$true] %s587
          %593 = dma.hbm_to_vmem [thread:$0]  %s586, 4096, %s588, %s577, 64, 64, 4
        $region68: #{advxl_vision_tower_forward.3} parent=23 // pred_fallthru
          _
        // Predicated region
        $region69: #{advxl_vision_tower_forward.3} parent=23 // pred_check
          %p594 = pneg %p384
        $region70: #{advxl_vision_tower_forward.3} parent=23 // pred_check_branch
          %596 = sbr.rel (%p594) target = $region72
        $region71: #{advxl_vision_tower_forward.3} parent=23 // pred_region
          %s597 = sand.u32 %s374, 1
          %s598 = scalar_lea.sflag [#allocation16], %s597
          %s599 = sand.u32 %s374, 1
          %s600 = scalar_lea.vmem [#allocation15], %s599
          %s602 = ssub.s32 16, 16
          %603 = vsyncadd %s598, %s602
          %s604 = smul.addr %s36, 16
          %s605 = scalar_lea.hbm %s13, %s604
          %s607 = sshll.u32 %s600, 4
          %s608 = int_to_ptr.vmem [resolvable:$true] %s607
          %610 = dma.hbm_to_vmem [thread:$0]  %s605, 16, %s608, %s598
        $region72: #{advxl_vision_tower_forward.3} parent=23 // pred_fallthru
          _
      $region24: #{advxl_vision_tower_forward.3} parent=5 // pred_fallthru
        _
      %p611 = scmp.le.s32.totalorder 1, %s36
      %p612 = scmp.lt.s32.totalorder %s36, 3
      %p613 = pnand %p611, %p612
      %p614 = pneg %p613
      // Predicated region
      $region73: #{advxl_vision_tower_forward.3} parent=5 // pred_check
        _
      $region74: #{advxl_vision_tower_forward.3} parent=5 // pred_check_branch
        %616 = sbr.rel (%p613) target = $region76
      $region75: #{advxl_vision_tower_forward.3} parent=5 // pred_region
        %s617 = ssub.s32 %s36, 1
        %s618 = sand.u32 %s117, 1
        %s619 = scalar_lea.sflag [#allocation4], %s618
        %s620 = sand.u32 %s117, 1
        %s621 = scalar_lea.vmem [#allocation3], %s620
        // Predicated region
        $region77: #{advxl_vision_tower_forward.3} parent=75 // pred_check
          %p622 = pneg %p130
        $region78: #{advxl_vision_tower_forward.3} parent=75 // pred_check_branch
          %624 = sbr.rel (%p622) target = $region80
        $region79: #{advxl_vision_tower_forward.3} parent=75 // pred_region
          %625 = dma.done %s619, 16
        $region80: #{advxl_vision_tower_forward.3} parent=75 // pred_fallthru
          _
        %s626 = sand.u32 %s41, 1
        %s627 = scalar_lea.sflag [#allocation7], %s626
        %s628 = sand.u32 %s143, 1
        %s629 = smul.addr %s628, 192
        %s630 = scalar_lea.vmem [#allocation6], %s629
        // Predicated region
        $region81: #{advxl_vision_tower_forward.3} parent=75 // pred_check
          %p631 = pneg %p156
        $region82: #{advxl_vision_tower_forward.3} parent=75 // pred_check_branch
          %633 = sbr.rel (%p631) target = $region84
        $region83: #{advxl_vision_tower_forward.3} parent=75 // pred_region
          %634 = dma.done %s627, 3072
        $region84: #{advxl_vision_tower_forward.3} parent=75 // pred_fallthru
          _
        %s635 = sand.u32 %s41, 1
        %s636 = scalar_lea.sflag [#allocation7], %s635
        %s637 = sand.u32 %s169, 1
        %s638 = smul.addr %s637, 3
        %s639 = scalar_lea.vmem [#allocation8], %s638
        // Predicated region
        $region85: #{advxl_vision_tower_forward.3} parent=75 // pred_check
          %p640 = pneg %p182
        $region86: #{advxl_vision_tower_forward.3} parent=75 // pred_check_branch
          %642 = sbr.rel (%p640) target = $region88
        $region87: #{advxl_vision_tower_forward.3} parent=75 // pred_region
          %643 = dma.done %s636, 48
        $region88: #{advxl_vision_tower_forward.3} parent=75 // pred_fallthru
          _
        %s644 = sand.u32 %s41, 1
        %s645 = scalar_lea.sflag [#allocation10], %s644
        %s646 = sand.u32 %s221, 1
        %s647 = scalar_lea.vmem [#allocation9], %s646
        // Predicated region
        $region89: #{advxl_vision_tower_forward.3} parent=75 // pred_check
          %p648 = pneg %p234
        $region90: #{advxl_vision_tower_forward.3} parent=75 // pred_check_branch
          %650 = sbr.rel (%p648) target = $region92
        $region91: #{advxl_vision_tower_forward.3} parent=75 // pred_region
          %651 = dma.done %s645, 16
        $region92: #{advxl_vision_tower_forward.3} parent=75 // pred_fallthru
          _
        %s652 = sand.u32 %s41, 1
        %s653 = scalar_lea.sflag [#allocation10], %s652
        %s654 = sand.u32 %s247, 1
        %s655 = scalar_lea.vmem [#allocation11], %s654
        // Predicated region
        $region93: #{advxl_vision_tower_forward.3} parent=75 // pred_check
          %p656 = pneg %p260
        $region94: #{advxl_vision_tower_forward.3} parent=75 // pred_check_branch
          %658 = sbr.rel (%p656) target = $region96
        $region95: #{advxl_vision_tower_forward.3} parent=75 // pred_region
          %659 = dma.done %s653, 16
        $region96: #{advxl_vision_tower_forward.3} parent=75 // pred_fallthru
          _
        %s660 = sand.u32 %s41, 1
        %s661 = scalar_lea.sflag [#allocation13], %s660
        %s662 = sand.u32 %s273, 1
        %s663 = scalar_lea.vmem [#allocation12], %s662
        // Predicated region
        $region97: #{advxl_vision_tower_forward.3} parent=75 // pred_check
          %p664 = pneg %p286
        $region98: #{advxl_vision_tower_forward.3} parent=75 // pred_check_branch
          %666 = sbr.rel (%p664) target = $region100
        $region99: #{advxl_vision_tower_forward.3} parent=75 // pred_region
          %667 = dma.done %s661, 16
        $region100: #{advxl_vision_tower_forward.3} parent=75 // pred_fallthru
          _
        %s668 = sand.u32 %s41, 1
        %s669 = scalar_lea.sflag [#allocation13], %s668
        %s670 = sand.u32 %s351, 1
        %s671 = smul.addr %s670, 256
        %s672 = scalar_lea.vmem [#allocation14], %s671
        // Predicated region
        $region101: #{advxl_vision_tower_forward.3} parent=75 // pred_check
          %p673 = pneg %p364
        $region102: #{advxl_vision_tower_forward.3} parent=75 // pred_check_branch
          %675 = sbr.rel (%p673) target = $region104
        $region103: #{advxl_vision_tower_forward.3} parent=75 // pred_region
          %676 = dma.done %s669, 4096
        $region104: #{advxl_vision_tower_forward.3} parent=75 // pred_fallthru
          _
        %s677 = sand.u32 %s377, 1
        %s678 = scalar_lea.sflag [#allocation16], %s677
        %s679 = sand.u32 %s377, 1
        %s680 = scalar_lea.vmem [#allocation15], %s679
        // Predicated region
        $region105: #{advxl_vision_tower_forward.3} parent=75 // pred_check
          %p681 = pneg %p390
        $region106: #{advxl_vision_tower_forward.3} parent=75 // pred_check_branch
          %683 = sbr.rel (%p681) target = $region108
        $region107: #{advxl_vision_tower_forward.3} parent=75 // pred_region
          %684 = dma.done %s678, 16
        $region108: #{advxl_vision_tower_forward.3} parent=75 // pred_fallthru
          _
        %p685 = pneg %p57
        %p686 = pneg %p54
        %p687 = pneg %p78
        %p688 = pneg %p75
        %p689 = scmp.lt.s32.totalorder %s41, 1
        %s690 = scalar_select %p689, %s41, 1
        %s691 = scalar_lea.vmem %s2, %s690
        %p692 = pneg %p104
        %p693 = pneg %p101
        %s694 = sand.u32 %s117, 1
        %s695 = scalar_lea.sflag [#allocation4], %s694
        %s696 = sand.u32 %s117, 1
        %s697 = scalar_lea.vmem [#allocation3], %s696
        %p698 = pneg %p130
        %p699 = pneg %p127
        %s700 = sand.u32 %s41, 1
        %s701 = scalar_lea.sflag [#allocation7], %s700
        %s702 = sand.u32 %s143, 1
        %s703 = smul.addr %s702, 192
        %s704 = scalar_lea.vmem [#allocation6], %s703
        %p705 = pneg %p156
        %p706 = pneg %p153
        %s707 = sand.u32 %s41, 1
        %s708 = scalar_lea.sflag [#allocation7], %s707
        %s709 = sand.u32 %s169, 1
        %s710 = smul.addr %s709, 3
        %s711 = scalar_lea.vmem [#allocation8], %s710
        %p712 = pneg %p182
        %p713 = pneg %p179
        %p714 = scmp.lt.s32.totalorder %s41, 1
        %s715 = scalar_select %p714, %s41, 1
        %s716 = smul.addr %s715, 16
        %s717 = smul.addr %s716, 4
        %s718 = scalar_lea.vmem %s6, %s717
        %p719 = pneg %p208
        %p720 = pneg %p205
        %s721 = sand.u32 %s41, 1
        %s722 = scalar_lea.sflag [#allocation10], %s721
        %s723 = sand.u32 %s221, 1
        %s724 = scalar_lea.vmem [#allocation9], %s723
        %p725 = pneg %p234
        %p726 = pneg %p231
        %s727 = sand.u32 %s41, 1
        %s728 = scalar_lea.sflag [#allocation10], %s727
        %s729 = sand.u32 %s247, 1
        %s730 = scalar_lea.vmem [#allocation11], %s729
        %p731 = pneg %p260
        %p732 = pneg %p257
        %s733 = sand.u32 %s41, 1
        %s734 = scalar_lea.sflag [#allocation13], %s733
        %s735 = sand.u32 %s273, 1
        %s736 = scalar_lea.vmem [#allocation12], %s735
        %p737 = pneg %p286
        %p738 = pneg %p283
        %p739 = scmp.lt.s32.totalorder %s41, 1
        %s740 = scalar_select %p739, %s41, 1
        %s741 = smul.addr %s740, 64
        %s742 = smul.addr %s741, 4
        %s743 = scalar_lea.vmem %s10, %s742
        %p744 = pneg %p312
        %p745 = pneg %p309
        %p746 = scmp.lt.s32.totalorder %s41, 1
        %s747 = scalar_select %p746, %s41, 1
        %s748 = smul.addr %s747, 4
        %s749 = scalar_lea.vmem %s11, %s748
        %p750 = pneg %p338
        %p751 = pneg %p335
        %s752 = sand.u32 %s41, 1
        %s753 = scalar_lea.sflag [#allocation13], %s752
        %s754 = sand.u32 %s351, 1
        %s755 = smul.addr %s754, 256
        %s756 = scalar_lea.vmem [#allocation14], %s755
        %p757 = pneg %p364
        %p758 = pneg %p361
        %s759 = sand.u32 %s377, 1
        %s760 = scalar_lea.sflag [#allocation16], %s759
        %s761 = sand.u32 %s377, 1
        %s762 = scalar_lea.vmem [#allocation15], %s761
        %p763 = pneg %p390
        %p764 = pneg %p387
        %p765 = pneg %p411
        %p766 = pneg %p408
        %p767 = scmp.lt.s32.totalorder %s41, 1
        %s768 = scalar_select %p767, %s41, 1
        %s769 = scalar_lea.vmem %s2, %s768
        %p770 = scmp.lt.s32.totalorder %s41, 1
        %s771 = scalar_select %p770, %s41, 1
        %s772 = smul.addr %s771, 16
        %s773 = smul.addr %s772, 4
        %s774 = scalar_lea.vmem %s6, %s773
        %p775 = scmp.lt.s32.totalorder %s41, 1
        %s776 = scalar_select %p775, %s41, 1
        %s777 = smul.addr %s776, 64
        %s778 = smul.addr %s777, 4
        %s779 = scalar_lea.vmem %s10, %s778
        %p780 = scmp.lt.s32.totalorder %s41, 1
        %s781 = scalar_select %p780, %s41, 1
        %s782 = smul.addr %s781, 4
        %s783 = scalar_lea.vmem %s11, %s782
        %p785 = scmp.eq.s32.totalorder %s41, 0
        // Predicated region
        $region109: #{advxl_vision_tower_forward.3} parent=75 // pred_check
          %p786 = pneg %p785
        $region110: #{advxl_vision_tower_forward.3} parent=75 // pred_check_branch
          %788 = sbr.rel (%p786) target = $region112
        $region111: #{advxl_vision_tower_forward.3} parent=75 // pred_region
          %v789 = vld [vmem:[%s0] sm:$0xff]
          %v790 = vld [vmem:[%s0 + $0x8] sm:$0xff]
          %791 = vst [vmem:[#allocation2] sm:$0xff] %v789
          %792 = vst [vmem:[#allocation2 + $0x8] sm:$0xff] %v790
        $region112: #{advxl_vision_tower_forward.3} parent=75 // pred_fallthru
          _
        %v793 = vld [vmem:[#allocation2] sm:$0xff]
        %v794 = vld [vmem:[#allocation2 + $0x8] sm:$0xff]
        %v795 = vld [vmem:[%s769] sm:$0x1]
        %v796 = vld [vmem:[%s621] sm:$0x1]
        %797 = vadd.xlane.f32.xlu0 %v793
        %v798 = vpop.xlane.xlu0 %797
        %799 = vadd.xlane.f32.xlu0 %v794
        %v800 = vpop.xlane.xlu0 %799
        %v801 = vrcp.pop 128.0
        %v802 = vmul.f32 %v798, %v801
        %v803 = vmul.f32 %v800, %v801
        %v804 = vsub.f32 %v793, %v802
        %v805 = vsub.f32 %v794, %v803
        %v806 = vmul.f32 %v804, %v804
        %v807 = vmul.f32 %v805, %v805
        %808 = vadd.xlane.f32.xlu0 %v806
        %v809 = vpop.xlane.xlu0 %808
        %810 = vadd.xlane.f32.xlu0 %v807
        %v811 = vpop.xlane.xlu0 %810
        %v812 = vmul.f32 %v809, %v801
        %v813 = vmul.f32 %v811, %v801
        %v814 = vadd.f32 %v812, 1e-06
        %v815 = vadd.f32 %v813, 1e-06
        %v816 = vrsqrt.pop %v814
        %v817 = vrsqrt.pop %v815
        %v818 = vmul.f32 %v804, %v816
        %v819 = vmul.f32 %v805, %v817
        %v821 = vlaneseq
        %v822 = vshrl.u32 %v821, 7
        %v823 = vsub.s32 0, %v822
        %v824 = vrot.slane %v795, %v823
        %v826 = vmul.f32 %v818, %v824
        %v827 = vmul.f32 %v819, %v824
        %v829 = vlaneseq
        %v830 = vshrl.u32 %v829, 7
        %v831 = vsub.s32 0, %v830
        %v832 = vrot.slane %v796, %v831
        %v834 = vadd.f32 %v826, %v832
        %v835 = vadd.f32 %v827, %v832
        %v836 = vpack.c.bf16 %v835, %v834
        %v837 = vld [vmem:[%s630] sm:$0xff]
        %v838 = vld [vmem:[%s630 + $0x8] sm:$0xf]
        %v839 = vld [vmem:[%s630 + $0xc] sm:$0xff]
        %v840 = vld [vmem:[%s630 + $0x14] sm:$0xf]
        %v841 = vld [vmem:[%s630 + $0x18] sm:$0xff]
        %v842 = vld [vmem:[%s630 + $0x20] sm:$0xf]
        %v843 = vld [vmem:[%s630 + $0x24] sm:$0xff]
        %v844 = vld [vmem:[%s630 + $0x2c] sm:$0xf]
        %v845 = vld [vmem:[%s630 + $0x30] sm:$0xff]
        %v846 = vld [vmem:[%s630 + $0x38] sm:$0xf]
        %v847 = vld [vmem:[%s630 + $0x3c] sm:$0xff]
        %v848 = vld [vmem:[%s630 + $0x44] sm:$0xf]
        %v849 = vld [vmem:[%s630 + $0x48] sm:$0xff]
        %v850 = vld [vmem:[%s630 + $0x50] sm:$0xf]
        %v851 = vld [vmem:[%s630 + $0x54] sm:$0xff]
        %v852 = vld [vmem:[%s630 + $0x5c] sm:$0xf]
        %v853 = vld [vmem:[%s630 + $0x60] sm:$0xff]
        %v854 = vld [vmem:[%s630 + $0x68] sm:$0xf]
        %v855 = vld [vmem:[%s630 + $0x6c] sm:$0xff]
        %v856 = vld [vmem:[%s630 + $0x74] sm:$0xf]
        %v857 = vld [vmem:[%s630 + $0x78] sm:$0xff]
        %v858 = vld [vmem:[%s630 + $0x80] sm:$0xf]
        %v859 = vld [vmem:[%s630 + $0x84] sm:$0xff]
        %v860 = vld [vmem:[%s630 + $0x8c] sm:$0xf]
        %v861 = vld [vmem:[%s630 + $0x90] sm:$0xff]
        %v862 = vld [vmem:[%s630 + $0x98] sm:$0xf]
        %v863 = vld [vmem:[%s630 + $0x9c] sm:$0xff]
        %v864 = vld [vmem:[%s630 + $0xa4] sm:$0xf]
        %v865 = vld [vmem:[%s630 + $0xa8] sm:$0xff]
        %v866 = vld [vmem:[%s630 + $0xb0] sm:$0xf]
        %v867 = vld [vmem:[%s630 + $0xb4] sm:$0xff]
        %v868 = vld [vmem:[%s630 + $0xbc] sm:$0xf]
        %v869 = vld [vmem:[%s639] sm:$0x7]
        %v871 = vlaneseq
        %v872 = vshrl.u32 %v871, 7
        %v873 = vsub.s32 0, %v872
        %v874 = vrot.slane %v869, %v873
        %v875 = vlaneseq
        %v876 = vshrl.u32 %v875, 7
        %v877 = vsub.s32 1, %v876
        %v878 = vrot.slane %v869, %v877
        %v879 = vlaneseq
        %v880 = vshrl.u32 %v879, 7
        %v881 = vsub.s32 2, %v880
        %v882 = vrot.slane %v869, %v881
        %v918 = vunpack.c.l.b16 %v837
        %v919 = vunpack.c.h.b16 %v837
        %v920 = vunpack.c.l.b16 %v838
        %v921 = vunpack.c.l.b16 %v839
        %v922 = vunpack.c.h.b16 %v839
        %v923 = vunpack.c.l.b16 %v840
        %v924 = vunpack.c.l.b16 %v841
        %v925 = vunpack.c.h.b16 %v841
        %v926 = vunpack.c.l.b16 %v842
        %v927 = vunpack.c.l.b16 %v843
        %v928 = vunpack.c.h.b16 %v843
        %v929 = vunpack.c.l.b16 %v844
        %v930 = vunpack.c.l.b16 %v845
        %v931 = vunpack.c.h.b16 %v845
        %v932 = vunpack.c.l.b16 %v846
        %v933 = vunpack.c.l.b16 %v847
        %v934 = vunpack.c.h.b16 %v847
        %v935 = vunpack.c.l.b16 %v848
        %v936 = vunpack.c.l.b16 %v849
        %v937 = vunpack.c.h.b16 %v849
        %v938 = vunpack.c.l.b16 %v850
        %v939 = vunpack.c.l.b16 %v851
        %v940 = vunpack.c.h.b16 %v851
        %v941 = vunpack.c.l.b16 %v852
        %v942 = vunpack.c.l.b16 %v853
        %v943 = vunpack.c.h.b16 %v853
        %v944 = vunpack.c.l.b16 %v854
        %v945 = vunpack.c.l.b16 %v855
        %v946 = vunpack.c.h.b16 %v855
        %v947 = vunpack.c.l.b16 %v856
        %v948 = vunpack.c.l.b16 %v857
        %v949 = vunpack.c.h.b16 %v857
        %v950 = vunpack.c.l.b16 %v858
        %v951 = vunpack.c.l.b16 %v859
        %v952 = vunpack.c.h.b16 %v859
        %v953 = vunpack.c.l.b16 %v860
        %v954 = vunpack.c.l.b16 %v861
        %v955 = vunpack.c.h.b16 %v861
        %v956 = vunpack.c.l.b16 %v862
        %v957 = vunpack.c.l.b16 %v863
        %v958 = vunpack.c.h.b16 %v863
        %v959 = vunpack.c.l.b16 %v864
        %v960 = vunpack.c.l.b16 %v865
        %v961 = vunpack.c.h.b16 %v865
        %v962 = vunpack.c.l.b16 %v866
        %v963 = vunpack.c.l.b16 %v867
        %v964 = vunpack.c.h.b16 %v867
        %v965 = vunpack.c.l.b16 %v868
        %v966 = vpack.c.b16 %v921, %v918
        %v967 = vpack.c.b16 %v922, %v919
        %v968 = vpack.c.b16 %v923, %v920
        %v969 = vpack.c.b16 %v927, %v924
        %v970 = vpack.c.b16 %v928, %v925
        %v971 = vpack.c.b16 %v929, %v926
        %v972 = vpack.c.b16 %v933, %v930
        %v973 = vpack.c.b16 %v934, %v931
        %v974 = vpack.c.b16 %v935, %v932
        %v975 = vpack.c.b16 %v939, %v936
        %v976 = vpack.c.b16 %v940, %v937
        %v977 = vpack.c.b16 %v941, %v938
        %v978 = vpack.c.b16 %v945, %v942
        %v979 = vpack.c.b16 %v946, %v943
        %v980 = vpack.c.b16 %v947, %v944
        %v981 = vpack.c.b16 %v951, %v948
        %v982 = vpack.c.b16 %v952, %v949
        %v983 = vpack.c.b16 %v953, %v950
        %v984 = vpack.c.b16 %v957, %v954
        %v985 = vpack.c.b16 %v958, %v955
        %v986 = vpack.c.b16 %v959, %v956
        %v987 = vpack.c.b16 %v963, %v960
        %v988 = vpack.c.b16 %v964, %v961
        %v989 = vpack.c.b16 %v965, %v962
        %1014 = vmatprep.subr.bf16.mxu0 %v967
        %1015 = vmatpush1.bf16.msra.mxu0 %v966
        %1016 = vmatprep.subr.bf16.mxu0 %v970
        %1017 = vmatpush1.bf16.msra.mxu0 %v969
        %1018 = vmatprep.subr.bf16.mxu0 %v973
        %1019 = vmatpush1.bf16.msra.mxu0 %v972
        %1020 = vmatprep.subr.bf16.mxu0 %v976
        %1021 = vmatpush1.bf16.msra.mxu0 %v975
        %1022 = vmatprep.subr.bf16.mxu0 %v979
        %1023 = vmatpush1.bf16.msra.mxu0 %v978
        %1024 = vmatprep.subr.bf16.mxu0 %v982
        %1025 = vmatpush1.bf16.msra.mxu0 %v981
        %1026 = vmatprep.subr.bf16.mxu0 %v985
        %1027 = vmatpush1.bf16.msra.mxu0 %v984
        %1028 = vmatprep.subr.bf16.mxu0 %v988
        %1029 = vmatpush1.bf16.msra.mxu0 %v987
        %1030 = vmatprep.subr.bf16.mxu0 0
        %1031 = vmatpush1.bf16.msra.mxu0 0
        %1032 = vmatprep.subr.bf16.mxu0 0
        %1033 = vmatpush1.bf16.msra.mxu0 0
        %1034 = vmatprep.subr.bf16.mxu0 0
        %1035 = vmatpush1.bf16.msra.mxu0 0
        %1036 = vmatprep.subr.bf16.mxu0 0
        %1037 = vmatpush1.bf16.msra.mxu0 0
        %1038 = vmatprep.subr.bf16.mxu0 0
        %1039 = vmatpush1.bf16.msra.mxu0 0
        %1040 = vmatprep.subr.bf16.mxu0 0
        %1041 = vmatpush1.bf16.msra.mxu0 0
        %1042 = vmatprep.subr.bf16.mxu0 0
        %1043 = vmatpush1.bf16.msra.mxu0 0
        %1044 = vmatprep.subr.bf16.mxu0 0
        %1045 = vmatpush1.bf16.msra.mxu0 0
        %1046 = vmatprep.mubr.bf16.mxu0 0
        %1047 = vmatmul.mubr.bf16.gmra.mrb[0].mxu0 %v836
        %v1048 = vpop.f32.mrb[0].mxu0
        %v1049 = vadd.f32 %v874, %v1048
        %v1050 = vpop.f32.mrb[0].mxu0
        %v1051 = vadd.f32 %v878, %v1050
        %v1052 = vpop.f32.mrb[0].mxu0
        %v1053 = vadd.f32 %v874, %v1052
        %v1054 = vpop.f32.mrb[0].mxu0
        %v1055 = vadd.f32 %v878, %v1054
        %1056 = vdwg.mxu0
        %1057 = vmatprep.subr.bf16.mxu0 0
        %1058 = vmatpush1.bf16.msra.mxu0 %v968
        %1059 = vmatprep.subr.bf16.mxu0 0
        %1060 = vmatpush1.bf16.msra.mxu0 %v971
        %1061 = vmatprep.subr.bf16.mxu0 0
        %1062 = vmatpush1.bf16.msra.mxu0 %v974
        %1063 = vmatprep.subr.bf16.mxu0 0
        %1064 = vmatpush1.bf16.msra.mxu0 %v977
        %1065 = vmatprep.subr.bf16.mxu0 0
        %1066 = vmatpush1.bf16.msra.mxu0 %v980
        %1067 = vmatprep.subr.bf16.mxu0 0
        %1068 = vmatpush1.bf16.msra.mxu0 %v983
        %1069 = vmatprep.subr.bf16.mxu0 0
        %1070 = vmatpush1.bf16.msra.mxu0 %v986
        %1071 = vmatprep.subr.bf16.mxu0 0
        %1072 = vmatpush1.bf16.msra.mxu0 %v989
        %1073 = vmatprep.subr.bf16.mxu0 0
        %1074 = vmatpush1.bf16.msra.mxu0 0
        %1075 = vmatprep.subr.bf16.mxu0 0
        %1076 = vmatpush1.bf16.msra.mxu0 0
        %1077 = vmatprep.subr.bf16.mxu0 0
        %1078 = vmatpush1.bf16.msra.mxu0 0
        %1079 = vmatprep.subr.bf16.mxu0 0
        %1080 = vmatpush1.bf16.msra.mxu0 0
        %1081 = vmatprep.subr.bf16.mxu0 0
        %1082 = vmatpush1.bf16.msra.mxu0 0
        %1083 = vmatprep.subr.bf16.mxu0 0
        %1084 = vmatpush1.bf16.msra.mxu0 0
        %1085 = vmatprep.subr.bf16.mxu0 0
        %1086 = vmatpush1.bf16.msra.mxu0 0
        %1087 = vmatprep.subr.bf16.mxu0 0
        %1088 = vmatpush1.bf16.msra.mxu0 0
        %1089 = vmatprep.mubr.bf16.mxu0 0
        %1090 = vmatmul.mubr.bf16.gmra.mrb[0].mxu0 %v836
        %v1091 = vpop.f32.mrb[0].mxu0
        %v1092 = vadd.f32 %v882, %v1091
        %v1093 = vpop.f32.mrb[0].mxu0
        %v1094 = vpop.f32.mrb[0].mxu0
        %v1095 = vadd.f32 %v882, %v1094
        %v1096 = vpop.f32.mrb[0].mxu0
        %1097 = vdwg.mxu0
        %1100 = vrot.lane.b32.xlu0 %v1049, 96
        %v1101 = vpop.permute.xlu0 %1100
        %1102 = vrot.lane.b32.xlu0 %v1053, 96
        %v1103 = vpop.permute.xlu0 %1102
        %1106 = vrot.lane.b32.xlu0 %v1049, 64
        %v1107 = vpop.permute.xlu0 %1106
        %1108 = vrot.lane.b32.xlu0 %v1053, 64
        %v1109 = vpop.permute.xlu0 %1108
        %1112 = vrot.lane.b32.xlu0 %v1049, 32
        %v1113 = vpop.permute.xlu0 %1112
        %1114 = vrot.lane.b32.xlu0 %v1053, 32
        %v1115 = vpop.permute.xlu0 %1114
        %v1118 = vpack.c.bf16 %v1049, %v1049
        %v1119 = vpack.c.bf16 %v1053, %v1053
        %v1120 = vpack.c.bf16 %v1101, %v1101
        %v1121 = vpack.c.bf16 %v1103, %v1103
        %v1122 = vpack.c.bf16 %v1107, %v1107
        %v1123 = vpack.c.bf16 %v1109, %v1109
        %v1124 = vpack.c.bf16 %v1113, %v1113
        %v1125 = vpack.c.bf16 %v1115, %v1115
        %1128 = vrot.lane.b32.xlu0 %v1051, 96
        %v1129 = vpop.permute.xlu0 %1128
        %1130 = vrot.lane.b32.xlu0 %v1055, 96
        %v1131 = vpop.permute.xlu0 %1130
        %1134 = vrot.lane.b32.xlu0 %v1051, 64
        %v1135 = vpop.permute.xlu0 %1134
        %1136 = vrot.lane.b32.xlu0 %v1055, 64
        %v1137 = vpop.permute.xlu0 %1136
        %1140 = vrot.lane.b32.xlu0 %v1051, 32
        %v1141 = vpop.permute.xlu0 %1140
        %1142 = vrot.lane.b32.xlu0 %v1055, 32
        %v1143 = vpop.permute.xlu0 %1142
        %v1146 = vpack.c.bf16 %v1051, %v1051
        %v1147 = vpack.c.bf16 %v1055, %v1055
        %v1148 = vpack.c.bf16 %v1129, %v1129
        %v1149 = vpack.c.bf16 %v1131, %v1131
        %v1150 = vpack.c.bf16 %v1135, %v1135
        %v1151 = vpack.c.bf16 %v1137, %v1137
        %v1152 = vpack.c.bf16 %v1141, %v1141
        %v1153 = vpack.c.bf16 %v1143, %v1143
        %1156 = vrot.lane.b32.xlu0 %v1092, 96
        %v1157 = vpop.permute.xlu0 %1156
        %1158 = vrot.lane.b32.xlu0 %v1095, 96
        %v1159 = vpop.permute.xlu0 %1158
        %1162 = vrot.lane.b32.xlu0 %v1092, 64
        %v1163 = vpop.permute.xlu0 %1162
        %1164 = vrot.lane.b32.xlu0 %v1095, 64
        %v1165 = vpop.permute.xlu0 %1164
        %1168 = vrot.lane.b32.xlu0 %v1092, 32
        %v1169 = vpop.permute.xlu0 %1168
        %1170 = vrot.lane.b32.xlu0 %v1095, 32
        %v1171 = vpop.permute.xlu0 %1170
        %v1174 = vpack.c.bf16 %v1092, %v1092
        %v1175 = vpack.c.bf16 %v1095, %v1095
        %v1176 = vpack.c.bf16 %v1157, %v1157
        %v1177 = vpack.c.bf16 %v1159, %v1159
        %v1178 = vpack.c.bf16 %v1163, %v1163
        %v1179 = vpack.c.bf16 %v1165, %v1165
        %v1180 = vpack.c.bf16 %v1169, %v1169
        %v1181 = vpack.c.bf16 %v1171, %v1171
        %v1182 = vld [vmem:[%s1] sm:$0x1]
        %v1184 = vlaneseq
        %v1185 = vshrl.u32 %v1184, 7
        %v1186 = vsub.s32 0, %v1185
        %v1187 = vrot.slane %v1182, %v1186
        %vm1189 = vcmask 261120
        %v1191 = vsel %vm1189, %v1118, 0
        %v1194 = vsel %vm1189, %v1146, 0
        %1196 = vmatprep.subr.bf16.mxu0 0
        %1197 = vmatpush1.bf16.xpose.msra.mxu0 %v1194
        %1198 = vmatprep.subr.bf16.mxu0 0
        %1199 = vmatpush1.bf16.xpose.msra.mxu0 0
        %1200 = vmatprep.subr.bf16.mxu0 0
        %1201 = vmatpush1.bf16.xpose.msra.mxu0 0
        %1202 = vmatprep.subr.bf16.mxu0 0
        %1203 = vmatpush1.bf16.xpose.msra.mxu0 0
        %1204 = vmatprep.subr.bf16.mxu0 0
        %1205 = vmatpush1.bf16.xpose.msra.mxu0 0
        %1206 = vmatprep.subr.bf16.mxu0 0
        %1207 = vmatpush1.bf16.xpose.msra.mxu0 0
        %1208 = vmatprep.subr.bf16.mxu0 0
        %1209 = vmatpush1.bf16.xpose.msra.mxu0 0
        %1210 = vmatprep.subr.bf16.mxu0 0
        %1211 = vmatpush1.bf16.xpose.msra.mxu0 0
        %1212 = vmatprep.subr.bf16.mxu0 0
        %1213 = vmatpush1.bf16.xpose.msra.mxu0 0
        %1214 = vmatprep.subr.bf16.mxu0 0
        %1215 = vmatpush1.bf16.xpose.msra.mxu0 0
        %1216 = vmatprep.subr.bf16.mxu0 0
        %1217 = vmatpush1.bf16.xpose.msra.mxu0 0
        %1218 = vmatprep.subr.bf16.mxu0 0
        %1219 = vmatpush1.bf16.xpose.msra.mxu0 0
        %1220 = vmatprep.subr.bf16.mxu0 0
        %1221 = vmatpush1.bf16.xpose.msra.mxu0 0
        %1222 = vmatprep.subr.bf16.mxu0 0
        %1223 = vmatpush1.bf16.xpose.msra.mxu0 0
        %1224 = vmatprep.subr.bf16.mxu0 0
        %1225 = vmatpush1.bf16.xpose.msra.mxu0 0
        %1226 = vmatprep.subr.bf16.mxu0 0
        %1227 = vmatpush1.bf16.xpose.msra.mxu0 0
        %1228 = vmatprep.mubr.bf16.mxu0 0
        %1229 = vmatmul.mubr.bf16.gmra.mrb[0].mxu0 %v1191
        %v1230 = vpop.f32.mrb[0].mxu0
        %v1231 = vadd.f32 %v1187, %v1230
        %v1232 = vpop.f32.mrb[0].mxu0
        %v1233 = vpop.f32.mrb[0].mxu0
        %v1234 = vpop.f32.mrb[0].mxu0
        %1235 = vdwg.mxu0
        %v1237 = vsel %vm1189, %v1119, 0
        %v1240 = vsel %vm1189, %v1147, 0
        %1242 = vmatprep.subr.bf16.mxu0 0
        %1243 = vmatpush1.bf16.xpose.msra.mxu0 %v1240
        %1244 = vmatprep.subr.bf16.mxu0 0
        %1245 = vmatpush1.bf16.xpose.msra.mxu0 0
        %1246 = vmatprep.subr.bf16.mxu0 0
        %1247 = vmatpush1.bf16.xpose.msra.mxu0 0
        %1248 = vmatprep.subr.bf16.mxu0 0
        %1249 = vmatpush1.bf16.xpose.msra.mxu0 0
        %1250 = vmatprep.subr.bf16.mxu0 0
        %1251 = vmatpush1.bf16.xpose.msra.mxu0 0
        %1252 = vmatprep.subr.bf16.mxu0 0
        %1253 = vmatpush1.bf16.xpose.msra.mxu0 0
        %1254 = vmatprep.subr.bf16.mxu0 0
        %1255 = vmatpush1.bf16.xpose.msra.mxu0 0
        %1256 = vmatprep.subr.bf16.mxu0 0
        %1257 = vmatpush1.bf16.xpose.msra.mxu0 0
        %1258 = vmatprep.subr.bf16.mxu0 0
        %1259 = vmatpush1.bf16.xpose.msra.mxu0 0
        %1260 = vmatprep.subr.bf16.mxu0 0
        %1261 = vmatpush1.bf16.xpose.msra.mxu0 0
        %1262 = vmatprep.subr.bf16.mxu0 0
        %1263 = vmatpush1.bf16.xpose.msra.mxu0 0
        %1264 = vmatprep.subr.bf16.mxu0 0
        %1265 = vmatpush1.bf16.xpose.msra.mxu0 0
        %1266 = vmatprep.subr.bf16.mxu0 0
        %1267 = vmatpush1.bf16.xpose.msra.mxu0 0
        %1268 = vmatprep.subr.bf16.mxu0 0
        %1269 = vmatpush1.bf16.xpose.msra.mxu0 0
        %1270 = vmatprep.subr.bf16.mxu0 0
        %1271 = vmatpush1.bf16.xpose.msra.mxu0 0
        %1272 = vmatprep.subr.bf16.mxu0 0
        %1273 = vmatpush1.bf16.xpose.msra.mxu0 0
        %1274 = vmatprep.mubr.bf16.mxu0 0
        %1275 = vmatmul.mubr.bf16.gmra.mrb[0].mxu0 %v1237
        %v1276 = vpop.f32.mrb[0].mxu0
        %v1277 = vadd.f32 %v1187, %v1276
        %v1278 = vpop.f32.mrb[0].mxu0
        %v1279 = vpop.f32.mrb[0].mxu0
        %v1280 = vpop.f32.mrb[0].mxu0
        %1281 = vdwg.mxu0
        %v1283 = vsel %vm1189, %v1120, 0
        %v1286 = vsel %vm1189, %v1148, 0
        %1288 = vmatprep.subr.bf16.mxu0 0
        %1289 = vmatpush1.bf16.xpose.msra.mxu0 %v1286
        %1290 = vmatprep.subr.bf16.mxu0 0
        %1291 = vmatpush1.bf16.xpose.msra.mxu0 0
        %1292 = vmatprep.subr.bf16.mxu0 0
        %1293 = vmatpush1.bf16.xpose.msra.mxu0 0
        %1294 = vmatprep.subr.bf16.mxu0 0
        %1295 = vmatpush1.bf16.xpose.msra.mxu0 0
        %1296 = vmatprep.subr.bf16.mxu0 0
        %1297 = vmatpush1.bf16.xpose.msra.mxu0 0
        %1298 = vmatprep.subr.bf16.mxu0 0
        %1299 = vmatpush1.bf16.xpose.msra.mxu0 0
        %1300 = vmatprep.subr.bf16.mxu0 0
        %1301 = vmatpush1.bf16.xpose.msra.mxu0 0
        %1302 = vmatprep.subr.bf16.mxu0 0
        %1303 = vmatpush1.bf16.xpose.msra.mxu0 0
        %1304 = vmatprep.subr.bf16.mxu0 0
        %1305 = vmatpush1.bf16.xpose.msra.mxu0 0
        %1306 = vmatprep.subr.bf16.mxu0 0
        %1307 = vmatpush1.bf16.xpose.msra.mxu0 0
        %1308 = vmatprep.subr.bf16.mxu0 0
        %1309 = vmatpush1.bf16.xpose.msra.mxu0 0
        %1310 = vmatprep.subr.bf16.mxu0 0
        %1311 = vmatpush1.bf16.xpose.msra.mxu0 0
        %1312 = vmatprep.subr.bf16.mxu0 0
        %1313 = vmatpush1.bf16.xpose.msra.mxu0 0
        %1314 = vmatprep.subr.bf16.mxu0 0
        %1315 = vmatpush1.bf16.xpose.msra.mxu0 0
        %1316 = vmatprep.subr.bf16.mxu0 0
        %1317 = vmatpush1.bf16.xpose.msra.mxu0 0
        %1318 = vmatprep.subr.bf16.mxu0 0
        %1319 = vmatpush1.bf16.xpose.msra.mxu0 0
        %1320 = vmatprep.mubr.bf16.mxu0 0
        %1321 = vmatmul.mubr.bf16.gmra.mrb[0].mxu0 %v1283
        %v1322 = vpop.f32.mrb[0].mxu0
        %v1323 = vadd.f32 %v1187, %v1322
        %v1324 = vpop.f32.mrb[0].mxu0
        %v1325 = vpop.f32.mrb[0].mxu0
        %v1326 = vpop.f32.mrb[0].mxu0
        %1327 = vdwg.mxu0
        %v1329 = vsel %vm1189, %v1121, 0
        %v1332 = vsel %vm1189, %v1149, 0
        %1334 = vmatprep.subr.bf16.mxu0 0
        %1335 = vmatpush1.bf16.xpose.msra.mxu0 %v1332
        %1336 = vmatprep.subr.bf16.mxu0 0
        %1337 = vmatpush1.bf16.xpose.msra.mxu0 0
        %1338 = vmatprep.subr.bf16.mxu0 0
        %1339 = vmatpush1.bf16.xpose.msra.mxu0 0
        %1340 = vmatprep.subr.bf16.mxu0 0
        %1341 = vmatpush1.bf16.xpose.msra.mxu0 0
        %1342 = vmatprep.subr.bf16.mxu0 0
        %1343 = vmatpush1.bf16.xpose.msra.mxu0 0
        %1344 = vmatprep.subr.bf16.mxu0 0
        %1345 = vmatpush1.bf16.xpose.msra.mxu0 0
        %1346 = vmatprep.subr.bf16.mxu0 0
        %1347 = vmatpush1.bf16.xpose.msra.mxu0 0
        %1348 = vmatprep.subr.bf16.mxu0 0
        %1349 = vmatpush1.bf16.xpose.msra.mxu0 0
        %1350 = vmatprep.subr.bf16.mxu0 0
        %1351 = vmatpush1.bf16.xpose.msra.mxu0 0
        %1352 = vmatprep.subr.bf16.mxu0 0
        %1353 = vmatpush1.bf16.xpose.msra.mxu0 0
        %1354 = vmatprep.subr.bf16.mxu0 0
        %1355 = vmatpush1.bf16.xpose.msra.mxu0 0
        %1356 = vmatprep.subr.bf16.mxu0 0
        %1357 = vmatpush1.bf16.xpose.msra.mxu0 0
        %1358 = vmatprep.subr.bf16.mxu0 0
        %1359 = vmatpush1.bf16.xpose.msra.mxu0 0
        %1360 = vmatprep.subr.bf16.mxu0 0
        %1361 = vmatpush1.bf16.xpose.msra.mxu0 0
        %1362 = vmatprep.subr.bf16.mxu0 0
        %1363 = vmatpush1.bf16.xpose.msra.mxu0 0
        %1364 = vmatprep.subr.bf16.mxu0 0
        %1365 = vmatpush1.bf16.xpose.msra.mxu0 0
        %1366 = vmatprep.mubr.bf16.mxu0 0
        %1367 = vmatmul.mubr.bf16.gmra.mrb[0].mxu0 %v1329
        %v1368 = vpop.f32.mrb[0].mxu0
        %v1369 = vadd.f32 %v1187, %v1368
        %v1370 = vpop.f32.mrb[0].mxu0
        %v1371 = vpop.f32.mrb[0].mxu0
        %v1372 = vpop.f32.mrb[0].mxu0
        %1373 = vdwg.mxu0
        %v1375 = vsel %vm1189, %v1122, 0
        %v1378 = vsel %vm1189, %v1150, 0
        %1380 = vmatprep.subr.bf16.mxu0 0
        %1381 = vmatpush1.bf16.xpose.msra.mxu0 %v1378
        %1382 = vmatprep.subr.bf16.mxu0 0
        %1383 = vmatpush1.bf16.xpose.msra.mxu0 0
        %1384 = vmatprep.subr.bf16.mxu0 0
        %1385 = vmatpush1.bf16.xpose.msra.mxu0 0
        %1386 = vmatprep.subr.bf16.mxu0 0
        %1387 = vmatpush1.bf16.xpose.msra.mxu0 0
        %1388 = vmatprep.subr.bf16.mxu0 0
        %1389 = vmatpush1.bf16.xpose.msra.mxu0 0
        %1390 = vmatprep.subr.bf16.mxu0 0
        %1391 = vmatpush1.bf16.xpose.msra.mxu0 0
        %1392 = vmatprep.subr.bf16.mxu0 0
        %1393 = vmatpush1.bf16.xpose.msra.mxu0 0
        %1394 = vmatprep.subr.bf16.mxu0 0
        %1395 = vmatpush1.bf16.xpose.msra.mxu0 0
        %1396 = vmatprep.subr.bf16.mxu0 0
        %1397 = vmatpush1.bf16.xpose.msra.mxu0 0
        %1398 = vmatprep.subr.bf16.mxu0 0
        %1399 = vmatpush1.bf16.xpose.msra.mxu0 0
        %1400 = vmatprep.subr.bf16.mxu0 0
        %1401 = vmatpush1.bf16.xpose.msra.mxu0 0
        %1402 = vmatprep.subr.bf16.mxu0 0
        %1403 = vmatpush1.bf16.xpose.msra.mxu0 0
        %1404 = vmatprep.subr.bf16.mxu0 0
        %1405 = vmatpush1.bf16.xpose.msra.mxu0 0
        %1406 = vmatprep.subr.bf16.mxu0 0
        %1407 = vmatpush1.bf16.xpose.msra.mxu0 0
        %1408 = vmatprep.subr.bf16.mxu0 0
        %1409 = vmatpush1.bf16.xpose.msra.mxu0 0
        %1410 = vmatprep.subr.bf16.mxu0 0
        %1411 = vmatpush1.bf16.xpose.msra.mxu0 0
        %1412 = vmatprep.mubr.bf16.mxu0 0
        %1413 = vmatmul.mubr.bf16.gmra.mrb[0].mxu0 %v1375
        %v1414 = vpop.f32.mrb[0].mxu0
        %v1415 = vadd.f32 %v1187, %v1414
        %v1416 = vpop.f32.mrb[0].mxu0
        %v1417 = vpop.f32.mrb[0].mxu0
        %v1418 = vpop.f32.mrb[0].mxu0
        %1419 = vdwg.mxu0
        %v1421 = vsel %vm1189, %v1123, 0
        %v1424 = vsel %vm1189, %v1151, 0
        %1426 = vmatprep.subr.bf16.mxu0 0
        %1427 = vmatpush1.bf16.xpose.msra.mxu0 %v1424
        %1428 = vmatprep.subr.bf16.mxu0 0
        %1429 = vmatpush1.bf16.xpose.msra.mxu0 0
        %1430 = vmatprep.subr.bf16.mxu0 0
        %1431 = vmatpush1.bf16.xpose.msra.mxu0 0
        %1432 = vmatprep.subr.bf16.mxu0 0
        %1433 = vmatpush1.bf16.xpose.msra.mxu0 0
        %1434 = vmatprep.subr.bf16.mxu0 0
        %1435 = vmatpush1.bf16.xpose.msra.mxu0 0
        %1436 = vmatprep.subr.bf16.mxu0 0
        %1437 = vmatpush1.bf16.xpose.msra.mxu0 0
        %1438 = vmatprep.subr.bf16.mxu0 0
        %1439 = vmatpush1.bf16.xpose.msra.mxu0 0
        %1440 = vmatprep.subr.bf16.mxu0 0
        %1441 = vmatpush1.bf16.xpose.msra.mxu0 0
        %1442 = vmatprep.subr.bf16.mxu0 0
        %1443 = vmatpush1.bf16.xpose.msra.mxu0 0
        %1444 = vmatprep.subr.bf16.mxu0 0
        %1445 = vmatpush1.bf16.xpose.msra.mxu0 0
        %1446 = vmatprep.subr.bf16.mxu0 0
        %1447 = vmatpush1.bf16.xpose.msra.mxu0 0
        %1448 = vmatprep.subr.bf16.mxu0 0
        %1449 = vmatpush1.bf16.xpose.msra.mxu0 0
        %1450 = vmatprep.subr.bf16.mxu0 0
        %1451 = vmatpush1.bf16.xpose.msra.mxu0 0
        %1452 = vmatprep.subr.bf16.mxu0 0
        %1453 = vmatpush1.bf16.xpose.msra.mxu0 0
        %1454 = vmatprep.subr.bf16.mxu0 0
        %1455 = vmatpush1.bf16.xpose.msra.mxu0 0
        %1456 = vmatprep.subr.bf16.mxu0 0
        %1457 = vmatpush1.bf16.xpose.msra.mxu0 0
        %1458 = vmatprep.mubr.bf16.mxu0 0
        %1459 = vmatmul.mubr.bf16.gmra.mrb[0].mxu0 %v1421
        %v1460 = vpop.f32.mrb[0].mxu0
        %v1461 = vadd.f32 %v1187, %v1460
        %v1462 = vpop.f32.mrb[0].mxu0
        %v1463 = vpop.f32.mrb[0].mxu0
        %v1464 = vpop.f32.mrb[0].mxu0
        %1465 = vdwg.mxu0
        %v1467 = vsel %vm1189, %v1124, 0
        %v1470 = vsel %vm1189, %v1152, 0
        %1472 = vmatprep.subr.bf16.mxu0 0
        %1473 = vmatpush1.bf16.xpose.msra.mxu0 %v1470
        %1474 = vmatprep.subr.bf16.mxu0 0
        %1475 = vmatpush1.bf16.xpose.msra.mxu0 0
        %1476 = vmatprep.subr.bf16.mxu0 0
        %1477 = vmatpush1.bf16.xpose.msra.mxu0 0
        %1478 = vmatprep.subr.bf16.mxu0 0
        %1479 = vmatpush1.bf16.xpose.msra.mxu0 0
        %1480 = vmatprep.subr.bf16.mxu0 0
        %1481 = vmatpush1.bf16.xpose.msra.mxu0 0
        %1482 = vmatprep.subr.bf16.mxu0 0
        %1483 = vmatpush1.bf16.xpose.msra.mxu0 0
        %1484 = vmatprep.subr.bf16.mxu0 0
        %1485 = vmatpush1.bf16.xpose.msra.mxu0 0
        %1486 = vmatprep.subr.bf16.mxu0 0
        %1487 = vmatpush1.bf16.xpose.msra.mxu0 0
        %1488 = vmatprep.subr.bf16.mxu0 0
        %1489 = vmatpush1.bf16.xpose.msra.mxu0 0
        %1490 = vmatprep.subr.bf16.mxu0 0
        %1491 = vmatpush1.bf16.xpose.msra.mxu0 0
        %1492 = vmatprep.subr.bf16.mxu0 0
        %1493 = vmatpush1.bf16.xpose.msra.mxu0 0
        %1494 = vmatprep.subr.bf16.mxu0 0
        %1495 = vmatpush1.bf16.xpose.msra.mxu0 0
        %1496 = vmatprep.subr.bf16.mxu0 0
        %1497 = vmatpush1.bf16.xpose.msra.mxu0 0
        %1498 = vmatprep.subr.bf16.mxu0 0
        %1499 = vmatpush1.bf16.xpose.msra.mxu0 0
        %1500 = vmatprep.subr.bf16.mxu0 0
        %1501 = vmatpush1.bf16.xpose.msra.mxu0 0
        %1502 = vmatprep.subr.bf16.mxu0 0
        %1503 = vmatpush1.bf16.xpose.msra.mxu0 0
        %1504 = vmatprep.mubr.bf16.mxu0 0
        %1505 = vmatmul.mubr.bf16.gmra.mrb[0].mxu0 %v1467
        %v1506 = vpop.f32.mrb[0].mxu0
        %v1507 = vadd.f32 %v1187, %v1506
        %v1508 = vpop.f32.mrb[0].mxu0
        %v1509 = vpop.f32.mrb[0].mxu0
        %v1510 = vpop.f32.mrb[0].mxu0
        %1511 = vdwg.mxu0
        %v1513 = vsel %vm1189, %v1125, 0
        %v1516 = vsel %vm1189, %v1153, 0
        %1518 = vmatprep.subr.bf16.mxu0 0
        %1519 = vmatpush1.bf16.xpose.msra.mxu0 %v1516
        %1520 = vmatprep.subr.bf16.mxu0 0
        %1521 = vmatpush1.bf16.xpose.msra.mxu0 0
        %1522 = vmatprep.subr.bf16.mxu0 0
        %1523 = vmatpush1.bf16.xpose.msra.mxu0 0
        %1524 = vmatprep.subr.bf16.mxu0 0
        %1525 = vmatpush1.bf16.xpose.msra.mxu0 0
        %1526 = vmatprep.subr.bf16.mxu0 0
        %1527 = vmatpush1.bf16.xpose.msra.mxu0 0
        %1528 = vmatprep.subr.bf16.mxu0 0
        %1529 = vmatpush1.bf16.xpose.msra.mxu0 0
        %1530 = vmatprep.subr.bf16.mxu0 0
        %1531 = vmatpush1.bf16.xpose.msra.mxu0 0
        %1532 = vmatprep.subr.bf16.mxu0 0
        %1533 = vmatpush1.bf16.xpose.msra.mxu0 0
        %1534 = vmatprep.subr.bf16.mxu0 0
        %1535 = vmatpush1.bf16.xpose.msra.mxu0 0
        %1536 = vmatprep.subr.bf16.mxu0 0
        %1537 = vmatpush1.bf16.xpose.msra.mxu0 0
        %1538 = vmatprep.subr.bf16.mxu0 0
        %1539 = vmatpush1.bf16.xpose.msra.mxu0 0
        %1540 = vmatprep.subr.bf16.mxu0 0
        %1541 = vmatpush1.bf16.xpose.msra.mxu0 0
        %1542 = vmatprep.subr.bf16.mxu0 0
        %1543 = vmatpush1.bf16.xpose.msra.mxu0 0
        %1544 = vmatprep.subr.bf16.mxu0 0
        %1545 = vmatpush1.bf16.xpose.msra.mxu0 0
        %1546 = vmatprep.subr.bf16.mxu0 0
        %1547 = vmatpush1.bf16.xpose.msra.mxu0 0
        %1548 = vmatprep.subr.bf16.mxu0 0
        %1549 = vmatpush1.bf16.xpose.msra.mxu0 0
        %1550 = vmatprep.mubr.bf16.mxu0 0
        %1551 = vmatmul.mubr.bf16.gmra.mrb[0].mxu0 %v1513
        %v1552 = vpop.f32.mrb[0].mxu0
        %v1553 = vadd.f32 %v1187, %v1552
        %v1554 = vpop.f32.mrb[0].mxu0
        %v1555 = vpop.f32.mrb[0].mxu0
        %v1556 = vpop.f32.mrb[0].mxu0
        %1557 = vdwg.mxu0
        %vm1558 = vcmask 64512
        %v1559 = vsel %vm1558, %v1231, -inf
        %1560 = vmax.xlane.f32.xlu0 %v1559
        %v1561 = vpop.xlane.xlu0 %1560
        %v1562 = vsel %vm1558, %v1277, -inf
        %1563 = vmax.xlane.f32.xlu0 %v1562
        %v1564 = vpop.xlane.xlu0 %1563
        %v1565 = vsel %vm1558, %v1323, -inf
        %1566 = vmax.xlane.f32.xlu0 %v1565
        %v1567 = vpop.xlane.xlu0 %1566
        %v1568 = vsel %vm1558, %v1369, -inf
        %1569 = vmax.xlane.f32.xlu0 %v1568
        %v1570 = vpop.xlane.xlu0 %1569
        %v1571 = vsel %vm1558, %v1415, -inf
        %1572 = vmax.xlane.f32.xlu0 %v1571
        %v1573 = vpop.xlane.xlu0 %1572
        %v1574 = vsel %vm1558, %v1461, -inf
        %1575 = vmax.xlane.f32.xlu0 %v1574
        %v1576 = vpop.xlane.xlu0 %1575
        %v1577 = vsel %vm1558, %v1507, -inf
        %1578 = vmax.xlane.f32.xlu0 %v1577
        %v1579 = vpop.xlane.xlu0 %1578
        %v1580 = vsel %vm1558, %v1553, -inf
        %1581 = vmax.xlane.f32.xlu0 %v1580
        %v1582 = vpop.xlane.xlu0 %1581
        %v1583 = vsub.f32 %v1231, %v1561
        %v1584 = vsub.f32 %v1277, %v1564
        %v1585 = vsub.f32 %v1323, %v1567
        %v1586 = vsub.f32 %v1369, %v1570
        %v1587 = vsub.f32 %v1415, %v1573
        %v1588 = vsub.f32 %v1461, %v1576
        %v1589 = vsub.f32 %v1507, %v1579
        %v1590 = vsub.f32 %v1553, %v1582
        %v1591 = vmul.f32 %v1583, 1.442695
        %v1592 = vpow.pop %v1591
        %v1593 = vmul.f32 %v1584, 1.442695
        %v1594 = vpow.pop %v1593
        %v1595 = vmul.f32 %v1585, 1.442695
        %v1596 = vpow.pop %v1595
        %v1597 = vmul.f32 %v1586, 1.442695
        %v1598 = vpow.pop %v1597
        %v1599 = vmul.f32 %v1587, 1.442695
        %v1600 = vpow.pop %v1599
        %v1601 = vmul.f32 %v1588, 1.442695
        %v1602 = vpow.pop %v1601
        %v1603 = vmul.f32 %v1589, 1.442695
        %v1604 = vpow.pop %v1603
        %v1605 = vmul.f32 %v1590, 1.442695
        %v1606 = vpow.pop %v1605
        %v1607 = vsel %vm1558, %v1592, 0.0
        %1608 = vadd.xlane.f32.xlu0 %v1607
        %v1609 = vpop.xlane.xlu0 %1608
        %v1610 = vsel %vm1558, %v1594, 0.0
        %1611 = vadd.xlane.f32.xlu0 %v1610
        %v1612 = vpop.xlane.xlu0 %1611
        %v1613 = vsel %vm1558, %v1596, 0.0
        %1614 = vadd.xlane.f32.xlu0 %v1613
        %v1615 = vpop.xlane.xlu0 %1614
        %v1616 = vsel %vm1558, %v1598, 0.0
        %1617 = vadd.xlane.f32.xlu0 %v1616
        %v1618 = vpop.xlane.xlu0 %1617
        %v1619 = vsel %vm1558, %v1600, 0.0
        %1620 = vadd.xlane.f32.xlu0 %v1619
        %v1621 = vpop.xlane.xlu0 %1620
        %v1622 = vsel %vm1558, %v1602, 0.0
        %1623 = vadd.xlane.f32.xlu0 %v1622
        %v1624 = vpop.xlane.xlu0 %1623
        %v1625 = vsel %vm1558, %v1604, 0.0
        %1626 = vadd.xlane.f32.xlu0 %v1625
        %v1627 = vpop.xlane.xlu0 %1626
        %v1628 = vsel %vm1558, %v1606, 0.0
        %1629 = vadd.xlane.f32.xlu0 %v1628
        %v1630 = vpop.xlane.xlu0 %1629
        %v1631 = vrcp.pop %v1609
        %v1632 = vrcp.pop %v1612
        %v1633 = vrcp.pop %v1615
        %v1634 = vrcp.pop %v1618
        %v1635 = vrcp.pop %v1621
        %v1636 = vrcp.pop %v1624
        %v1637 = vrcp.pop %v1627
        %v1638 = vrcp.pop %v1630
        %v1639 = vmul.f32 %v1592, %v1631
        %v1640 = vmul.f32 %v1594, %v1632
        %v1641 = vmul.f32 %v1596, %v1633
        %v1642 = vmul.f32 %v1598, %v1634
        %v1643 = vmul.f32 %v1600, %v1635
        %v1644 = vmul.f32 %v1602, %v1636
        %v1645 = vmul.f32 %v1604, %v1637
        %v1646 = vmul.f32 %v1606, %v1638
        %v1647 = vpack.c.bf16 %v1639, %v1639
        %v1648 = vpack.c.bf16 %v1640, %v1640
        %v1649 = vpack.c.bf16 %v1641, %v1641
        %v1650 = vpack.c.bf16 %v1642, %v1642
        %v1651 = vpack.c.bf16 %v1643, %v1643
        %v1652 = vpack.c.bf16 %v1644, %v1644
        %v1653 = vpack.c.bf16 %v1645, %v1645
        %v1654 = vpack.c.bf16 %v1646, %v1646
        %v1656 = vsel %vm1558, %v1647, 0
        %vm1658 = vcmask 1043456
        %v1660 = vsel %vm1658, %v1174, 0
        %1662 = vmatprep.subr.bf16.mxu0 0
        %1663 = vmatpush1.bf16.msra.mxu0 %v1660
        %1664 = vmatprep.subr.bf16.mxu0 0
        %1665 = vmatpush1.bf16.msra.mxu0 0
        %1666 = vmatprep.subr.bf16.mxu0 0
        %1667 = vmatpush1.bf16.msra.mxu0 0
        %1668 = vmatprep.subr.bf16.mxu0 0
        %1669 = vmatpush1.bf16.msra.mxu0 0
        %1670 = vmatprep.subr.bf16.mxu0 0
        %1671 = vmatpush1.bf16.msra.mxu0 0
        %1672 = vmatprep.subr.bf16.mxu0 0
        %1673 = vmatpush1.bf16.msra.mxu0 0
        %1674 = vmatprep.subr.bf16.mxu0 0
        %1675 = vmatpush1.bf16.msra.mxu0 0
        %1676 = vmatprep.subr.bf16.mxu0 0
        %1677 = vmatpush1.bf16.msra.mxu0 0
        %1678 = vmatprep.subr.bf16.mxu0 0
        %1679 = vmatpush1.bf16.msra.mxu0 0
        %1680 = vmatprep.subr.bf16.mxu0 0
        %1681 = vmatpush1.bf16.msra.mxu0 0
        %1682 = vmatprep.subr.bf16.mxu0 0
        %1683 = vmatpush1.bf16.msra.mxu0 0
        %1684 = vmatprep.subr.bf16.mxu0 0
        %1685 = vmatpush1.bf16.msra.mxu0 0
        %1686 = vmatprep.subr.bf16.mxu0 0
        %1687 = vmatpush1.bf16.msra.mxu0 0
        %1688 = vmatprep.subr.bf16.mxu0 0
        %1689 = vmatpush1.bf16.msra.mxu0 0
        %1690 = vmatprep.subr.bf16.mxu0 0
        %1691 = vmatpush1.bf16.msra.mxu0 0
        %1692 = vmatprep.subr.bf16.mxu0 0
        %1693 = vmatpush1.bf16.msra.mxu0 0
        %1694 = vmatprep.mubr.bf16.mxu0 0
        %1695 = vmatmul.mubr.bf16.gmra.mrb[0].mxu0 %v1656
        %v1696 = vpop.f32.mrb[0].mxu0
        %v1697 = vadd.f32 0.0, %v1696
        %v1698 = vpop.f32.mrb[0].mxu0
        %v1699 = vpop.f32.mrb[0].mxu0
        %v1700 = vpop.f32.mrb[0].mxu0
        %1701 = vdwg.mxu0
        %v1703 = vsel %vm1558, %v1648, 0
        %v1706 = vsel %vm1658, %v1175, 0
        %1708 = vmatprep.subr.bf16.mxu0 0
        %1709 = vmatpush1.bf16.msra.mxu0 %v1706
        %1710 = vmatprep.subr.bf16.mxu0 0
        %1711 = vmatpush1.bf16.msra.mxu0 0
        %1712 = vmatprep.subr.bf16.mxu0 0
        %1713 = vmatpush1.bf16.msra.mxu0 0
        %1714 = vmatprep.subr.bf16.mxu0 0
        %1715 = vmatpush1.bf16.msra.mxu0 0
        %1716 = vmatprep.subr.bf16.mxu0 0
        %1717 = vmatpush1.bf16.msra.mxu0 0
        %1718 = vmatprep.subr.bf16.mxu0 0
        %1719 = vmatpush1.bf16.msra.mxu0 0
        %1720 = vmatprep.subr.bf16.mxu0 0
        %1721 = vmatpush1.bf16.msra.mxu0 0
        %1722 = vmatprep.subr.bf16.mxu0 0
        %1723 = vmatpush1.bf16.msra.mxu0 0
        %1724 = vmatprep.subr.bf16.mxu0 0
        %1725 = vmatpush1.bf16.msra.mxu0 0
        %1726 = vmatprep.subr.bf16.mxu0 0
        %1727 = vmatpush1.bf16.msra.mxu0 0
        %1728 = vmatprep.subr.bf16.mxu0 0
        %1729 = vmatpush1.bf16.msra.mxu0 0
        %1730 = vmatprep.subr.bf16.mxu0 0
        %1731 = vmatpush1.bf16.msra.mxu0 0
        %1732 = vmatprep.subr.bf16.mxu0 0
        %1733 = vmatpush1.bf16.msra.mxu0 0
        %1734 = vmatprep.subr.bf16.mxu0 0
        %1735 = vmatpush1.bf16.msra.mxu0 0
        %1736 = vmatprep.subr.bf16.mxu0 0
        %1737 = vmatpush1.bf16.msra.mxu0 0
        %1738 = vmatprep.subr.bf16.mxu0 0
        %1739 = vmatpush1.bf16.msra.mxu0 0
        %1740 = vmatprep.mubr.bf16.mxu0 0
        %1741 = vmatmul.mubr.bf16.gmra.mrb[0].mxu0 %v1703
        %v1742 = vpop.f32.mrb[0].mxu0
        %v1743 = vadd.f32 0.0, %v1742
        %v1744 = vpop.f32.mrb[0].mxu0
        %v1745 = vpop.f32.mrb[0].mxu0
        %v1746 = vpop.f32.mrb[0].mxu0
        %1747 = vdwg.mxu0
        %v1749 = vsel %vm1558, %v1649, 0
        %v1752 = vsel %vm1658, %v1176, 0
        %1754 = vmatprep.subr.bf16.mxu0 0
        %1755 = vmatpush1.bf16.msra.mxu0 %v1752
        %1756 = vmatprep.subr.bf16.mxu0 0
        %1757 = vmatpush1.bf16.msra.mxu0 0
        %1758 = vmatprep.subr.bf16.mxu0 0
        %1759 = vmatpush1.bf16.msra.mxu0 0
        %1760 = vmatprep.subr.bf16.mxu0 0
        %1761 = vmatpush1.bf16.msra.mxu0 0
        %1762 = vmatprep.subr.bf16.mxu0 0
        %1763 = vmatpush1.bf16.msra.mxu0 0
        %1764 = vmatprep.subr.bf16.mxu0 0
        %1765 = vmatpush1.bf16.msra.mxu0 0
        %1766 = vmatprep.subr.bf16.mxu0 0
        %1767 = vmatpush1.bf16.msra.mxu0 0
        %1768 = vmatprep.subr.bf16.mxu0 0
        %1769 = vmatpush1.bf16.msra.mxu0 0
        %1770 = vmatprep.subr.bf16.mxu0 0
        %1771 = vmatpush1.bf16.msra.mxu0 0
        %1772 = vmatprep.subr.bf16.mxu0 0
        %1773 = vmatpush1.bf16.msra.mxu0 0
        %1774 = vmatprep.subr.bf16.mxu0 0
        %1775 = vmatpush1.bf16.msra.mxu0 0
        %1776 = vmatprep.subr.bf16.mxu0 0
        %1777 = vmatpush1.bf16.msra.mxu0 0
        %1778 = vmatprep.subr.bf16.mxu0 0
        %1779 = vmatpush1.bf16.msra.mxu0 0
        %1780 = vmatprep.subr.bf16.mxu0 0
        %1781 = vmatpush1.bf16.msra.mxu0 0
        %1782 = vmatprep.subr.bf16.mxu0 0
        %1783 = vmatpush1.bf16.msra.mxu0 0
        %1784 = vmatprep.subr.bf16.mxu0 0
        %1785 = vmatpush1.bf16.msra.mxu0 0
        %1786 = vmatprep.mubr.bf16.mxu0 0
        %1787 = vmatmul.mubr.bf16.gmra.mrb[0].mxu0 %v1749
        %v1788 = vpop.f32.mrb[0].mxu0
        %v1789 = vadd.f32 0.0, %v1788
        %v1790 = vpop.f32.mrb[0].mxu0
        %v1791 = vpop.f32.mrb[0].mxu0
        %v1792 = vpop.f32.mrb[0].mxu0
        %1793 = vdwg.mxu0
        %v1795 = vsel %vm1558, %v1650, 0
        %v1798 = vsel %vm1658, %v1177, 0
        %1800 = vmatprep.subr.bf16.mxu0 0
        %1801 = vmatpush1.bf16.msra.mxu0 %v1798
        %1802 = vmatprep.subr.bf16.mxu0 0
        %1803 = vmatpush1.bf16.msra.mxu0 0
        %1804 = vmatprep.subr.bf16.mxu0 0
        %1805 = vmatpush1.bf16.msra.mxu0 0
        %1806 = vmatprep.subr.bf16.mxu0 0
        %1807 = vmatpush1.bf16.msra.mxu0 0
        %1808 = vmatprep.subr.bf16.mxu0 0
        %1809 = vmatpush1.bf16.msra.mxu0 0
        %1810 = vmatprep.subr.bf16.mxu0 0
        %1811 = vmatpush1.bf16.msra.mxu0 0
        %1812 = vmatprep.subr.bf16.mxu0 0
        %1813 = vmatpush1.bf16.msra.mxu0 0
        %1814 = vmatprep.subr.bf16.mxu0 0
        %1815 = vmatpush1.bf16.msra.mxu0 0
        %1816 = vmatprep.subr.bf16.mxu0 0
        %1817 = vmatpush1.bf16.msra.mxu0 0
        %1818 = vmatprep.subr.bf16.mxu0 0
        %1819 = vmatpush1.bf16.msra.mxu0 0
        %1820 = vmatprep.subr.bf16.mxu0 0
        %1821 = vmatpush1.bf16.msra.mxu0 0
        %1822 = vmatprep.subr.bf16.mxu0 0
        %1823 = vmatpush1.bf16.msra.mxu0 0
        %1824 = vmatprep.subr.bf16.mxu0 0
        %1825 = vmatpush1.bf16.msra.mxu0 0
        %1826 = vmatprep.subr.bf16.mxu0 0
        %1827 = vmatpush1.bf16.msra.mxu0 0
        %1828 = vmatprep.subr.bf16.mxu0 0
        %1829 = vmatpush1.bf16.msra.mxu0 0
        %1830 = vmatprep.subr.bf16.mxu0 0
        %1831 = vmatpush1.bf16.msra.mxu0 0
        %1832 = vmatprep.mubr.bf16.mxu0 0
        %1833 = vmatmul.mubr.bf16.gmra.mrb[0].mxu0 %v1795
        %v1834 = vpop.f32.mrb[0].mxu0
        %v1835 = vadd.f32 0.0, %v1834
        %v1836 = vpop.f32.mrb[0].mxu0
        %v1837 = vpop.f32.mrb[0].mxu0
        %v1838 = vpop.f32.mrb[0].mxu0
        %1839 = vdwg.mxu0
        %v1841 = vsel %vm1558, %v1651, 0
        %v1844 = vsel %vm1658, %v1178, 0
        %1846 = vmatprep.subr.bf16.mxu0 0
        %1847 = vmatpush1.bf16.msra.mxu0 %v1844
        %1848 = vmatprep.subr.bf16.mxu0 0
        %1849 = vmatpush1.bf16.msra.mxu0 0
        %1850 = vmatprep.subr.bf16.mxu0 0
        %1851 = vmatpush1.bf16.msra.mxu0 0
        %1852 = vmatprep.subr.bf16.mxu0 0
        %1853 = vmatpush1.bf16.msra.mxu0 0
        %1854 = vmatprep.subr.bf16.mxu0 0
        %1855 = vmatpush1.bf16.msra.mxu0 0
        %1856 = vmatprep.subr.bf16.mxu0 0
        %1857 = vmatpush1.bf16.msra.mxu0 0
        %1858 = vmatprep.subr.bf16.mxu0 0
        %1859 = vmatpush1.bf16.msra.mxu0 0
        %1860 = vmatprep.subr.bf16.mxu0 0
        %1861 = vmatpush1.bf16.msra.mxu0 0
        %1862 = vmatprep.subr.bf16.mxu0 0
        %1863 = vmatpush1.bf16.msra.mxu0 0
        %1864 = vmatprep.subr.bf16.mxu0 0
        %1865 = vmatpush1.bf16.msra.mxu0 0
        %1866 = vmatprep.subr.bf16.mxu0 0
        %1867 = vmatpush1.bf16.msra.mxu0 0
        %1868 = vmatprep.subr.bf16.mxu0 0
        %1869 = vmatpush1.bf16.msra.mxu0 0
        %1870 = vmatprep.subr.bf16.mxu0 0
        %1871 = vmatpush1.bf16.msra.mxu0 0
        %1872 = vmatprep.subr.bf16.mxu0 0
        %1873 = vmatpush1.bf16.msra.mxu0 0
        %1874 = vmatprep.subr.bf16.mxu0 0
        %1875 = vmatpush1.bf16.msra.mxu0 0
        %1876 = vmatprep.subr.bf16.mxu0 0
        %1877 = vmatpush1.bf16.msra.mxu0 0
        %1878 = vmatprep.mubr.bf16.mxu0 0
        %1879 = vmatmul.mubr.bf16.gmra.mrb[0].mxu0 %v1841
        %v1880 = vpop.f32.mrb[0].mxu0
        %v1881 = vadd.f32 0.0, %v1880
        %v1882 = vpop.f32.mrb[0].mxu0
        %v1883 = vpop.f32.mrb[0].mxu0
        %v1884 = vpop.f32.mrb[0].mxu0
        %1885 = vdwg.mxu0
        %v1887 = vsel %vm1558, %v1652, 0
        %v1890 = vsel %vm1658, %v1179, 0
        %1892 = vmatprep.subr.bf16.mxu0 0
        %1893 = vmatpush1.bf16.msra.mxu0 %v1890
        %1894 = vmatprep.subr.bf16.mxu0 0
        %1895 = vmatpush1.bf16.msra.mxu0 0
        %1896 = vmatprep.subr.bf16.mxu0 0
        %1897 = vmatpush1.bf16.msra.mxu0 0
        %1898 = vmatprep.subr.bf16.mxu0 0
        %1899 = vmatpush1.bf16.msra.mxu0 0
        %1900 = vmatprep.subr.bf16.mxu0 0
        %1901 = vmatpush1.bf16.msra.mxu0 0
        %1902 = vmatprep.subr.bf16.mxu0 0
        %1903 = vmatpush1.bf16.msra.mxu0 0
        %1904 = vmatprep.subr.bf16.mxu0 0
        %1905 = vmatpush1.bf16.msra.mxu0 0
        %1906 = vmatprep.subr.bf16.mxu0 0
        %1907 = vmatpush1.bf16.msra.mxu0 0
        %1908 = vmatprep.subr.bf16.mxu0 0
        %1909 = vmatpush1.bf16.msra.mxu0 0
        %1910 = vmatprep.subr.bf16.mxu0 0
        %1911 = vmatpush1.bf16.msra.mxu0 0
        %1912 = vmatprep.subr.bf16.mxu0 0
        %1913 = vmatpush1.bf16.msra.mxu0 0
        %1914 = vmatprep.subr.bf16.mxu0 0
        %1915 = vmatpush1.bf16.msra.mxu0 0
        %1916 = vmatprep.subr.bf16.mxu0 0
        %1917 = vmatpush1.bf16.msra.mxu0 0
        %1918 = vmatprep.subr.bf16.mxu0 0
        %1919 = vmatpush1.bf16.msra.mxu0 0
        %1920 = vmatprep.subr.bf16.mxu0 0
        %1921 = vmatpush1.bf16.msra.mxu0 0
        %1922 = vmatprep.subr.bf16.mxu0 0
        %1923 = vmatpush1.bf16.msra.mxu0 0
        %1924 = vmatprep.mubr.bf16.mxu0 0
        %1925 = vmatmul.mubr.bf16.gmra.mrb[0].mxu0 %v1887
        %v1926 = vpop.f32.mrb[0].mxu0
        %v1927 = vadd.f32 0.0, %v1926
        %v1928 = vpop.f32.mrb[0].mxu0
        %v1929 = vpop.f32.mrb[0].mxu0
        %v1930 = vpop.f32.mrb[0].mxu0
        %1931 = vdwg.mxu0
        %v1933 = vsel %vm1558, %v1653, 0
        %v1936 = vsel %vm1658, %v1180, 0
        %1938 = vmatprep.subr.bf16.mxu0 0
        %1939 = vmatpush1.bf16.msra.mxu0 %v1936
        %1940 = vmatprep.subr.bf16.mxu0 0
        %1941 = vmatpush1.bf16.msra.mxu0 0
        %1942 = vmatprep.subr.bf16.mxu0 0
        %1943 = vmatpush1.bf16.msra.mxu0 0
        %1944 = vmatprep.subr.bf16.mxu0 0
        %1945 = vmatpush1.bf16.msra.mxu0 0
        %1946 = vmatprep.subr.bf16.mxu0 0
        %1947 = vmatpush1.bf16.msra.mxu0 0
        %1948 = vmatprep.subr.bf16.mxu0 0
        %1949 = vmatpush1.bf16.msra.mxu0 0
        %1950 = vmatprep.subr.bf16.mxu0 0
        %1951 = vmatpush1.bf16.msra.mxu0 0
        %1952 = vmatprep.subr.bf16.mxu0 0
        %1953 = vmatpush1.bf16.msra.mxu0 0
        %1954 = vmatprep.subr.bf16.mxu0 0
        %1955 = vmatpush1.bf16.msra.mxu0 0
        %1956 = vmatprep.subr.bf16.mxu0 0
        %1957 = vmatpush1.bf16.msra.mxu0 0
        %1958 = vmatprep.subr.bf16.mxu0 0
        %1959 = vmatpush1.bf16.msra.mxu0 0
        %1960 = vmatprep.subr.bf16.mxu0 0
        %1961 = vmatpush1.bf16.msra.mxu0 0
        %1962 = vmatprep.subr.bf16.mxu0 0
        %1963 = vmatpush1.bf16.msra.mxu0 0
        %1964 = vmatprep.subr.bf16.mxu0 0
        %1965 = vmatpush1.bf16.msra.mxu0 0
        %1966 = vmatprep.subr.bf16.mxu0 0
        %1967 = vmatpush1.bf16.msra.mxu0 0
        %1968 = vmatprep.subr.bf16.mxu0 0
        %1969 = vmatpush1.bf16.msra.mxu0 0
        %1970 = vmatprep.mubr.bf16.mxu0 0
        %1971 = vmatmul.mubr.bf16.gmra.mrb[0].mxu0 %v1933
        %v1972 = vpop.f32.mrb[0].mxu0
        %v1973 = vadd.f32 0.0, %v1972
        %v1974 = vpop.f32.mrb[0].mxu0
        %v1975 = vpop.f32.mrb[0].mxu0
        %v1976 = vpop.f32.mrb[0].mxu0
        %1977 = vdwg.mxu0
        %v1979 = vsel %vm1558, %v1654, 0
        %v1982 = vsel %vm1658, %v1181, 0
        %1984 = vmatprep.subr.bf16.mxu0 0
        %1985 = vmatpush1.bf16.msra.mxu0 %v1982
        %1986 = vmatprep.subr.bf16.mxu0 0
        %1987 = vmatpush1.bf16.msra.mxu0 0
        %1988 = vmatprep.subr.bf16.mxu0 0
        %1989 = vmatpush1.bf16.msra.mxu0 0
        %1990 = vmatprep.subr.bf16.mxu0 0
        %1991 = vmatpush1.bf16.msra.mxu0 0
        %1992 = vmatprep.subr.bf16.mxu0 0
        %1993 = vmatpush1.bf16.msra.mxu0 0
        %1994 = vmatprep.subr.bf16.mxu0 0
        %1995 = vmatpush1.bf16.msra.mxu0 0
        %1996 = vmatprep.subr.bf16.mxu0 0
        %1997 = vmatpush1.bf16.msra.mxu0 0
        %1998 = vmatprep.subr.bf16.mxu0 0
        %1999 = vmatpush1.bf16.msra.mxu0 0
        %2000 = vmatprep.subr.bf16.mxu0 0
        %2001 = vmatpush1.bf16.msra.mxu0 0
        %2002 = vmatprep.subr.bf16.mxu0 0
        %2003 = vmatpush1.bf16.msra.mxu0 0
        %2004 = vmatprep.subr.bf16.mxu0 0
        %2005 = vmatpush1.bf16.msra.mxu0 0
        %2006 = vmatprep.subr.bf16.mxu0 0
        %2007 = vmatpush1.bf16.msra.mxu0 0
        %2008 = vmatprep.subr.bf16.mxu0 0
        %2009 = vmatpush1.bf16.msra.mxu0 0
        %2010 = vmatprep.subr.bf16.mxu0 0
        %2011 = vmatpush1.bf16.msra.mxu0 0
        %2012 = vmatprep.subr.bf16.mxu0 0
        %2013 = vmatpush1.bf16.msra.mxu0 0
        %2014 = vmatprep.subr.bf16.mxu0 0
        %2015 = vmatpush1.bf16.msra.mxu0 0
        %2016 = vmatprep.mubr.bf16.mxu0 0
        %2017 = vmatmul.mubr.bf16.gmra.mrb[0].mxu0 %v1979
        %v2018 = vpop.f32.mrb[0].mxu0
        %v2019 = vadd.f32 0.0, %v2018
        %v2020 = vpop.f32.mrb[0].mxu0
        %v2021 = vpop.f32.mrb[0].mxu0
        %v2022 = vpop.f32.mrb[0].mxu0
        %2023 = vdwg.mxu0
        %2026 = vrot.lane.b32.xlu0 %v1789, 32
        %v2027 = vpop.permute.xlu0 %2026
        %2028 = vrot.lane.b32.xlu0 %v1835, 32
        %v2029 = vpop.permute.xlu0 %2028
        %2034 = vrot.lane.b32.xlu0 %v1881, 64
        %v2035 = vpop.permute.xlu0 %2034
        %2036 = vrot.lane.b32.xlu0 %v1927, 64
        %v2037 = vpop.permute.xlu0 %2036
        %2042 = vrot.lane.b32.xlu0 %v1973, 96
        %v2043 = vpop.permute.xlu0 %2042
        %2044 = vrot.lane.b32.xlu0 %v2019, 96
        %v2045 = vpop.permute.xlu0 %2044
        %v2048 = vsel %vm1189, %v1697, %v2027
        %v2049 = vsel %vm1189, %v1743, %v2029
        %vm2050 = vcmask 523264
        %v2051 = vsel %vm2050, %v2048, %v2035
        %v2052 = vsel %vm2050, %v2049, %v2037
        %vm2053 = vcmask 785408
        %v2054 = vsel %vm2053, %v2051, %v2043
        %v2055 = vsel %vm2053, %v2052, %v2045
        %v2056 = vpack.c.bf16 %v2055, %v2054
        %v2057 = vld [vmem:[%s774] sm:$0xf]
        %v2058 = vld [vmem:[%s774 + $0x4] sm:$0xf]
        %v2059 = vld [vmem:[%s774 + $0x8] sm:$0xf]
        %v2060 = vld [vmem:[%s774 + $0xc] sm:$0xf]
        %v2061 = vld [vmem:[%s774 + $0x10] sm:$0xf]
        %v2062 = vld [vmem:[%s774 + $0x14] sm:$0xf]
        %v2063 = vld [vmem:[%s774 + $0x18] sm:$0xf]
        %v2064 = vld [vmem:[%s774 + $0x1c] sm:$0xf]
        %v2065 = vld [vmem:[%s774 + $0x20] sm:$0xf]
        %v2066 = vld [vmem:[%s774 + $0x24] sm:$0xf]
        %v2067 = vld [vmem:[%s774 + $0x28] sm:$0xf]
        %v2068 = vld [vmem:[%s774 + $0x2c] sm:$0xf]
        %v2069 = vld [vmem:[%s774 + $0x30] sm:$0xf]
        %v2070 = vld [vmem:[%s774 + $0x34] sm:$0xf]
        %v2071 = vld [vmem:[%s774 + $0x38] sm:$0xf]
        %v2072 = vld [vmem:[%s774 + $0x3c] sm:$0xf]
        %v2073 = vld [vmem:[%s647] sm:$0x1]
        %v2075 = vlaneseq
        %v2076 = vshrl.u32 %v2075, 7
        %v2077 = vsub.s32 0, %v2076
        %v2078 = vrot.slane %v2073, %v2077
        %v2096 = vunpack.c.l.b16 %v2057
        %v2097 = vunpack.c.l.b16 %v2058
        %v2098 = vunpack.c.l.b16 %v2059
        %v2099 = vunpack.c.l.b16 %v2060
        %v2100 = vunpack.c.l.b16 %v2061
        %v2101 = vunpack.c.l.b16 %v2062
        %v2102 = vunpack.c.l.b16 %v2063
        %v2103 = vunpack.c.l.b16 %v2064
        %v2104 = vunpack.c.l.b16 %v2065
        %v2105 = vunpack.c.l.b16 %v2066
        %v2106 = vunpack.c.l.b16 %v2067
        %v2107 = vunpack.c.l.b16 %v2068
        %v2108 = vunpack.c.l.b16 %v2069
        %v2109 = vunpack.c.l.b16 %v2070
        %v2110 = vunpack.c.l.b16 %v2071
        %v2111 = vunpack.c.l.b16 %v2072
        %v2112 = vpack.c.b16 %v2097, %v2096
        %v2113 = vpack.c.b16 %v2099, %v2098
        %v2114 = vpack.c.b16 %v2101, %v2100
        %v2115 = vpack.c.b16 %v2103, %v2102
        %v2116 = vpack.c.b16 %v2105, %v2104
        %v2117 = vpack.c.b16 %v2107, %v2106
        %v2118 = vpack.c.b16 %v2109, %v2108
        %v2119 = vpack.c.b16 %v2111, %v2110
        %2128 = vmatprep.subr.bf16.mxu0 0
        %2129 = vmatpush1.bf16.msra.mxu0 %v2112
        %2130 = vmatprep.subr.bf16.mxu0 0
        %2131 = vmatpush1.bf16.msra.mxu0 %v2113
        %2132 = vmatprep.subr.bf16.mxu0 0
        %2133 = vmatpush1.bf16.msra.mxu0 %v2114
        %2134 = vmatprep.subr.bf16.mxu0 0
        %2135 = vmatpush1.bf16.msra.mxu0 %v2115
        %2136 = vmatprep.subr.bf16.mxu0 0
        %2137 = vmatpush1.bf16.msra.mxu0 %v2116
        %2138 = vmatprep.subr.bf16.mxu0 0
        %2139 = vmatpush1.bf16.msra.mxu0 %v2117
        %2140 = vmatprep.subr.bf16.mxu0 0
        %2141 = vmatpush1.bf16.msra.mxu0 %v2118
        %2142 = vmatprep.subr.bf16.mxu0 0
        %2143 = vmatpush1.bf16.msra.mxu0 %v2119
        %2144 = vmatprep.subr.bf16.mxu0 0
        %2145 = vmatpush1.bf16.msra.mxu0 0
        %2146 = vmatprep.subr.bf16.mxu0 0
        %2147 = vmatpush1.bf16.msra.mxu0 0
        %2148 = vmatprep.subr.bf16.mxu0 0
        %2149 = vmatpush1.bf16.msra.mxu0 0
        %2150 = vmatprep.subr.bf16.mxu0 0
        %2151 = vmatpush1.bf16.msra.mxu0 0
        %2152 = vmatprep.subr.bf16.mxu0 0
        %2153 = vmatpush1.bf16.msra.mxu0 0
        %2154 = vmatprep.subr.bf16.mxu0 0
        %2155 = vmatpush1.bf16.msra.mxu0 0
        %2156 = vmatprep.subr.bf16.mxu0 0
        %2157 = vmatpush1.bf16.msra.mxu0 0
        %2158 = vmatprep.subr.bf16.mxu0 0
        %2159 = vmatpush1.bf16.msra.mxu0 0
        %2160 = vmatprep.mubr.bf16.mxu0 0
        %2161 = vmatmul.mubr.bf16.gmra.mrb[0].mxu0 %v2056
        %v2162 = vpop.f32.mrb[0].mxu0
        %v2163 = vadd.f32 %v2078, %v2162
        %v2164 = vpop.f32.mrb[0].mxu0
        %v2165 = vpop.f32.mrb[0].mxu0
        %v2166 = vadd.f32 %v2078, %v2165
        %v2167 = vpop.f32.mrb[0].mxu0
        %2168 = vdwg.mxu0
        %v2169 = vadd.f32 %v793, %v2163
        %v2170 = vadd.f32 %v794, %v2166
        %v2171 = vld [vmem:[%s655] sm:$0x1]
        %v2172 = vld [vmem:[%s663] sm:$0x1]
        %2173 = vadd.xlane.f32.xlu0 %v2169
        %v2174 = vpop.xlane.xlu0 %2173
        %2175 = vadd.xlane.f32.xlu0 %v2170
        %v2176 = vpop.xlane.xlu0 %2175
        %v2177 = vmul.f32 %v2174, %v801
        %v2178 = vmul.f32 %v2176, %v801
        %v2179 = vsub.f32 %v2169, %v2177
        %v2180 = vsub.f32 %v2170, %v2178
        %v2181 = vmul.f32 %v2179, %v2179
        %v2182 = vmul.f32 %v2180, %v2180
        %2183 = vadd.xlane.f32.xlu0 %v2181
        %v2184 = vpop.xlane.xlu0 %2183
        %2185 = vadd.xlane.f32.xlu0 %v2182
        %v2186 = vpop.xlane.xlu0 %2185
        %v2187 = vmul.f32 %v2184, %v801
        %v2188 = vmul.f32 %v2186, %v801
        %v2189 = vadd.f32 %v2187, 1e-06
        %v2190 = vadd.f32 %v2188, 1e-06
        %v2191 = vrsqrt.pop %v2189
        %v2192 = vrsqrt.pop %v2190
        %v2193 = vmul.f32 %v2179, %v2191
        %v2194 = vmul.f32 %v2180, %v2192
        %v2196 = vlaneseq
        %v2197 = vshrl.u32 %v2196, 7
        %v2198 = vsub.s32 0, %v2197
        %v2199 = vrot.slane %v2171, %v2198
        %v2201 = vmul.f32 %v2193, %v2199
        %v2202 = vmul.f32 %v2194, %v2199
        %v2204 = vlaneseq
        %v2205 = vshrl.u32 %v2204, 7
        %v2206 = vsub.s32 0, %v2205
        %v2207 = vrot.slane %v2172, %v2206
        %v2209 = vadd.f32 %v2201, %v2207
        %v2210 = vadd.f32 %v2202, %v2207
        %v2211 = vpack.c.bf16 %v2210, %v2209
        %v2212 = vld [vmem:[%s779] sm:$0xff]
        %v2213 = vld [vmem:[%s779 + $0x8] sm:$0xff]
        %v2214 = vld [vmem:[%s779 + $0x10] sm:$0xff]
        %v2215 = vld [vmem:[%s779 + $0x18] sm:$0xff]
        %v2216 = vld [vmem:[%s779 + $0x20] sm:$0xff]
        %v2217 = vld [vmem:[%s779 + $0x28] sm:$0xff]
        %v2218 = vld [vmem:[%s779 + $0x30] sm:$0xff]
        %v2219 = vld [vmem:[%s779 + $0x38] sm:$0xff]
        %v2220 = vld [vmem:[%s779 + $0x40] sm:$0xff]
        %v2221 = vld [vmem:[%s779 + $0x48] sm:$0xff]
        %v2222 = vld [vmem:[%s779 + $0x50] sm:$0xff]
        %v2223 = vld [vmem:[%s779 + $0x58] sm:$0xff]
        %v2224 = vld [vmem:[%s779 + $0x60] sm:$0xff]
        %v2225 = vld [vmem:[%s779 + $0x68] sm:$0xff]
        %v2226 = vld [vmem:[%s779 + $0x70] sm:$0xff]
        %v2227 = vld [vmem:[%s779 + $0x78] sm:$0xff]
        %v2228 = vld [vmem:[%s779 + $0x80] sm:$0xff]
        %v2229 = vld [vmem:[%s779 + $0x88] sm:$0xff]
        %v2230 = vld [vmem:[%s779 + $0x90] sm:$0xff]
        %v2231 = vld [vmem:[%s779 + $0x98] sm:$0xff]
        %v2232 = vld [vmem:[%s779 + $0xa0] sm:$0xff]
        %v2233 = vld [vmem:[%s779 + $0xa8] sm:$0xff]
        %v2234 = vld [vmem:[%s779 + $0xb0] sm:$0xff]
        %v2235 = vld [vmem:[%s779 + $0xb8] sm:$0xff]
        %v2236 = vld [vmem:[%s779 + $0xc0] sm:$0xff]
        %v2237 = vld [vmem:[%s779 + $0xc8] sm:$0xff]
        %v2238 = vld [vmem:[%s779 + $0xd0] sm:$0xff]
        %v2239 = vld [vmem:[%s779 + $0xd8] sm:$0xff]
        %v2240 = vld [vmem:[%s779 + $0xe0] sm:$0xff]
        %v2241 = vld [vmem:[%s779 + $0xe8] sm:$0xff]
        %v2242 = vld [vmem:[%s779 + $0xf0] sm:$0xff]
        %v2243 = vld [vmem:[%s779 + $0xf8] sm:$0xff]
        %v2244 = vld [vmem:[%s783] sm:$0xf]
        %v2246 = vlaneseq
        %v2247 = vshrl.u32 %v2246, 7
        %v2248 = vsub.s32 0, %v2247
        %v2249 = vrot.slane %v2244, %v2248
        %v2250 = vlaneseq
        %v2251 = vshrl.u32 %v2250, 7
        %v2252 = vsub.s32 1, %v2251
        %v2253 = vrot.slane %v2244, %v2252
        %v2254 = vlaneseq
        %v2255 = vshrl.u32 %v2254, 7
        %v2256 = vsub.s32 2, %v2255
        %v2257 = vrot.slane %v2244, %v2256
        %v2258 = vlaneseq
        %v2259 = vshrl.u32 %v2258, 7
        %v2260 = vsub.s32 3, %v2259
        %v2261 = vrot.slane %v2244, %v2260
        %v2298 = vunpack.c.l.b16 %v2212
        %v2299 = vunpack.c.h.b16 %v2212
        %v2300 = vunpack.c.l.b16 %v2213
        %v2301 = vunpack.c.h.b16 %v2213
        %v2302 = vunpack.c.l.b16 %v2214
        %v2303 = vunpack.c.h.b16 %v2214
        %v2304 = vunpack.c.l.b16 %v2215
        %v2305 = vunpack.c.h.b16 %v2215
        %v2306 = vunpack.c.l.b16 %v2216
        %v2307 = vunpack.c.h.b16 %v2216
        %v2308 = vunpack.c.l.b16 %v2217
        %v2309 = vunpack.c.h.b16 %v2217
        %v2310 = vunpack.c.l.b16 %v2218
        %v2311 = vunpack.c.h.b16 %v2218
        %v2312 = vunpack.c.l.b16 %v2219
        %v2313 = vunpack.c.h.b16 %v2219
        %v2314 = vunpack.c.l.b16 %v2220
        %v2315 = vunpack.c.h.b16 %v2220
        %v2316 = vunpack.c.l.b16 %v2221
        %v2317 = vunpack.c.h.b16 %v2221
        %v2318 = vunpack.c.l.b16 %v2222
        %v2319 = vunpack.c.h.b16 %v2222
        %v2320 = vunpack.c.l.b16 %v2223
        %v2321 = vunpack.c.h.b16 %v2223
        %v2322 = vunpack.c.l.b16 %v2224
        %v2323 = vunpack.c.h.b16 %v2224
        %v2324 = vunpack.c.l.b16 %v2225
        %v2325 = vunpack.c.h.b16 %v2225
        %v2326 = vunpack.c.l.b16 %v2226
        %v2327 = vunpack.c.h.b16 %v2226
        %v2328 = vunpack.c.l.b16 %v2227
        %v2329 = vunpack.c.h.b16 %v2227
        %v2330 = vunpack.c.l.b16 %v2228
        %v2331 = vunpack.c.h.b16 %v2228
        %v2332 = vunpack.c.l.b16 %v2229
        %v2333 = vunpack.c.h.b16 %v2229
        %v2334 = vunpack.c.l.b16 %v2230
        %v2335 = vunpack.c.h.b16 %v2230
        %v2336 = vunpack.c.l.b16 %v2231
        %v2337 = vunpack.c.h.b16 %v2231
        %v2338 = vunpack.c.l.b16 %v2232
        %v2339 = vunpack.c.h.b16 %v2232
        %v2340 = vunpack.c.l.b16 %v2233
        %v2341 = vunpack.c.h.b16 %v2233
        %v2342 = vunpack.c.l.b16 %v2234
        %v2343 = vunpack.c.h.b16 %v2234
        %v2344 = vunpack.c.l.b16 %v2235
        %v2345 = vunpack.c.h.b16 %v2235
        %v2346 = vunpack.c.l.b16 %v2236
        %v2347 = vunpack.c.h.b16 %v2236
        %v2348 = vunpack.c.l.b16 %v2237
        %v2349 = vunpack.c.h.b16 %v2237
        %v2350 = vunpack.c.l.b16 %v2238
        %v2351 = vunpack.c.h.b16 %v2238
        %v2352 = vunpack.c.l.b16 %v2239
        %v2353 = vunpack.c.h.b16 %v2239
        %v2354 = vunpack.c.l.b16 %v2240
        %v2355 = vunpack.c.h.b16 %v2240
        %v2356 = vunpack.c.l.b16 %v2241
        %v2357 = vunpack.c.h.b16 %v2241
        %v2358 = vunpack.c.l.b16 %v2242
        %v2359 = vunpack.c.h.b16 %v2242
        %v2360 = vunpack.c.l.b16 %v2243
        %v2361 = vunpack.c.h.b16 %v2243
        %v2362 = vpack.c.b16 %v2302, %v2298
        %v2363 = vpack.c.b16 %v2303, %v2299
        %v2364 = vpack.c.b16 %v2304, %v2300
        %v2365 = vpack.c.b16 %v2305, %v2301
        %v2366 = vpack.c.b16 %v2310, %v2306
        %v2367 = vpack.c.b16 %v2311, %v2307
        %v2368 = vpack.c.b16 %v2312, %v2308
        %v2369 = vpack.c.b16 %v2313, %v2309
        %v2370 = vpack.c.b16 %v2318, %v2314
        %v2371 = vpack.c.b16 %v2319, %v2315
        %v2372 = vpack.c.b16 %v2320, %v2316
        %v2373 = vpack.c.b16 %v2321, %v2317
        %v2374 = vpack.c.b16 %v2326, %v2322
        %v2375 = vpack.c.b16 %v2327, %v2323
        %v2376 = vpack.c.b16 %v2328, %v2324
        %v2377 = vpack.c.b16 %v2329, %v2325
        %v2378 = vpack.c.b16 %v2334, %v2330
        %v2379 = vpack.c.b16 %v2335, %v2331
        %v2380 = vpack.c.b16 %v2336, %v2332
        %v2381 = vpack.c.b16 %v2337, %v2333
        %v2382 = vpack.c.b16 %v2342, %v2338
        %v2383 = vpack.c.b16 %v2343, %v2339
        %v2384 = vpack.c.b16 %v2344, %v2340
        %v2385 = vpack.c.b16 %v2345, %v2341
        %v2386 = vpack.c.b16 %v2350, %v2346
        %v2387 = vpack.c.b16 %v2351, %v2347
        %v2388 = vpack.c.b16 %v2352, %v2348
        %v2389 = vpack.c.b16 %v2353, %v2349
        %v2390 = vpack.c.b16 %v2358, %v2354
        %v2391 = vpack.c.b16 %v2359, %v2355
        %v2392 = vpack.c.b16 %v2360, %v2356
        %v2393 = vpack.c.b16 %v2361, %v2357
        %2426 = vmatprep.subr.bf16.mxu0 %v2363
        %2427 = vmatpush1.bf16.msra.mxu0 %v2362
        %2428 = vmatprep.subr.bf16.mxu0 %v2367
        %2429 = vmatpush1.bf16.msra.mxu0 %v2366
        %2430 = vmatprep.subr.bf16.mxu0 %v2371
        %2431 = vmatpush1.bf16.msra.mxu0 %v2370
        %2432 = vmatprep.subr.bf16.mxu0 %v2375
        %2433 = vmatpush1.bf16.msra.mxu0 %v2374
        %2434 = vmatprep.subr.bf16.mxu0 %v2379
        %2435 = vmatpush1.bf16.msra.mxu0 %v2378
        %2436 = vmatprep.subr.bf16.mxu0 %v2383
        %2437 = vmatpush1.bf16.msra.mxu0 %v2382
        %2438 = vmatprep.subr.bf16.mxu0 %v2387
        %2439 = vmatpush1.bf16.msra.mxu0 %v2386
        %2440 = vmatprep.subr.bf16.mxu0 %v2391
        %2441 = vmatpush1.bf16.msra.mxu0 %v2390
        %2442 = vmatprep.subr.bf16.mxu0 0
        %2443 = vmatpush1.bf16.msra.mxu0 0
        %2444 = vmatprep.subr.bf16.mxu0 0
        %2445 = vmatpush1.bf16.msra.mxu0 0
        %2446 = vmatprep.subr.bf16.mxu0 0
        %2447 = vmatpush1.bf16.msra.mxu0 0
        %2448 = vmatprep.subr.bf16.mxu0 0
        %2449 = vmatpush1.bf16.msra.mxu0 0
        %2450 = vmatprep.subr.bf16.mxu0 0
        %2451 = vmatpush1.bf16.msra.mxu0 0
        %2452 = vmatprep.subr.bf16.mxu0 0
        %2453 = vmatpush1.bf16.msra.mxu0 0
        %2454 = vmatprep.subr.bf16.mxu0 0
        %2455 = vmatpush1.bf16.msra.mxu0 0
        %2456 = vmatprep.subr.bf16.mxu0 0
        %2457 = vmatpush1.bf16.msra.mxu0 0
        %2458 = vmatprep.mubr.bf16.mxu0 0
        %2459 = vmatmul.mubr.bf16.gmra.mrb[0].mxu0 %v2211
        %v2460 = vpop.f32.mrb[0].mxu0
        %v2461 = vadd.f32 %v2249, %v2460
        %v2462 = vpop.f32.mrb[0].mxu0
        %v2463 = vadd.f32 %v2253, %v2462
        %v2464 = vpop.f32.mrb[0].mxu0
        %v2465 = vadd.f32 %v2249, %v2464
        %v2466 = vpop.f32.mrb[0].mxu0
        %v2467 = vadd.f32 %v2253, %v2466
        %2468 = vdwg.mxu0
        %2469 = vmatprep.subr.bf16.mxu0 %v2365
        %2470 = vmatpush1.bf16.msra.mxu0 %v2364
        %2471 = vmatprep.subr.bf16.mxu0 %v2369
        %2472 = vmatpush1.bf16.msra.mxu0 %v2368
        %2473 = vmatprep.subr.bf16.mxu0 %v2373
        %2474 = vmatpush1.bf16.msra.mxu0 %v2372
        %2475 = vmatprep.subr.bf16.mxu0 %v2377
        %2476 = vmatpush1.bf16.msra.mxu0 %v2376
        %2477 = vmatprep.subr.bf16.mxu0 %v2381
        %2478 = vmatpush1.bf16.msra.mxu0 %v2380
        %2479 = vmatprep.subr.bf16.mxu0 %v2385
        %2480 = vmatpush1.bf16.msra.mxu0 %v2384
        %2481 = vmatprep.subr.bf16.mxu0 %v2389
        %2482 = vmatpush1.bf16.msra.mxu0 %v2388
        %2483 = vmatprep.subr.bf16.mxu0 %v2393
        %2484 = vmatpush1.bf16.msra.mxu0 %v2392
        %2485 = vmatprep.subr.bf16.mxu0 0
        %2486 = vmatpush1.bf16.msra.mxu0 0
        %2487 = vmatprep.subr.bf16.mxu0 0
        %2488 = vmatpush1.bf16.msra.mxu0 0
        %2489 = vmatprep.subr.bf16.mxu0 0
        %2490 = vmatpush1.bf16.msra.mxu0 0
        %2491 = vmatprep.subr.bf16.mxu0 0
        %2492 = vmatpush1.bf16.msra.mxu0 0
        %2493 = vmatprep.subr.bf16.mxu0 0
        %2494 = vmatpush1.bf16.msra.mxu0 0
        %2495 = vmatprep.subr.bf16.mxu0 0
        %2496 = vmatpush1.bf16.msra.mxu0 0
        %2497 = vmatprep.subr.bf16.mxu0 0
        %2498 = vmatpush1.bf16.msra.mxu0 0
        %2499 = vmatprep.subr.bf16.mxu0 0
        %2500 = vmatpush1.bf16.msra.mxu0 0
        %2501 = vmatprep.mubr.bf16.mxu0 0
        %2502 = vmatmul.mubr.bf16.gmra.mrb[0].mxu0 %v2211
        %v2503 = vpop.f32.mrb[0].mxu0
        %v2504 = vadd.f32 %v2257, %v2503
        %v2505 = vpop.f32.mrb[0].mxu0
        %v2506 = vadd.f32 %v2261, %v2505
        %v2507 = vpop.f32.mrb[0].mxu0
        %v2508 = vadd.f32 %v2257, %v2507
        %v2509 = vpop.f32.mrb[0].mxu0
        %v2510 = vadd.f32 %v2261, %v2509
        %2511 = vdwg.mxu0
        %v2512 = vmul.f32 %v2461, 0.5
        %v2513 = vmul.f32 %v2463, 0.5
        %v2514 = vmul.f32 %v2504, 0.5
        %v2515 = vmul.f32 %v2506, 0.5
        %v2516 = vmul.f32 %v2465, 0.5
        %v2517 = vmul.f32 %v2467, 0.5
        %v2518 = vmul.f32 %v2508, 0.5
        %v2519 = vmul.f32 %v2510, 0.5
        %v2520 = vmul.f32 %v2461, 0.70710677
        %v2521 = vmul.f32 %v2463, 0.70710677
        %v2522 = vmul.f32 %v2504, 0.70710677
        %v2523 = vmul.f32 %v2506, 0.70710677
        %v2524 = vmul.f32 %v2465, 0.70710677
        %v2525 = vmul.f32 %v2467, 0.70710677
        %v2526 = vmul.f32 %v2508, 0.70710677
        %v2527 = vmul.f32 %v2510, 0.70710677
        %vm2528 = vcmp.ge.f32.partialorder %v2520, 0.0
        %vm2529 = vcmp.ge.f32.partialorder %v2521, 0.0
        %vm2530 = vcmp.ge.f32.partialorder %v2522, 0.0
        %vm2531 = vcmp.ge.f32.partialorder %v2523, 0.0
        %vm2532 = vcmp.ge.f32.partialorder %v2524, 0.0
        %vm2533 = vcmp.ge.f32.partialorder %v2525, 0.0
        %vm2534 = vcmp.ge.f32.partialorder %v2526, 0.0
        %vm2535 = vcmp.ge.f32.partialorder %v2527, 0.0
        %v2536 = vsel %vm2528, 1.0, -1.0
        %v2537 = vsel %vm2529, 1.0, -1.0
        %v2538 = vsel %vm2530, 1.0, -1.0
        %v2539 = vsel %vm2531, 1.0, -1.0
        %v2540 = vsel %vm2532, 1.0, -1.0
        %v2541 = vsel %vm2533, 1.0, -1.0
        %v2542 = vsel %vm2534, 1.0, -1.0
        %v2543 = vsel %vm2535, 1.0, -1.0
        %v2544 = vand.u32 2147483647, %v2520
        %v2545 = vand.u32 2147483647, %v2521
        %v2546 = vand.u32 2147483647, %v2522
        %v2547 = vand.u32 2147483647, %v2523
        %v2548 = vand.u32 2147483647, %v2524
        %v2549 = vand.u32 2147483647, %v2525
        %v2550 = vand.u32 2147483647, %v2526
        %v2551 = vand.u32 2147483647, %v2527
        %v2552 = vmul.f32 %v2544, 0.3275911
        %v2553 = vmul.f32 %v2545, 0.3275911
        %v2554 = vmul.f32 %v2546, 0.3275911
        %v2555 = vmul.f32 %v2547, 0.3275911
        %v2556 = vmul.f32 %v2548, 0.3275911
        %v2557 = vmul.f32 %v2549, 0.3275911
        %v2558 = vmul.f32 %v2550, 0.3275911
        %v2559 = vmul.f32 %v2551, 0.3275911
        %v2560 = vadd.f32 %v2552, 1.0
        %v2561 = vadd.f32 %v2553, 1.0
        %v2562 = vadd.f32 %v2554, 1.0
        %v2563 = vadd.f32 %v2555, 1.0
        %v2564 = vadd.f32 %v2556, 1.0
        %v2565 = vadd.f32 %v2557, 1.0
        %v2566 = vadd.f32 %v2558, 1.0
        %v2567 = vadd.f32 %v2559, 1.0
        %v2568 = vrcp.pop %v2560
        %v2569 = vrcp.pop %v2561
        %v2570 = vrcp.pop %v2562
        %v2571 = vrcp.pop %v2563
        %v2572 = vrcp.pop %v2564
        %v2573 = vrcp.pop %v2565
        %v2574 = vrcp.pop %v2566
        %v2575 = vrcp.pop %v2567
        %v2576 = vmul.f32 %v2568, 1.0614054
        %v2577 = vmul.f32 %v2569, 1.0614054
        %v2578 = vmul.f32 %v2570, 1.0614054
        %v2579 = vmul.f32 %v2571, 1.0614054
        %v2580 = vmul.f32 %v2572, 1.0614054
        %v2581 = vmul.f32 %v2573, 1.0614054
        %v2582 = vmul.f32 %v2574, 1.0614054
        %v2583 = vmul.f32 %v2575, 1.0614054
        %v2584 = vadd.f32 %v2576, -1.4531521
        %v2585 = vadd.f32 %v2577, -1.4531521
        %v2586 = vadd.f32 %v2578, -1.4531521
        %v2587 = vadd.f32 %v2579, -1.4531521
        %v2588 = vadd.f32 %v2580, -1.4531521
        %v2589 = vadd.f32 %v2581, -1.4531521
        %v2590 = vadd.f32 %v2582, -1.4531521
        %v2591 = vadd.f32 %v2583, -1.4531521
        %v2592 = vmul.f32 %v2584, %v2568
        %v2593 = vmul.f32 %v2585, %v2569
        %v2594 = vmul.f32 %v2586, %v2570
        %v2595 = vmul.f32 %v2587, %v2571
        %v2596 = vmul.f32 %v2588, %v2572
        %v2597 = vmul.f32 %v2589, %v2573
        %v2598 = vmul.f32 %v2590, %v2574
        %v2599 = vmul.f32 %v2591, %v2575
        %v2600 = vadd.f32 %v2592, 1.4214138
        %v2601 = vadd.f32 %v2593, 1.4214138
        %v2602 = vadd.f32 %v2594, 1.4214138
        %v2603 = vadd.f32 %v2595, 1.4214138
        %v2604 = vadd.f32 %v2596, 1.4214138
        %v2605 = vadd.f32 %v2597, 1.4214138
        %v2606 = vadd.f32 %v2598, 1.4214138
        %v2607 = vadd.f32 %v2599, 1.4214138
        %v2608 = vmul.f32 %v2600, %v2568
        %v2609 = vmul.f32 %v2601, %v2569
        %v2610 = vmul.f32 %v2602, %v2570
        %v2611 = vmul.f32 %v2603, %v2571
        %v2612 = vmul.f32 %v2604, %v2572
        %v2613 = vmul.f32 %v2605, %v2573
        %v2614 = vmul.f32 %v2606, %v2574
        %v2615 = vmul.f32 %v2607, %v2575
        %v2616 = vadd.f32 %v2608, -0.28449672
        %v2617 = vadd.f32 %v2609, -0.28449672
        %v2618 = vadd.f32 %v2610, -0.28449672
        %v2619 = vadd.f32 %v2611, -0.28449672
        %v2620 = vadd.f32 %v2612, -0.28449672
        %v2621 = vadd.f32 %v2613, -0.28449672
        %v2622 = vadd.f32 %v2614, -0.28449672
        %v2623 = vadd.f32 %v2615, -0.28449672
        %v2624 = vmul.f32 %v2616, %v2568
        %v2625 = vmul.f32 %v2617, %v2569
        %v2626 = vmul.f32 %v2618, %v2570
        %v2627 = vmul.f32 %v2619, %v2571
        %v2628 = vmul.f32 %v2620, %v2572
        %v2629 = vmul.f32 %v2621, %v2573
        %v2630 = vmul.f32 %v2622, %v2574
        %v2631 = vmul.f32 %v2623, %v2575
        %v2632 = vadd.f32 %v2624, 0.2548296
        %v2633 = vadd.f32 %v2625, 0.2548296
        %v2634 = vadd.f32 %v2626, 0.2548296
        %v2635 = vadd.f32 %v2627, 0.2548296
        %v2636 = vadd.f32 %v2628, 0.2548296
        %v2637 = vadd.f32 %v2629, 0.2548296
        %v2638 = vadd.f32 %v2630, 0.2548296
        %v2639 = vadd.f32 %v2631, 0.2548296
        %v2640 = vmul.f32 %v2632, %v2568
        %v2641 = vmul.f32 %v2633, %v2569
        %v2642 = vmul.f32 %v2634, %v2570
        %v2643 = vmul.f32 %v2635, %v2571
        %v2644 = vmul.f32 %v2636, %v2572
        %v2645 = vmul.f32 %v2637, %v2573
        %v2646 = vmul.f32 %v2638, %v2574
        %v2647 = vmul.f32 %v2639, %v2575
        %v2648 = vsub.f32 0.0, %v2544
        %v2649 = vsub.f32 0.0, %v2545
        %v2650 = vsub.f32 0.0, %v2546
        %v2651 = vsub.f32 0.0, %v2547
        %v2652 = vsub.f32 0.0, %v2548
        %v2653 = vsub.f32 0.0, %v2549
        %v2654 = vsub.f32 0.0, %v2550
        %v2655 = vsub.f32 0.0, %v2551
        %v2656 = vmul.f32 %v2648, %v2544
        %v2657 = vmul.f32 %v2649, %v2545
        %v2658 = vmul.f32 %v2650, %v2546
        %v2659 = vmul.f32 %v2651, %v2547
        %v2660 = vmul.f32 %v2652, %v2548
        %v2661 = vmul.f32 %v2653, %v2549
        %v2662 = vmul.f32 %v2654, %v2550
        %v2663 = vmul.f32 %v2655, %v2551
        %v2664 = vmul.f32 %v2656, 1.442695
        %v2665 = vpow.pop %v2664
        %v2666 = vmul.f32 %v2657, 1.442695
        %v2667 = vpow.pop %v2666
        %v2668 = vmul.f32 %v2658, 1.442695
        %v2669 = vpow.pop %v2668
        %v2670 = vmul.f32 %v2659, 1.442695
        %v2671 = vpow.pop %v2670
        %v2672 = vmul.f32 %v2660, 1.442695
        %v2673 = vpow.pop %v2672
        %v2674 = vmul.f32 %v2661, 1.442695
        %v2675 = vpow.pop %v2674
        %v2676 = vmul.f32 %v2662, 1.442695
        %v2677 = vpow.pop %v2676
        %v2678 = vmul.f32 %v2663, 1.442695
        %v2679 = vpow.pop %v2678
        %v2680 = vmul.f32 %v2640, %v2665
        %v2681 = vmul.f32 %v2641, %v2667
        %v2682 = vmul.f32 %v2642, %v2669
        %v2683 = vmul.f32 %v2643, %v2671
        %v2684 = vmul.f32 %v2644, %v2673
        %v2685 = vmul.f32 %v2645, %v2675
        %v2686 = vmul.f32 %v2646, %v2677
        %v2687 = vmul.f32 %v2647, %v2679
        %v2688 = vsub.f32 1.0, %v2680
        %v2689 = vsub.f32 1.0, %v2681
        %v2690 = vsub.f32 1.0, %v2682
        %v2691 = vsub.f32 1.0, %v2683
        %v2692 = vsub.f32 1.0, %v2684
        %v2693 = vsub.f32 1.0, %v2685
        %v2694 = vsub.f32 1.0, %v2686
        %v2695 = vsub.f32 1.0, %v2687
        %v2696 = vmul.f32 %v2536, %v2688
        %v2697 = vmul.f32 %v2537, %v2689
        %v2698 = vmul.f32 %v2538, %v2690
        %v2699 = vmul.f32 %v2539, %v2691
        %v2700 = vmul.f32 %v2540, %v2692
        %v2701 = vmul.f32 %v2541, %v2693
        %v2702 = vmul.f32 %v2542, %v2694
        %v2703 = vmul.f32 %v2543, %v2695
        %v2704 = vadd.f32 %v2696, 1.0
        %v2705 = vadd.f32 %v2697, 1.0
        %v2706 = vadd.f32 %v2698, 1.0
        %v2707 = vadd.f32 %v2699, 1.0
        %v2708 = vadd.f32 %v2700, 1.0
        %v2709 = vadd.f32 %v2701, 1.0
        %v2710 = vadd.f32 %v2702, 1.0
        %v2711 = vadd.f32 %v2703, 1.0
        %v2712 = vmul.f32 %v2512, %v2704
        %v2713 = vmul.f32 %v2513, %v2705
        %v2714 = vmul.f32 %v2514, %v2706
        %v2715 = vmul.f32 %v2515, %v2707
        %v2716 = vmul.f32 %v2516, %v2708
        %v2717 = vmul.f32 %v2517, %v2709
        %v2718 = vmul.f32 %v2518, %v2710
        %v2719 = vmul.f32 %v2519, %v2711
        %v2720 = vpack.c.bf16 %v2716, %v2712
        %v2721 = vpack.c.bf16 %v2717, %v2713
        %v2722 = vpack.c.bf16 %v2718, %v2714
        %v2723 = vpack.c.bf16 %v2719, %v2715
        %v2724 = vld [vmem:[%s672] sm:$0xf]
        %v2725 = vld [vmem:[%s672 + $0x4] sm:$0xf]
        %v2726 = vld [vmem:[%s672 + $0x8] sm:$0xf]
        %v2727 = vld [vmem:[%s672 + $0xc] sm:$0xf]
        %v2728 = vld [vmem:[%s672 + $0x10] sm:$0xf]
        %v2729 = vld [vmem:[%s672 + $0x14] sm:$0xf]
        %v2730 = vld [vmem:[%s672 + $0x18] sm:$0xf]
        %v2731 = vld [vmem:[%s672 + $0x1c] sm:$0xf]
        %v2732 = vld [vmem:[%s672 + $0x20] sm:$0xf]
        %v2733 = vld [vmem:[%s672 + $0x24] sm:$0xf]
        %v2734 = vld [vmem:[%s672 + $0x28] sm:$0xf]
        %v2735 = vld [vmem:[%s672 + $0x2c] sm:$0xf]
        %v2736 = vld [vmem:[%s672 + $0x30] sm:$0xf]
        %v2737 = vld [vmem:[%s672 + $0x34] sm:$0xf]
        %v2738 = vld [vmem:[%s672 + $0x38] sm:$0xf]
        %v2739 = vld [vmem:[%s672 + $0x3c] sm:$0xf]
        %v2740 = vld [vmem:[%s672 + $0x40] sm:$0xf]
        %v2741 = vld [vmem:[%s672 + $0x44] sm:$0xf]
        %v2742 = vld [vmem:[%s672 + $0x48] sm:$0xf]
        %v2743 = vld [vmem:[%s672 + $0x4c] sm:$0xf]
        %v2744 = vld [vmem:[%s672 + $0x50] sm:$0xf]
        %v2745 = vld [vmem:[%s672 + $0x54] sm:$0xf]
        %v2746 = vld [vmem:[%s672 + $0x58] sm:$0xf]
        %v2747 = vld [vmem:[%s672 + $0x5c] sm:$0xf]
        %v2748 = vld [vmem:[%s672 + $0x60] sm:$0xf]
        %v2749 = vld [vmem:[%s672 + $0x64] sm:$0xf]
        %v2750 = vld [vmem:[%s672 + $0x68] sm:$0xf]
        %v2751 = vld [vmem:[%s672 + $0x6c] sm:$0xf]
        %v2752 = vld [vmem:[%s672 + $0x70] sm:$0xf]
        %v2753 = vld [vmem:[%s672 + $0x74] sm:$0xf]
        %v2754 = vld [vmem:[%s672 + $0x78] sm:$0xf]
        %v2755 = vld [vmem:[%s672 + $0x7c] sm:$0xf]
        %v2756 = vld [vmem:[%s672 + $0x80] sm:$0xf]
        %v2757 = vld [vmem:[%s672 + $0x84] sm:$0xf]
        %v2758 = vld [vmem:[%s672 + $0x88] sm:$0xf]
        %v2759 = vld [vmem:[%s672 + $0x8c] sm:$0xf]
        %v2760 = vld [vmem:[%s672 + $0x90] sm:$0xf]
        %v2761 = vld [vmem:[%s672 + $0x94] sm:$0xf]
        %v2762 = vld [vmem:[%s672 + $0x98] sm:$0xf]
        %v2763 = vld [vmem:[%s672 + $0x9c] sm:$0xf]
        %v2764 = vld [vmem:[%s672 + $0xa0] sm:$0xf]
        %v2765 = vld [vmem:[%s672 + $0xa4] sm:$0xf]
        %v2766 = vld [vmem:[%s672 + $0xa8] sm:$0xf]
        %v2767 = vld [vmem:[%s672 + $0xac] sm:$0xf]
        %v2768 = vld [vmem:[%s672 + $0xb0] sm:$0xf]
        %v2769 = vld [vmem:[%s672 + $0xb4] sm:$0xf]
        %v2770 = vld [vmem:[%s672 + $0xb8] sm:$0xf]
        %v2771 = vld [vmem:[%s672 + $0xbc] sm:$0xf]
        %v2772 = vld [vmem:[%s672 + $0xc0] sm:$0xf]
        %v2773 = vld [vmem:[%s672 + $0xc4] sm:$0xf]
        %v2774 = vld [vmem:[%s672 + $0xc8] sm:$0xf]
        %v2775 = vld [vmem:[%s672 + $0xcc] sm:$0xf]
        %v2776 = vld [vmem:[%s672 + $0xd0] sm:$0xf]
        %v2777 = vld [vmem:[%s672 + $0xd4] sm:$0xf]
        %v2778 = vld [vmem:[%s672 + $0xd8] sm:$0xf]
        %v2779 = vld [vmem:[%s672 + $0xdc] sm:$0xf]
        %v2780 = vld [vmem:[%s672 + $0xe0] sm:$0xf]
        %v2781 = vld [vmem:[%s672 + $0xe4] sm:$0xf]
        %v2782 = vld [vmem:[%s672 + $0xe8] sm:$0xf]
        %v2783 = vld [vmem:[%s672 + $0xec] sm:$0xf]
        %v2784 = vld [vmem:[%s672 + $0xf0] sm:$0xf]
        %v2785 = vld [vmem:[%s672 + $0xf4] sm:$0xf]
        %v2786 = vld [vmem:[%s672 + $0xf8] sm:$0xf]
        %v2787 = vld [vmem:[%s672 + $0xfc] sm:$0xf]
        %v2788 = vld [vmem:[%s680] sm:$0x1]
        %v2790 = vlaneseq
        %v2791 = vshrl.u32 %v2790, 7
        %v2792 = vsub.s32 0, %v2791
        %v2793 = vrot.slane %v2788, %v2792
        %v2859 = vunpack.c.l.b16 %v2724
        %v2860 = vunpack.c.l.b16 %v2725
        %v2861 = vunpack.c.l.b16 %v2726
        %v2862 = vunpack.c.l.b16 %v2727
        %v2863 = vunpack.c.l.b16 %v2728
        %v2864 = vunpack.c.l.b16 %v2729
        %v2865 = vunpack.c.l.b16 %v2730
        %v2866 = vunpack.c.l.b16 %v2731
        %v2867 = vunpack.c.l.b16 %v2732
        %v2868 = vunpack.c.l.b16 %v2733
        %v2869 = vunpack.c.l.b16 %v2734
        %v2870 = vunpack.c.l.b16 %v2735
        %v2871 = vunpack.c.l.b16 %v2736
        %v2872 = vunpack.c.l.b16 %v2737
        %v2873 = vunpack.c.l.b16 %v2738
        %v2874 = vunpack.c.l.b16 %v2739
        %v2875 = vunpack.c.l.b16 %v2740
        %v2876 = vunpack.c.l.b16 %v2741
        %v2877 = vunpack.c.l.b16 %v2742
        %v2878 = vunpack.c.l.b16 %v2743
        %v2879 = vunpack.c.l.b16 %v2744
        %v2880 = vunpack.c.l.b16 %v2745
        %v2881 = vunpack.c.l.b16 %v2746
        %v2882 = vunpack.c.l.b16 %v2747
        %v2883 = vunpack.c.l.b16 %v2748
        %v2884 = vunpack.c.l.b16 %v2749
        %v2885 = vunpack.c.l.b16 %v2750
        %v2886 = vunpack.c.l.b16 %v2751
        %v2887 = vunpack.c.l.b16 %v2752
        %v2888 = vunpack.c.l.b16 %v2753
        %v2889 = vunpack.c.l.b16 %v2754
        %v2890 = vunpack.c.l.b16 %v2755
        %v2891 = vunpack.c.l.b16 %v2756
        %v2892 = vunpack.c.l.b16 %v2757
        %v2893 = vunpack.c.l.b16 %v2758
        %v2894 = vunpack.c.l.b16 %v2759
        %v2895 = vunpack.c.l.b16 %v2760
        %v2896 = vunpack.c.l.b16 %v2761
        %v2897 = vunpack.c.l.b16 %v2762
        %v2898 = vunpack.c.l.b16 %v2763
        %v2899 = vunpack.c.l.b16 %v2764
        %v2900 = vunpack.c.l.b16 %v2765
        %v2901 = vunpack.c.l.b16 %v2766
        %v2902 = vunpack.c.l.b16 %v2767
        %v2903 = vunpack.c.l.b16 %v2768
        %v2904 = vunpack.c.l.b16 %v2769
        %v2905 = vunpack.c.l.b16 %v2770
        %v2906 = vunpack.c.l.b16 %v2771
        %v2907 = vunpack.c.l.b16 %v2772
        %v2908 = vunpack.c.l.b16 %v2773
        %v2909 = vunpack.c.l.b16 %v2774
        %v2910 = vunpack.c.l.b16 %v2775
        %v2911 = vunpack.c.l.b16 %v2776
        %v2912 = vunpack.c.l.b16 %v2777
        %v2913 = vunpack.c.l.b16 %v2778
        %v2914 = vunpack.c.l.b16 %v2779
        %v2915 = vunpack.c.l.b16 %v2780
        %v2916 = vunpack.c.l.b16 %v2781
        %v2917 = vunpack.c.l.b16 %v2782
        %v2918 = vunpack.c.l.b16 %v2783
        %v2919 = vunpack.c.l.b16 %v2784
        %v2920 = vunpack.c.l.b16 %v2785
        %v2921 = vunpack.c.l.b16 %v2786
        %v2922 = vunpack.c.l.b16 %v2787
        %v2923 = vpack.c.b16 %v2860, %v2859
        %v2924 = vpack.c.b16 %v2862, %v2861
        %v2925 = vpack.c.b16 %v2864, %v2863
        %v2926 = vpack.c.b16 %v2866, %v2865
        %v2927 = vpack.c.b16 %v2868, %v2867
        %v2928 = vpack.c.b16 %v2870, %v2869
        %v2929 = vpack.c.b16 %v2872, %v2871
        %v2930 = vpack.c.b16 %v2874, %v2873
        %v2931 = vpack.c.b16 %v2876, %v2875
        %v2932 = vpack.c.b16 %v2878, %v2877
        %v2933 = vpack.c.b16 %v2880, %v2879
        %v2934 = vpack.c.b16 %v2882, %v2881
        %v2935 = vpack.c.b16 %v2884, %v2883
        %v2936 = vpack.c.b16 %v2886, %v2885
        %v2937 = vpack.c.b16 %v2888, %v2887
        %v2938 = vpack.c.b16 %v2890, %v2889
        %v2939 = vpack.c.b16 %v2892, %v2891
        %v2940 = vpack.c.b16 %v2894, %v2893
        %v2941 = vpack.c.b16 %v2896, %v2895
        %v2942 = vpack.c.b16 %v2898, %v2897
        %v2943 = vpack.c.b16 %v2900, %v2899
        %v2944 = vpack.c.b16 %v2902, %v2901
        %v2945 = vpack.c.b16 %v2904, %v2903
        %v2946 = vpack.c.b16 %v2906, %v2905
        %v2947 = vpack.c.b16 %v2908, %v2907
        %v2948 = vpack.c.b16 %v2910, %v2909
        %v2949 = vpack.c.b16 %v2912, %v2911
        %v2950 = vpack.c.b16 %v2914, %v2913
        %v2951 = vpack.c.b16 %v2916, %v2915
        %v2952 = vpack.c.b16 %v2918, %v2917
        %v2953 = vpack.c.b16 %v2920, %v2919
        %v2954 = vpack.c.b16 %v2922, %v2921
        %2987 = vmatprep.subr.bf16.mxu0 0
        %2988 = vmatpush1.bf16.msra.mxu0 %v2923
        %2989 = vmatprep.subr.bf16.mxu0 0
        %2990 = vmatpush1.bf16.msra.mxu0 %v2924
        %2991 = vmatprep.subr.bf16.mxu0 0
        %2992 = vmatpush1.bf16.msra.mxu0 %v2925
        %2993 = vmatprep.subr.bf16.mxu0 0
        %2994 = vmatpush1.bf16.msra.mxu0 %v2926
        %2995 = vmatprep.subr.bf16.mxu0 0
        %2996 = vmatpush1.bf16.msra.mxu0 %v2927
        %2997 = vmatprep.subr.bf16.mxu0 0
        %2998 = vmatpush1.bf16.msra.mxu0 %v2928
        %2999 = vmatprep.subr.bf16.mxu0 0
        %3000 = vmatpush1.bf16.msra.mxu0 %v2929
        %3001 = vmatprep.subr.bf16.mxu0 0
        %3002 = vmatpush1.bf16.msra.mxu0 %v2930
        %3003 = vmatprep.subr.bf16.mxu0 0
        %3004 = vmatpush1.bf16.msra.mxu0 %v2931
        %3005 = vmatprep.subr.bf16.mxu0 0
        %3006 = vmatpush1.bf16.msra.mxu0 %v2932
        %3007 = vmatprep.subr.bf16.mxu0 0
        %3008 = vmatpush1.bf16.msra.mxu0 %v2933
        %3009 = vmatprep.subr.bf16.mxu0 0
        %3010 = vmatpush1.bf16.msra.mxu0 %v2934
        %3011 = vmatprep.subr.bf16.mxu0 0
        %3012 = vmatpush1.bf16.msra.mxu0 %v2935
        %3013 = vmatprep.subr.bf16.mxu0 0
        %3014 = vmatpush1.bf16.msra.mxu0 %v2936
        %3015 = vmatprep.subr.bf16.mxu0 0
        %3016 = vmatpush1.bf16.msra.mxu0 %v2937
        %3017 = vmatprep.subr.bf16.mxu0 0
        %3018 = vmatpush1.bf16.msra.mxu0 %v2938
        %3019 = vmatprep.mubr.bf16.mxu0 %v2721
        %3020 = vmatmul.mubr.bf16.gmra.mrb[0].mxu0 %v2720
        %v3021 = vpop.f32.mrb[0].mxu0
        %v3022 = vadd.f32 %v2793, %v3021
        %v3023 = vpop.f32.mrb[0].mxu0
        %v3024 = vpop.f32.mrb[0].mxu0
        %v3025 = vadd.f32 %v2793, %v3024
        %v3026 = vpop.f32.mrb[0].mxu0
        %3027 = vdwg.mxu0
        %3028 = vmatprep.subr.bf16.mxu0 0
        %3029 = vmatpush1.bf16.msra.mxu0 %v2939
        %3030 = vmatprep.subr.bf16.mxu0 0
        %3031 = vmatpush1.bf16.msra.mxu0 %v2940
        %3032 = vmatprep.subr.bf16.mxu0 0
        %3033 = vmatpush1.bf16.msra.mxu0 %v2941
        %3034 = vmatprep.subr.bf16.mxu0 0
        %3035 = vmatpush1.bf16.msra.mxu0 %v2942
        %3036 = vmatprep.subr.bf16.mxu0 0
        %3037 = vmatpush1.bf16.msra.mxu0 %v2943
        %3038 = vmatprep.subr.bf16.mxu0 0
        %3039 = vmatpush1.bf16.msra.mxu0 %v2944
        %3040 = vmatprep.subr.bf16.mxu0 0
        %3041 = vmatpush1.bf16.msra.mxu0 %v2945
        %3042 = vmatprep.subr.bf16.mxu0 0
        %3043 = vmatpush1.bf16.msra.mxu0 %v2946
        %3044 = vmatprep.subr.bf16.mxu0 0
        %3045 = vmatpush1.bf16.msra.mxu0 %v2947
        %3046 = vmatprep.subr.bf16.mxu0 0
        %3047 = vmatpush1.bf16.msra.mxu0 %v2948
        %3048 = vmatprep.subr.bf16.mxu0 0
        %3049 = vmatpush1.bf16.msra.mxu0 %v2949
        %3050 = vmatprep.subr.bf16.mxu0 0
        %3051 = vmatpush1.bf16.msra.mxu0 %v2950
        %3052 = vmatprep.subr.bf16.mxu0 0
        %3053 = vmatpush1.bf16.msra.mxu0 %v2951
        %3054 = vmatprep.subr.bf16.mxu0 0
        %3055 = vmatpush1.bf16.msra.mxu0 %v2952
        %3056 = vmatprep.subr.bf16.mxu0 0
        %3057 = vmatpush1.bf16.msra.mxu0 %v2953
        %3058 = vmatprep.subr.bf16.mxu0 0
        %3059 = vmatpush1.bf16.msra.mxu0 %v2954
        %3060 = vmatprep.mubr.bf16.mxu0 %v2723
        %3061 = vmatmul.mubr.bf16.gmra.mrb[0].mxu0 %v2722
        %v3062 = vpop.f32.mrb[0].mxu0
        %v3063 = vadd.f32 %v3022, %v3062
        %v3064 = vpop.f32.mrb[0].mxu0
        %v3065 = vpop.f32.mrb[0].mxu0
        %v3066 = vadd.f32 %v3025, %v3065
        %v3067 = vpop.f32.mrb[0].mxu0
        %3068 = vdwg.mxu0
        %v3069 = vadd.f32 %v2169, %v3063
        %v3070 = vadd.f32 %v2170, %v3066
        %3071 = vst [vmem:[#allocation2] sm:$0xff] %v3069
        %3072 = vst [vmem:[#allocation2 + $0x8] sm:$0xff] %v3070
        %p3073 = scmp.eq.s32.totalorder %s41, 1
        // Predicated region
        $region113: #{advxl_vision_tower_forward.3} parent=75 // pred_check
          %p3074 = pneg %p3073
        $region114: #{advxl_vision_tower_forward.3} parent=75 // pred_check_branch
          %3076 = sbr.rel (%p3074) target = $region116
        $region115: #{advxl_vision_tower_forward.3} parent=75 // pred_region
          %3077 = vst [vmem:[#allocation17 - $0x1] sm:$0x1e] %v3069
          %s3078 = scalar_lea.vmem [#allocation17], 4
          %3079 = vst [vmem:[%s3078 - $0x1] sm:$0x1e] %v3070
        $region116: #{advxl_vision_tower_forward.3} parent=75 // pred_fallthru
          _
        // Predicated region
        $region117: #{advxl_vision_tower_forward.3} parent=75 // pred_check
          %p3080 = pneg %p408
        $region118: #{advxl_vision_tower_forward.3} parent=75 // pred_check_branch
          %3082 = sbr.rel (%p3080) target = $region120
        $region119: #{advxl_vision_tower_forward.3} parent=75 // pred_region
          %s3084 = ssub.s32 128, 128
          %3085 = vsyncadd [#allocation5], %s3084
          %s3086 = sshll.u32 [#allocation17], 4
          %s3087 = int_to_ptr.vmem [resolvable:$true] %s3086
          %3092 = dma.vmem_to_hbm [thread:$0]  %s3087, 128, %s14, [#allocation5], 64, 64, 4
        $region120: #{advxl_vision_tower_forward.3} parent=75 // pred_fallthru
          _
        // Predicated region
        $region121: #{advxl_vision_tower_forward.3} parent=75 // pred_check
          %p3093 = pneg %p408
        $region122: #{advxl_vision_tower_forward.3} parent=75 // pred_check_branch
          %3095 = sbr.rel (%p3093) target = $region124
        $region123: #{advxl_vision_tower_forward.3} parent=75 // pred_region
          %3096 = dma.done [#allocation5], 128
        $region124: #{advxl_vision_tower_forward.3} parent=75 // pred_fallthru
          _
      $region76: #{advxl_vision_tower_forward.3} parent=5 // pred_fallthru
        _
      %p3097 = scmp.le.s32.totalorder 2, %s36
      // Predicated region
      $region125: #{advxl_vision_tower_forward.3} parent=5 // pred_check
        %p3098 = pneg %p3097
      $region126: #{advxl_vision_tower_forward.3} parent=5 // pred_check_branch
        %3100 = sbr.rel (%p3098) target = $region128
      $region127: #{advxl_vision_tower_forward.3} parent=5 // pred_region
        %s3101 = ssub.s32 %s36, 2
      $region128: #{advxl_vision_tower_forward.3} parent=5 // pred_fallthru
        _
    $region6: #{advxl_vision_tower_forward.3} parent=1 // loop_footer
      %s40 = sadd.s32 1, %s36
    $region7: #{advxl_vision_tower_forward.3} parent=1 // loop_footer_branch
      %35 = sbr.rel target = $region3
    $region8: #{advxl_vision_tower_forward.3} parent=1 // loop_exit
      _
    %3102 = vsyncpa [#allocation4], 1
    %s3103 = scalar_lea.sflag [#allocation4], 1
    %3104 = vsyncpa %s3103, 1
    %3105 = vsyncpa [#allocation7], 1
    %s3106 = scalar_lea.sflag [#allocation7], 1
    %3107 = vsyncpa %s3106, 1
    %3108 = vsyncpa [#allocation10], 1
    %s3109 = scalar_lea.sflag [#allocation10], 1
    %3110 = vsyncpa %s3109, 1
    %3111 = vsyncpa [#allocation13], 1
    %s3112 = scalar_lea.sflag [#allocation13], 1
    %3113 = vsyncpa %s3112, 1
    %3114 = vsyncpa [#allocation16], 1
    %s3115 = scalar_lea.sflag [#allocation16], 1
    %3116 = vsyncpa %s3115, 1
    %3117 = vsyncpa [#allocation5], 1
    %s3118 = scalar_lea.sflag [#allocation5], 1
    %3119 = vsyncpa %s3118, 1

</llo_original>
